<compile_context>
chip_gen: v5e
topology: v5e:2x2
jax: 0.10.0
libtpu: 0.0.40
codegen_flags: <defaults>
</compile_context>

<pallas_src>
import jax
import jax.numpy as jnp
from jax import lax
from jax.experimental import pallas as pl
from jax.experimental.pallas import tpu as pltpu


_VMEM_LIMIT_BYTES = 32 * 1024 * 1024   # explicit scoped-VMEM limit (safe on v5e/v6e/v7x)
_VMEM_BUDGET = 16 * 1024 * 1024        # target working-set for tile selection


def _pick_tm(m, k, n, in_bytes=2, out_bytes=4):
    """Largest M tile that divides M, fits a double-buffered VMEM budget, and
    (when M >= 16) leaves >= 2 grid blocks so both v7x TensorCores do work."""
    def vmem_bytes(tm):
        # double-buffered A tile + out tile + (resident) weight + bias row
        return 2 * (tm * k * in_bytes + k * n * in_bytes + tm * n * out_bytes + n * 4)

    if m >= 16:
        for tm in (1024, 512, 256, 128, 64, 32, 16, 8):
            if m % tm == 0 and 2 * tm <= m and vmem_bytes(tm) <= _VMEM_BUDGET:
                return tm
    return m  # small / odd M -> single full block


# ---------------------------------------------------------------------------
# Pallas kernels
# ---------------------------------------------------------------------------
def _head_kernel(z_ref, w1_ref, b1_ref, w2_ref, b2_ref, o_ref):
    """relu(relu(z @ w1 + b1) @ w2 + b2) — Linear + ReLU + ConvT1(1x1) + ReLU."""
    h = jnp.dot(z_ref[...], w1_ref[...], preferred_element_type=jnp.float32)
    h = jnp.maximum(h + b1_ref[...], 0.0)
    o = jnp.dot(h.astype(jnp.bfloat16), w2_ref[...],
                preferred_element_type=jnp.float32)
    o = jnp.maximum(o + b2_ref[...], 0.0)
    o_ref[...] = o.astype(o_ref.dtype)


def _matmul_kernel(x_ref, w_ref, o_ref):
    o_ref[...] = jnp.dot(x_ref[...], w_ref[...],
                         preferred_element_type=jnp.float32).astype(o_ref.dtype)


def pallas_head(z, w1, b1, w2, b2):
    m, zd = z.shape
    hid = w1.shape[1]
    n = w2.shape[1]
    tm = _pick_tm(m, hid, n)
    return pl.pallas_call(
        _head_kernel,
        out_shape=jax.ShapeDtypeStruct((m, n), jnp.float32),
        grid_spec=pltpu.PrefetchScalarGridSpec(
            num_scalar_prefetch=0,
            grid=(m // tm,),
            in_specs=[
                pl.BlockSpec((tm, zd), lambda i: (i, 0)),
                pl.BlockSpec((zd, hid), lambda i: (0, 0)),
                pl.BlockSpec((1, hid), lambda i: (0, 0)),
                pl.BlockSpec((hid, n), lambda i: (0, 0)),
                pl.BlockSpec((1, n), lambda i: (0, 0)),
            ],
            out_specs=pl.BlockSpec((tm, n), lambda i: (i, 0)),
        ),
        compiler_params=pltpu.CompilerParams(
            dimension_semantics=("parallel",),
            vmem_limit_bytes=_VMEM_LIMIT_BYTES,
        ),
    )(z.astype(jnp.bfloat16), w1.astype(jnp.bfloat16), b1.astype(jnp.float32),
      w2.astype(jnp.bfloat16), b2.astype(jnp.float32))


def pallas_matmul(x, w):
    m, k = x.shape
    k2, n = w.shape
    assert k == k2, (x.shape, w.shape)
    tm = _pick_tm(m, k, n)
    return pl.pallas_call(
        _matmul_kernel,
        out_shape=jax.ShapeDtypeStruct((m, n), jnp.float32),
        grid_spec=pltpu.PrefetchScalarGridSpec(
            num_scalar_prefetch=0,
            grid=(m // tm,),
            in_specs=[
                pl.BlockSpec((tm, k), lambda i: (i, 0)),   # A tile (full K)
                pl.BlockSpec((k, n), lambda i: (0, 0)),    # full weight, resident
            ],
            out_specs=pl.BlockSpec((tm, n), lambda i: (i, 0)),
        ),
        compiler_params=pltpu.CompilerParams(
            dimension_semantics=("parallel",),
            vmem_limit_bytes=_VMEM_LIMIT_BYTES,
        ),
    )(x.astype(jnp.bfloat16), w.astype(jnp.bfloat16))


# Pure-jnp twins of the two kernels (same decomposition / same bf16 casts) for
# validating the Pallas kernels in isolation.
def jnp_head(z, w1, b1, w2, b2):
    h = jnp.dot(z.astype(jnp.bfloat16), w1.astype(jnp.bfloat16),
                preferred_element_type=jnp.float32)
    h = jnp.maximum(h + b1, 0.0)
    o = jnp.dot(h.astype(jnp.bfloat16), w2.astype(jnp.bfloat16),
                preferred_element_type=jnp.float32)
    return jnp.maximum(o + b2, 0.0)


def jnp_matmul(x, w):
    return jnp.dot(x.astype(jnp.bfloat16), w.astype(jnp.bfloat16),
                   preferred_element_type=jnp.float32)


# ---------------------------------------------------------------------------
# col2im overlap-add for ConvTranspose2d(k=4, stride=2, padding=1), NHWC.
# ---------------------------------------------------------------------------
def overlap_add_s2k4p1(y):
    """y: (B, H, W, 4, 4, C) -> (B, 2H, 2W, C).

    out_full[b, 2*iy+ky, 2*ix+kx, c] += y[b, iy, ix, ky, kx, c], then crop 1
    from every edge.  Implemented as a 2x2 phase decomposition (ky = 2*qy+ry):
    each output parity plane is the sum of 4 shifted slices — no dilation
    zeros, traffic ~ 2x the size of y.
    """
    bsz, h, w, k, _, c = y.shape
    planes = []
    for ry in range(2):
        row = []
        for rx in range(2):
            acc = None
            for qy in range(2):
                for qx in range(2):
                    sl = y[:, :, :, 2 * qy + ry, 2 * qx + rx, :]      # (B,H,W,C)
                    sl = jnp.pad(sl, ((0, 0), (qy, 1 - qy), (qx, 1 - qx), (0, 0)))
                    acc = sl if acc is None else acc + sl
            row.append(acc)                                           # (B,H+1,W+1,C)
        planes.append(row)
    full = jnp.stack([jnp.stack(r, axis=0) for r in planes], axis=0)  # (ry,rx,B,H+1,W+1,C)
    full = full.transpose(2, 3, 0, 4, 1, 5).reshape(bsz, 2 * h + 2, 2 * w + 2, c)
    return full[:, 1:2 * h + 1, 1:2 * w + 1, :]


# ---------------------------------------------------------------------------
# Decoder
# ---------------------------------------------------------------------------
_CONV_ACT = ["relu", "relu", "relu", "sigmoid"]   # activations of the 4 stride-2 layers


def init_decoder_params(key, z_dim, hidden_dim=256):
    specs = [
        ("linear", (hidden_dim, z_dim)),        # torch Linear weight (out, in)
        ("convt", (hidden_dim, 128, 4, 4)),     # ConvTranspose2d weight (Cin, Cout, k, k)
        ("convt", (128, 64, 4, 4)),
        ("convt", (64, 32, 4, 4)),
        ("convt", (32, 32, 4, 4)),
        ("convt", (32, 3, 4, 4)),
    ]
    params = []
    for kind, shape in specs:
        key, kw, kb = jax.random.split(key, 3)
        weight = 0.1 * jax.random.normal(kw, shape, jnp.float32)
        n_out = shape[0] if kind == "linear" else shape[1]
        b = 0.1 * jax.random.normal(kb, (n_out,), jnp.float32)
        params.append((weight, b))
    return params


class Decoder:
    def __init__(self, z_dim, key, hidden_dim=256):
        self.z_dim = z_dim
        self.hidden_dim = hidden_dim
        self.params = init_decoder_params(key, z_dim, hidden_dim)

        (w_lin, b_lin), (w_c1, b_c1), *rest = self.params
        k = w_c1.shape[-1]
        cout1 = w_c1.shape[1]

        # Fused head: Linear weight as (z_dim, hidden); first ConvT (1x1 input,
        # s=1, p=0) as a plain matmul with columns ordered (oy, ox, cout) so the
        # output reshapes straight to NHWC.
        self.w1 = jnp.transpose(w_lin).astype(jnp.bfloat16)                       # (z_dim, hid)
        self.b1 = b_lin.reshape(1, -1)
        self.w2 = jnp.transpose(w_c1, (0, 2, 3, 1)).reshape(
            hidden_dim, k * k * cout1).astype(jnp.bfloat16)                       # (hid, k*k*Cout)
        self.b2 = jnp.tile(b_c1, k * k).reshape(1, -1)
        self.head_k = k
        self.head_c = cout1

        # Stride-2 layers: col2im weight matrices, columns ordered (ky, kx, cout).
        self.conv_layers = []
        for (w_t, b) in rest:
            cin, cout, kk, _ = w_t.shape
            w_mat = jnp.transpose(w_t, (0, 2, 3, 1)).reshape(
                cin, kk * kk * cout).astype(jnp.bfloat16)
            self.conv_layers.append((w_mat, b, cout))

    def __call__(self, z, use_pallas=True):
        head = pallas_head if use_pallas else jnp_head
        mm = pallas_matmul if use_pallas else jnp_matmul
        bsz = z.shape[0]

        # Linear + ReLU + ConvT1 + ReLU in ONE kernel; .view is metadata-only.
        x = head(z, self.w1, self.b1, self.w2, self.b2)                  # (B, k*k*128)
        x = x.reshape(bsz, self.head_k, self.head_k, self.head_c)       # NHWC (B,4,4,128)

        for (w_mat, bias, cout), act in zip(self.conv_layers, _CONV_ACT):
            b_, h, w, cin = x.shape
            y = mm(x.reshape(b_ * h * w, cin), w_mat)                    # (B*H*W, 16*Cout) f32
            x = overlap_add_s2k4p1(y.reshape(b_, h, w, 4, 4, cout))      # (B, 2H, 2W, Cout)
            x = x + bias                                                 # broadcast over C
            x = jnp.maximum(x, 0.0) if act == "relu" else jax.nn.sigmoid(x)

        return jnp.transpose(x, (0, 3, 1, 2))                            # NCHW once, at the end


# ---------------------------------------------------------------------------
# Independent f32 reference (validates the ConvTranspose2d rewrite itself).
# ---------------------------------------------------------------------------
def decoder_reference_f32(params, z, hidden_dim=256):
    (w_lin, b_lin), *conv = params
    h = jnp.maximum(z @ w_lin.T + b_lin, 0.0).reshape(-1, hidden_dim, 1, 1)
    cfg = [(1, 0), (2, 1), (2, 1), (2, 1), (2, 1)]
    acts = ["relu", "relu", "relu", "relu", "sigmoid"]
    for (w_t, b), (s, p), act in zip(conv, cfg, acts):
        k = w_t.shape[-1]
        w_conv = jnp.transpose(jnp.flip(w_t, (2, 3)), (1, 0, 2, 3))      # (Cout,Cin,k,k)
        h = lax.conv_general_dilated(
            h, w_conv, window_strides=(1, 1),
            padding=[(k - 1 - p, k - 1 - p)] * 2,
            lhs_dilation=(s, s),
            dimension_numbers=("NCHW", "OIHW", "NCHW"),
        ) + b.reshape(1, -1, 1, 1)
        h = jnp.maximum(h, 0.0) if act == "relu" else jax.nn.sigmoid(h)
    return h


# ---------------------------------------------------------------------------
if __name__ == "__main__":
    key = jax.random.PRNGKey(0)
    k_params, k_z = jax.random.split(key)

    z_dim, batch = 32, 2
    decoder = Decoder(z_dim, k_params)
    z = jax.random.normal(k_z, (batch, z_dim), dtype=jnp.float32)

    out = jax.jit(lambda v: decoder(v, use_pallas=True))(z)
    out = jax.block_until_ready(out)

    assert out.shape == (batch, 3, 64, 64), out.shape
    assert out.dtype == jnp.float32
    assert bool(jnp.all(jnp.isfinite(out)))
    assert bool(jnp.all((out >= 0.0) & (out <= 1.0)))       # sigmoid range

    # 1) Same decomposition, XLA matmuls -> isolates the Pallas kernels.
    ref_same = jax.block_until_ready(jax.jit(lambda v: decoder(v, use_pallas=False))(z))
    err_kernel = float(jnp.max(jnp.abs(out - ref_same)))
    assert err_kernel < 5e-3, err_kernel

    # 2) Independent f32 ConvTranspose2d reference -> validates the col2im /
    #    overlap-add rewrite and the bf16 drift end-to-end.
    ref_f32 = jax.block_until_ready(decoder_reference_f32(decoder.params, z))
    err_full = float(jnp.max(jnp.abs(out - ref_f32)))
    assert err_full < 3e-2, err_full

    print("KERNEL_OK")
</pallas_src>

<mosaic_0001>
module attributes {stable_mosaic.version = 11 : i64} {
  func.func @_head_kernel(%arg0: i32, %arg1: memref<2x32xbf16, #tpu.memory_space<vmem>>, %arg2: memref<32x256xbf16, #tpu.memory_space<vmem>>, %arg3: memref<1x256xf32, #tpu.memory_space<vmem>>, %arg4: memref<256x2048xbf16, #tpu.memory_space<vmem>>, %arg5: memref<1x2048xf32, #tpu.memory_space<vmem>>, %arg6: memref<2x2048xf32, #tpu.memory_space<vmem>>) attributes {dimension_semantics = [#tpu.dimension_semantics<parallel>], iteration_bounds = array<i64: 1>, scalar_prefetch = 0 : i64, scratch_operands = 0 : i64, tpu.core_type = #tpu.core_type<tc>, window_params = [{transform_indices = @transform_0, window_bounds = array<i64: 2, 32>}, {pipeline_mode = #tpu.pipeline_mode<synchronous>, transform_indices = @transform_1, window_bounds = array<i64: 32, 256>}, {pipeline_mode = #tpu.pipeline_mode<synchronous>, transform_indices = @transform_2, window_bounds = array<i64: 1, 256>}, {pipeline_mode = #tpu.pipeline_mode<synchronous>, transform_indices = @transform_3, window_bounds = array<i64: 256, 2048>}, {pipeline_mode = #tpu.pipeline_mode<synchronous>, transform_indices = @transform_4, window_bounds = array<i64: 1, 2048>}, {transform_indices = @transform_5, window_bounds = array<i64: 2, 2048>}]} {
    %c0 = arith.constant 0 : index
    %c0_0 = arith.constant 0 : index
    %0 = vector.load %arg1[%c0, %c0_0] : memref<2x32xbf16, #tpu.memory_space<vmem>>, vector<2x32xbf16>
    %c0_1 = arith.constant 0 : index
    %c0_2 = arith.constant 0 : index
    %1 = vector.load %arg2[%c0_1, %c0_2] : memref<32x256xbf16, #tpu.memory_space<vmem>>, vector<32x256xbf16>
    %cst = arith.constant dense<0.000000e+00> : vector<2x256xf32>
    %2 = tpu.matmul %0, %1, %cst {dimension_numbers = #tpu.dot_dimension_numbers<[1], [0], [0], [1], [0, 0, 1, 1], [], []>} : vector<2x32xbf16>, vector<32x256xbf16>, vector<2x256xf32> -> vector<2x256xf32>
    %c0_3 = arith.constant 0 : index
    %c0_4 = arith.constant 0 : index
    %3 = vector.load %arg3[%c0_3, %c0_4] : memref<1x256xf32, #tpu.memory_space<vmem>>, vector<1x256xf32>
    %4 = vector.broadcast %3 : vector<1x256xf32> to vector<2x256xf32>
    %5 = arith.addf %2, %4 : vector<2x256xf32>
    %cst_5 = arith.constant 0.000000e+00 : f32
    %6 = vector.broadcast %cst_5 : f32 to vector<2x256xf32>
    %7 = arith.maximumf %5, %6 : vector<2x256xf32>
    %8 = arith.truncf %7 : vector<2x256xf32> to vector<2x256xbf16>
    %c0_6 = arith.constant 0 : index
    %c0_7 = arith.constant 0 : index
    %9 = vector.load %arg4[%c0_6, %c0_7] : memref<256x2048xbf16, #tpu.memory_space<vmem>>, vector<256x2048xbf16>
    %cst_8 = arith.constant dense<0.000000e+00> : vector<2x2048xf32>
    %10 = tpu.matmul %8, %9, %cst_8 {dimension_numbers = #tpu.dot_dimension_numbers<[1], [0], [0], [1], [0, 0, 1, 1], [], []>} : vector<2x256xbf16>, vector<256x2048xbf16>, vector<2x2048xf32> -> vector<2x2048xf32>
    %c0_9 = arith.constant 0 : index
    %c0_10 = arith.constant 0 : index
    %11 = vector.load %arg5[%c0_9, %c0_10] : memref<1x2048xf32, #tpu.memory_space<vmem>>, vector<1x2048xf32>
    %12 = vector.broadcast %11 : vector<1x2048xf32> to vector<2x2048xf32>
    %13 = arith.addf %10, %12 : vector<2x2048xf32>
    %cst_11 = arith.constant 0.000000e+00 : f32
    %14 = vector.broadcast %cst_11 : f32 to vector<2x2048xf32>
    %15 = arith.maximumf %13, %14 : vector<2x2048xf32>
    %c0_12 = arith.constant 0 : index
    %c0_13 = arith.constant 0 : index
    %16 = vector.load %arg6[%c0_12, %c0_13] : memref<2x2048xf32, #tpu.memory_space<vmem>>, vector<2x2048xf32>
    tpu.vector_store %arg6[%c0_12, %c0_13], %15 {strides = array<i32>} : memref<2x2048xf32, #tpu.memory_space<vmem>>, vector<2x2048xf32>,
    return
  }
  func.func @transform_0(%arg0: i32) -> (i32, i32) {
    %c0_i32 = arith.constant 0 : i32
    %c0_i32_0 = arith.constant 0 : i32
    return %arg0, %c0_i32 : i32, i32
  }
  func.func @transform_1(%arg0: i32) -> (i32, i32) {
    %c0_i32 = arith.constant 0 : i32
    %c0_i32_0 = arith.constant 0 : i32
    %c0_i32_1 = arith.constant 0 : i32
    return %c0_i32, %c0_i32_0 : i32, i32
  }
  func.func @transform_2(%arg0: i32) -> (i32, i32) {
    %c0_i32 = arith.constant 0 : i32
    %c0_i32_0 = arith.constant 0 : i32
    %c0_i32_1 = arith.constant 0 : i32
    return %c0_i32, %c0_i32_0 : i32, i32
  }
  func.func @transform_3(%arg0: i32) -> (i32, i32) {
    %c0_i32 = arith.constant 0 : i32
    %c0_i32_0 = arith.constant 0 : i32
    %c0_i32_1 = arith.constant 0 : i32
    return %c0_i32, %c0_i32_0 : i32, i32
  }
  func.func @transform_4(%arg0: i32) -> (i32, i32) {
    %c0_i32 = arith.constant 0 : i32
    %c0_i32_0 = arith.constant 0 : i32
    %c0_i32_1 = arith.constant 0 : i32
    return %c0_i32, %c0_i32_0 : i32, i32
  }
  func.func @transform_5(%arg0: i32) -> (i32, i32) {
    %c0_i32 = arith.constant 0 : i32
    %c0_i32_0 = arith.constant 0 : i32
    return %arg0, %c0_i32 : i32, i32
  }
}

module attributes {stable_mosaic.version = 11 : i64} {
  func.func @_matmul_kernel(%arg0: i32, %arg1: memref<16x128xbf16, #tpu.memory_space<vmem>>, %arg2: memref<128x1024xbf16, #tpu.memory_space<vmem>>, %arg3: memref<16x1024xf32, #tpu.memory_space<vmem>>) attributes {dimension_semantics = [#tpu.dimension_semantics<parallel>], iteration_bounds = array<i64: 2>, scalar_prefetch = 0 : i64, scratch_operands = 0 : i64, tpu.core_type = #tpu.core_type<tc>, window_params = [{transform_indices = @transform_0, window_bounds = array<i64: 16, 128>}, {pipeline_mode = #tpu.pipeline_mode<synchronous>, transform_indices = @transform_1, window_bounds = array<i64: 128, 1024>}, {transform_indices = @transform_2, window_bounds = array<i64: 16, 1024>}]} {
    %c0 = arith.constant 0 : index
    %c0_0 = arith.constant 0 : index
    %0 = vector.load %arg1[%c0, %c0_0] : memref<16x128xbf16, #tpu.memory_space<vmem>>, vector<16x128xbf16>
    %c0_1 = arith.constant 0 : index
    %c0_2 = arith.constant 0 : index
    %1 = vector.load %arg2[%c0_1, %c0_2] : memref<128x1024xbf16, #tpu.memory_space<vmem>>, vector<128x1024xbf16>
    %cst = arith.constant dense<0.000000e+00> : vector<16x1024xf32>
    %2 = tpu.matmul %0, %1, %cst {dimension_numbers = #tpu.dot_dimension_numbers<[1], [0], [0], [1], [0, 0, 1, 1], [], []>} : vector<16x128xbf16>, vector<128x1024xbf16>, vector<16x1024xf32> -> vector<16x1024xf32>
    %c0_3 = arith.constant 0 : index
    %c0_4 = arith.constant 0 : index
    %3 = vector.load %arg3[%c0_3, %c0_4] : memref<16x1024xf32, #tpu.memory_space<vmem>>, vector<16x1024xf32>
    tpu.vector_store %arg3[%c0_3, %c0_4], %2 {strides = array<i32>} : memref<16x1024xf32, #tpu.memory_space<vmem>>, vector<16x1024xf32>,
    return
  }
  func.func @transform_0(%arg0: i32) -> (i32, i32) {
    %c0_i32 = arith.constant 0 : i32
    %c0_i32_0 = arith.constant 0 : i32
    return %arg0, %c0_i32 : i32, i32
  }
  func.func @transform_1(%arg0: i32) -> (i32, i32) {
    %c0_i32 = arith.constant 0 : i32
    %c0_i32_0 = arith.constant 0 : i32
    %c0_i32_1 = arith.constant 0 : i32
    return %c0_i32, %c0_i32_0 : i32, i32
  }
  func.func @transform_2(%arg0: i32) -> (i32, i32) {
    %c0_i32 = arith.constant 0 : i32
    %c0_i32_0 = arith.constant 0 : i32
    return %arg0, %c0_i32 : i32, i32
  }
}

module attributes {stable_mosaic.version = 11 : i64} {
  func.func @_matmul_kernel(%arg0: i32, %arg1: memref<64x64xbf16, #tpu.memory_space<vmem>>, %arg2: memref<64x512xbf16, #tpu.memory_space<vmem>>, %arg3: memref<64x512xf32, #tpu.memory_space<vmem>>) attributes {dimension_semantics = [#tpu.dimension_semantics<parallel>], iteration_bounds = array<i64: 2>, scalar_prefetch = 0 : i64, scratch_operands = 0 : i64, tpu.core_type = #tpu.core_type<tc>, window_params = [{transform_indices = @transform_0, window_bounds = array<i64: 64, 64>}, {pipeline_mode = #tpu.pipeline_mode<synchronous>, transform_indices = @transform_1, window_bounds = array<i64: 64, 512>}, {transform_indices = @transform_2, window_bounds = array<i64: 64, 512>}]} {
    %c0 = arith.constant 0 : index
    %c0_0 = arith.constant 0 : index
    %0 = vector.load %arg1[%c0, %c0_0] : memref<64x64xbf16, #tpu.memory_space<vmem>>, vector<64x64xbf16>
    %c0_1 = arith.constant 0 : index
    %c0_2 = arith.constant 0 : index
    %1 = vector.load %arg2[%c0_1, %c0_2] : memref<64x512xbf16, #tpu.memory_space<vmem>>, vector<64x512xbf16>
    %cst = arith.constant dense<0.000000e+00> : vector<64x512xf32>
    %2 = tpu.matmul %0, %1, %cst {dimension_numbers = #tpu.dot_dimension_numbers<[1], [0], [0], [1], [0, 0, 1, 1], [], []>} : vector<64x64xbf16>, vector<64x512xbf16>, vector<64x512xf32> -> vector<64x512xf32>
    %c0_3 = arith.constant 0 : index
    %c0_4 = arith.constant 0 : index
    %3 = vector.load %arg3[%c0_3, %c0_4] : memref<64x512xf32, #tpu.memory_space<vmem>>, vector<64x512xf32>
    tpu.vector_store %arg3[%c0_3, %c0_4], %2 {strides = array<i32>} : memref<64x512xf32, #tpu.memory_space<vmem>>, vector<64x512xf32>,
    return
  }
  func.func @transform_0(%arg0: i32) -> (i32, i32) {
    %c0_i32 = arith.constant 0 : i32
    %c0_i32_0 = arith.constant 0 : i32
    return %arg0, %c0_i32 : i32, i32
  }
  func.func @transform_1(%arg0: i32) -> (i32, i32) {
    %c0_i32 = arith.constant 0 : i32
    %c0_i32_0 = arith.constant 0 : i32
    %c0_i32_1 = arith.constant 0 : i32
    return %c0_i32, %c0_i32_0 : i32, i32
  }
  func.func @transform_2(%arg0: i32) -> (i32, i32) {
    %c0_i32 = arith.constant 0 : i32
    %c0_i32_0 = arith.constant 0 : i32
    return %arg0, %c0_i32 : i32, i32
  }
}

module attributes {stable_mosaic.version = 11 : i64} {
  func.func @_matmul_kernel(%arg0: i32, %arg1: memref<256x32xbf16, #tpu.memory_space<vmem>>, %arg2: memref<32x512xbf16, #tpu.memory_space<vmem>>, %arg3: memref<256x512xf32, #tpu.memory_space<vmem>>) attributes {dimension_semantics = [#tpu.dimension_semantics<parallel>], iteration_bounds = array<i64: 2>, scalar_prefetch = 0 : i64, scratch_operands = 0 : i64, tpu.core_type = #tpu.core_type<tc>, window_params = [{transform_indices = @transform_0, window_bounds = array<i64: 256, 32>}, {pipeline_mode = #tpu.pipeline_mode<synchronous>, transform_indices = @transform_1, window_bounds = array<i64: 32, 512>}, {transform_indices = @transform_2, window_bounds = array<i64: 256, 512>}]} {
    %c0 = arith.constant 0 : index
    %c0_0 = arith.constant 0 : index
    %0 = vector.load %arg1[%c0, %c0_0] : memref<256x32xbf16, #tpu.memory_space<vmem>>, vector<256x32xbf16>
    %c0_1 = arith.constant 0 : index
    %c0_2 = arith.constant 0 : index
    %1 = vector.load %arg2[%c0_1, %c0_2] : memref<32x512xbf16, #tpu.memory_space<vmem>>, vector<32x512xbf16>
    %cst = arith.constant dense<0.000000e+00> : vector<256x512xf32>
    %2 = tpu.matmul %0, %1, %cst {dimension_numbers = #tpu.dot_dimension_numbers<[1], [0], [0], [1], [0, 0, 1, 1], [], []>} : vector<256x32xbf16>, vector<32x512xbf16>, vector<256x512xf32> -> vector<256x512xf32>
    %c0_3 = arith.constant 0 : index
    %c0_4 = arith.constant 0 : index
    %3 = vector.load %arg3[%c0_3, %c0_4] : memref<256x512xf32, #tpu.memory_space<vmem>>, vector<256x512xf32>
    tpu.vector_store %arg3[%c0_3, %c0_4], %2 {strides = array<i32>} : memref<256x512xf32, #tpu.memory_space<vmem>>, vector<256x512xf32>,
    return
  }
  func.func @transform_0(%arg0: i32) -> (i32, i32) {
    %c0_i32 = arith.constant 0 : i32
    %c0_i32_0 = arith.constant 0 : i32
    return %arg0, %c0_i32 : i32, i32
  }
  func.func @transform_1(%arg0: i32) -> (i32, i32) {
    %c0_i32 = arith.constant 0 : i32
    %c0_i32_0 = arith.constant 0 : i32
    %c0_i32_1 = arith.constant 0 : i32
    return %c0_i32, %c0_i32_0 : i32, i32
  }
  func.func @transform_2(%arg0: i32) -> (i32, i32) {
    %c0_i32 = arith.constant 0 : i32
    %c0_i32_0 = arith.constant 0 : i32
    return %arg0, %c0_i32 : i32, i32
  }
}

module attributes {stable_mosaic.version = 11 : i64} {
  func.func @_matmul_kernel(%arg0: i32, %arg1: memref<1024x32xbf16, #tpu.memory_space<vmem>>, %arg2: memref<32x48xbf16, #tpu.memory_space<vmem>>, %arg3: memref<1024x48xf32, #tpu.memory_space<vmem>>) attributes {dimension_semantics = [#tpu.dimension_semantics<parallel>], iteration_bounds = array<i64: 2>, scalar_prefetch = 0 : i64, scratch_operands = 0 : i64, tpu.core_type = #tpu.core_type<tc>, window_params = [{transform_indices = @transform_0, window_bounds = array<i64: 1024, 32>}, {pipeline_mode = #tpu.pipeline_mode<synchronous>, transform_indices = @transform_1, window_bounds = array<i64: 32, 48>}, {transform_indices = @transform_2, window_bounds = array<i64: 1024, 48>}]} {
    %c0 = arith.constant 0 : index
    %c0_0 = arith.constant 0 : index
    %0 = vector.load %arg1[%c0, %c0_0] : memref<1024x32xbf16, #tpu.memory_space<vmem>>, vector<1024x32xbf16>
    %c0_1 = arith.constant 0 : index
    %c0_2 = arith.constant 0 : index
    %1 = vector.load %arg2[%c0_1, %c0_2] : memref<32x48xbf16, #tpu.memory_space<vmem>>, vector<32x48xbf16>
    %cst = arith.constant dense<0.000000e+00> : vector<1024x48xf32>
    %2 = tpu.matmul %0, %1, %cst {dimension_numbers = #tpu.dot_dimension_numbers<[1], [0], [0], [1], [0, 0, 1, 1], [], []>} : vector<1024x32xbf16>, vector<32x48xbf16>, vector<1024x48xf32> -> vector<1024x48xf32>
    %c0_3 = arith.constant 0 : index
    %c0_4 = arith.constant 0 : index
    %3 = vector.load %arg3[%c0_3, %c0_4] : memref<1024x48xf32, #tpu.memory_space<vmem>>, vector<1024x48xf32>
    tpu.vector_store %arg3[%c0_3, %c0_4], %2 {strides = array<i32>} : memref<1024x48xf32, #tpu.memory_space<vmem>>, vector<1024x48xf32>,
    return
  }
  func.func @transform_0(%arg0: i32) -> (i32, i32) {
    %c0_i32 = arith.constant 0 : i32
    %c0_i32_0 = arith.constant 0 : i32
    return %arg0, %c0_i32 : i32, i32
  }
  func.func @transform_1(%arg0: i32) -> (i32, i32) {
    %c0_i32 = arith.constant 0 : i32
    %c0_i32_0 = arith.constant 0 : i32
    %c0_i32_1 = arith.constant 0 : i32
    return %c0_i32, %c0_i32_0 : i32, i32
  }
  func.func @transform_2(%arg0: i32) -> (i32, i32) {
    %c0_i32 = arith.constant 0 : i32
    %c0_i32_0 = arith.constant 0 : i32
    return %arg0, %c0_i32 : i32, i32
  }
}

</mosaic_0001>

<llo_original>
// kernel: _lambda_.6
$region0: #{_lambda_.6}
  #allocation0 [shape = 'u32[]', space=smem, size = 0x4, offset = 0x4, fixed_abs, tag = 'smem constant byte address 0x4 - core index']
  #allocation1 [shape = 'u32[72,128]{1,0:T(1,128)}', space=vmem, size = 0x9000, scoped, tag = 'internal scratch']
  %s0 = inlined_call_operand.vmem [shape: bf16[32,128], index: 0, kind: input, shape index: {}]
  %s1 = inlined_call_operand.hbm [shape: bf16[128,1024], index: 1, kind: input, shape index: {}]
  %s2 = inlined_call_operand.vmem [shape: f32[32,1024], index: 2, kind: output, shape index: {}]
  %s3 = sld [smem:[#allocation0]]
  $region45: #{_lambda_.6} parent=0
    _
  %s5 = ssub.s32 1, %s3
  %s6 = scalar_select 0, %s5, %s3
  $region1: #{_lambda_.6} parent=0
    #allocation2 [shape = 'u8[262144]{0}', space=vmem, size = 0x40000, scoped, tag = 'input window, operand 1, single buffered']
    #allocation3 [shape = 's32[2]{0}', space=sflag, size = 0x8, scoped, tag = 'scoped memory for _lambda_.6']
    %7 = vsyncpa [#allocation3], 0
    loop: start=0, step=1, limit=4
    $region2: #{_lambda_.6} parent=1 // loop_pre_header
      _
    $region3: #{_lambda_.6} parent=1 // loop_header
      %s9 = sphi 0, %s13
      %p10 = scmp.ge.s32.totalorder %s9, 4
      %s19 = sphi 0, %s21
      %s22 = sphi 0, %s19
      %s23 = sphi 0, %s22
      %s39 = sphi 0, %s23
      %s43 = sphi 0, %s43
      %s45 = sphi 0, %s43
      %s46 = sphi 0, %s45
      %s60 = sphi 0, %s46
      %s66 = sphi 0, %s68
      %s69 = sphi 0, %s66
      %s70 = sphi 0, %s69
      %s86 = sphi 0, %s70
    $region4: #{_lambda_.6} parent=1 // loop_header_branch
      %12 = sbr.rel (%p10) target = $region8
    $region5: #{_lambda_.6} parent=1 // loop_body
      %s14 = ssub.s32 %s9, 1
      %s15 = ssub.s32 %s9, 2
      %s16 = sadd.s32 %s9, 1
      %s17 = ssub.s32 %s9, %s16
      %p18 = scmp.eq.s32.totalorder %s17, 0
      %s20 = sadd.s32 %s19, 1
      %s21 = scalar_select %p18, %s19, %s20
      %p24 = pneg %p18
      %p25 = scmp.eq.s32.totalorder %s9, 1
      %p26 = por %p24, %p25
      %p27 = scmp.ne.s32.totalorder %s19, %s22
      %p28 = scmp.eq.s32.totalorder %s9, 0
      %p29 = por %p27, %p28
      %p30 = scmp.ne.s32.totalorder %s19, %s22
      %p31 = scmp.eq.s32.totalorder %s14, 1
      %p32 = por %p30, %p31
      %p33 = scmp.ne.s32.totalorder %s22, %s23
      %p34 = scmp.eq.s32.totalorder %s14, 0
      %p35 = por %p33, %p34
      %p36 = scmp.ne.s32.totalorder %s22, %s23
      %p37 = scmp.eq.s32.totalorder %s15, 1
      %p38 = por %p36, %p37
      %p40 = scmp.ne.s32.totalorder %s23, %s39
      %p41 = scmp.eq.s32.totalorder %s15, 0
      %p42 = por %p40, %p41
      %s44 = sadd.s32 %s43, 1
      %p47 = scmp.eq.s32.totalorder %s9, 1
      %p48 = scmp.ne.s32.totalorder %s43, %s45
      %p49 = scmp.eq.s32.totalorder %s9, 0
      %p50 = por %p48, %p49
      %p51 = scmp.ne.s32.totalorder %s43, %s45
      %p52 = scmp.eq.s32.totalorder %s14, 1
      %p53 = por %p51, %p52
      %p54 = scmp.ne.s32.totalorder %s45, %s46
      %p55 = scmp.eq.s32.totalorder %s14, 0
      %p56 = por %p54, %p55
      %p57 = scmp.ne.s32.totalorder %s45, %s46
      %p58 = scmp.eq.s32.totalorder %s15, 1
      %p59 = por %p57, %p58
      %p61 = scmp.ne.s32.totalorder %s46, %s60
      %p62 = scmp.eq.s32.totalorder %s15, 0
      %p63 = por %p61, %p62
      %s64 = ssub.s32 %s9, %s16
      %p65 = scmp.eq.s32.totalorder %s64, 0
      %s67 = sadd.s32 %s66, 1
      %s68 = scalar_select %p65, %s66, %s67
      %p71 = pneg %p65
      %p72 = scmp.eq.s32.totalorder %s9, 1
      %p73 = por %p71, %p72
      %p74 = scmp.ne.s32.totalorder %s66, %s69
      %p75 = scmp.eq.s32.totalorder %s9, 0
      %p76 = por %p74, %p75
      %p77 = scmp.ne.s32.totalorder %s66, %s69
      %p78 = scmp.eq.s32.totalorder %s14, 1
      %p79 = por %p77, %p78
      %p80 = scmp.ne.s32.totalorder %s69, %s70
      %p81 = scmp.eq.s32.totalorder %s14, 0
      %p82 = por %p80, %p81
      %p83 = scmp.ne.s32.totalorder %s69, %s70
      %p84 = scmp.eq.s32.totalorder %s15, 1
      %p85 = por %p83, %p84
      %p87 = scmp.ne.s32.totalorder %s70, %s86
      %p88 = scmp.eq.s32.totalorder %s15, 0
      %p89 = por %p87, %p88
      %p90 = scmp.le.s32.totalorder 1, %s9
      %p91 = scmp.lt.s32.totalorder %s9, 3
      %p92 = pnand %p90, %p91
      %p93 = pneg %p92
      // Predicated region
      $region9: #{_lambda_.6} parent=5 // pred_check
        _
      $region10: #{_lambda_.6} parent=5 // pred_check_branch
        %95 = sbr.rel (%p92) target = $region12
      $region11: #{_lambda_.6} parent=5 // pred_region
        %s96 = ssub.s32 %s9, 1
        // Predicated region
        $region13: #{_lambda_.6} parent=11 // pred_check
          %p97 = pneg %p56
        $region14: #{_lambda_.6} parent=11 // pred_check_branch
          %99 = sbr.rel (%p97) target = $region16
        $region15: #{_lambda_.6} parent=11 // pred_region
          %101 = vsyncadd [#allocation3], 0
          %s102 = sshll.u32 %s1, 4
          %s103 = int_to_ptr.hbm [resolvable:$true] %s102
          %s104 = sshll.u32 [#allocation2], 4
          %s105 = int_to_ptr.vmem [resolvable:$true] %s104
          %110 = dma.hbm_to_vmem [thread:$0]  %s103, 8192, %s105, [#allocation3], 512, 512, 32
        $region16: #{_lambda_.6} parent=11 // pred_fallthru
          _
      $region12: #{_lambda_.6} parent=5 // pred_fallthru
        _
      %p111 = scmp.lt.s32.totalorder %s9, 2
      // Predicated region
      $region17: #{_lambda_.6} parent=5 // pred_check
        %p112 = pneg %p111
      $region18: #{_lambda_.6} parent=5 // pred_check_branch
        %114 = sbr.rel (%p112) target = $region20
      $region19: #{_lambda_.6} parent=5 // pred_region
        // Predicated region
        $region21: #{_lambda_.6} parent=19 // pred_check
          %p115 = pneg %p29
        $region22: #{_lambda_.6} parent=19 // pred_check_branch
          %117 = sbr.rel (%p115) target = $region24
        $region23: #{_lambda_.6} parent=19 // pred_region
          %s118 = smul.u32 2, %s9
          %p119 = scmp.lt.s32.totalorder %s118, 3
          %s120 = scalar_select %p119, %s118, 3
          %s121 = smul.addr %s120, 4
          %s122 = scalar_lea.vmem %s0, %s121
          %s123 = smul.u32 2, %s9
        $region24: #{_lambda_.6} parent=19 // pred_fallthru
          _
      $region20: #{_lambda_.6} parent=5 // pred_fallthru
        _
      %p124 = scmp.le.s32.totalorder 1, %s9
      %p125 = scmp.lt.s32.totalorder %s9, 3
      %p126 = pnand %p124, %p125
      %p127 = pneg %p126
      // Predicated region
      $region25: #{_lambda_.6} parent=5 // pred_check
        _
      $region26: #{_lambda_.6} parent=5 // pred_check_branch
        %129 = sbr.rel (%p126) target = $region28
      $region27: #{_lambda_.6} parent=5 // pred_region
        %s130 = ssub.s32 %s9, 1
        // Predicated region
        $region29: #{_lambda_.6} parent=27 // pred_check
          %p131 = pneg %p56
        $region30: #{_lambda_.6} parent=27 // pred_check_branch
          %133 = sbr.rel (%p131) target = $region32
        $region31: #{_lambda_.6} parent=27 // pred_region
          %135 = dma.done [#allocation3], 8192
        $region32: #{_lambda_.6} parent=27 // pred_fallthru
          _
        %s136 = smul.u32 2, %s14
        %p137 = scmp.lt.s32.totalorder %s136, 3
        %s138 = scalar_select %p137, %s136, 3
        %s139 = smul.addr %s138, 4
        %s140 = scalar_lea.vmem %s0, %s139
        %p141 = pneg %p35
        %p142 = pneg %p32
        %p143 = pneg %p56
        %p144 = pneg %p53
        %p145 = pneg %p82
        %p146 = pneg %p79
        %s147 = smul.u32 2, %s14
        %p148 = scmp.lt.s32.totalorder %s147, 3
        %s149 = scalar_select %p148, %s147, 3
        %s150 = smul.addr %s149, 8
        %s151 = smul.addr %s150, 8
        %s152 = scalar_lea.vmem %s2, %s151
        %s153 = smul.u32 2, %s14
        %p154 = scmp.lt.s32.totalorder %s153, 3
        %s155 = scalar_select %p154, %s153, 3
        %s156 = smul.addr %s155, 4
        %s157 = scalar_lea.vmem %s0, %s156
        %s158 = smul.u32 2, %s14
        %s159 = smul.u32 2, %s14
        %p160 = scmp.lt.s32.totalorder %s159, 3
        %s161 = scalar_select %p160, %s159, 3
        %s162 = smul.addr %s161, 8
        %s163 = smul.addr %s162, 8
        %s164 = scalar_lea.vmem %s2, %s163
        %s165 = smul.u32 2, %s14
        %v166 = vld [vmem:[%s157] sm:$0xf]
        %v167 = vld [vmem:[%s157 + $0x4] sm:$0xf]
        %v168 = vld [vmem:[#allocation2] sm:$0xff]
        %v169 = vld [vmem:[#allocation2 + $0x8] sm:$0xff]
        %v170 = vld [vmem:[#allocation2 + $0x10] sm:$0xff]
        %v171 = vld [vmem:[#allocation2 + $0x18] sm:$0xff]
        %v172 = vld [vmem:[#allocation2 + $0x20] sm:$0xff]
        %v173 = vld [vmem:[#allocation2 + $0x28] sm:$0xff]
        %v174 = vld [vmem:[#allocation2 + $0x30] sm:$0xff]
        %v175 = vld [vmem:[#allocation2 + $0x38] sm:$0xff]
        %v176 = vld [vmem:[#allocation2 + $0x40] sm:$0xff]
        %v177 = vld [vmem:[#allocation2 + $0x48] sm:$0xff]
        %v178 = vld [vmem:[#allocation2 + $0x50] sm:$0xff]
        %v179 = vld [vmem:[#allocation2 + $0x58] sm:$0xff]
        %v180 = vld [vmem:[#allocation2 + $0x60] sm:$0xff]
        %v181 = vld [vmem:[#allocation2 + $0x68] sm:$0xff]
        %v182 = vld [vmem:[#allocation2 + $0x70] sm:$0xff]
        %v183 = vld [vmem:[#allocation2 + $0x78] sm:$0xff]
        %v184 = vld [vmem:[#allocation2 + $0x80] sm:$0xff]
        %v185 = vld [vmem:[#allocation2 + $0x88] sm:$0xff]
        %v186 = vld [vmem:[#allocation2 + $0x90] sm:$0xff]
        %v187 = vld [vmem:[#allocation2 + $0x98] sm:$0xff]
        %v188 = vld [vmem:[#allocation2 + $0xa0] sm:$0xff]
        %v189 = vld [vmem:[#allocation2 + $0xa8] sm:$0xff]
        %v190 = vld [vmem:[#allocation2 + $0xb0] sm:$0xff]
        %v191 = vld [vmem:[#allocation2 + $0xb8] sm:$0xff]
        %v192 = vld [vmem:[#allocation2 + $0xc0] sm:$0xff]
        %v193 = vld [vmem:[#allocation2 + $0xc8] sm:$0xff]
        %v194 = vld [vmem:[#allocation2 + $0xd0] sm:$0xff]
        %v195 = vld [vmem:[#allocation2 + $0xd8] sm:$0xff]
        %v196 = vld [vmem:[#allocation2 + $0xe0] sm:$0xff]
        %v197 = vld [vmem:[#allocation2 + $0xe8] sm:$0xff]
        %v198 = vld [vmem:[#allocation2 + $0xf0] sm:$0xff]
        %v199 = vld [vmem:[#allocation2 + $0xf8] sm:$0xff]
        %v200 = vld [vmem:[#allocation2 + $0x100] sm:$0xff]
        %v201 = vld [vmem:[#allocation2 + $0x108] sm:$0xff]
        %v202 = vld [vmem:[#allocation2 + $0x110] sm:$0xff]
        %v203 = vld [vmem:[#allocation2 + $0x118] sm:$0xff]
        %v204 = vld [vmem:[#allocation2 + $0x120] sm:$0xff]
        %v205 = vld [vmem:[#allocation2 + $0x128] sm:$0xff]
        %v206 = vld [vmem:[#allocation2 + $0x130] sm:$0xff]
        %v207 = vld [vmem:[#allocation2 + $0x138] sm:$0xff]
        %v208 = vld [vmem:[#allocation2 + $0x140] sm:$0xff]
        %v209 = vld [vmem:[#allocation2 + $0x148] sm:$0xff]
        %v210 = vld [vmem:[#allocation2 + $0x150] sm:$0xff]
        %v211 = vld [vmem:[#allocation2 + $0x158] sm:$0xff]
        %v212 = vld [vmem:[#allocation2 + $0x160] sm:$0xff]
        %v213 = vld [vmem:[#allocation2 + $0x168] sm:$0xff]
        %v214 = vld [vmem:[#allocation2 + $0x170] sm:$0xff]
        %v215 = vld [vmem:[#allocation2 + $0x178] sm:$0xff]
        %v216 = vld [vmem:[#allocation2 + $0x180] sm:$0xff]
        %v217 = vld [vmem:[#allocation2 + $0x188] sm:$0xff]
        %v218 = vld [vmem:[#allocation2 + $0x190] sm:$0xff]
        %v219 = vld [vmem:[#allocation2 + $0x198] sm:$0xff]
        %v220 = vld [vmem:[#allocation2 + $0x1a0] sm:$0xff]
        %v221 = vld [vmem:[#allocation2 + $0x1a8] sm:$0xff]
        %v222 = vld [vmem:[#allocation2 + $0x1b0] sm:$0xff]
        %v223 = vld [vmem:[#allocation2 + $0x1b8] sm:$0xff]
        %v224 = vld [vmem:[#allocation2 + $0x1c0] sm:$0xff]
        %v225 = vld [vmem:[#allocation2 + $0x1c8] sm:$0xff]
        %v226 = vld [vmem:[#allocation2 + $0x1d0] sm:$0xff]
        %v227 = vld [vmem:[#allocation2 + $0x1d8] sm:$0xff]
        %v228 = vld [vmem:[#allocation2 + $0x1e0] sm:$0xff]
        %v229 = vld [vmem:[#allocation2 + $0x1e8] sm:$0xff]
        %v230 = vld [vmem:[#allocation2 + $0x1f0] sm:$0xff]
        %v231 = vld [vmem:[#allocation2 + $0x1f8] sm:$0xff]
        %v234 = vunpack.c.l.b16 %v166
        %v235 = vunpack.c.l.b16 %v167
        %v236 = vpack.c.b16 %v235, %v234
        %v302 = vunpack.c.l.b16 %v168
        %v303 = vunpack.c.h.b16 %v168
        %v304 = vunpack.c.l.b16 %v169
        %v305 = vunpack.c.h.b16 %v169
        %v306 = vunpack.c.l.b16 %v170
        %v307 = vunpack.c.h.b16 %v170
        %v308 = vunpack.c.l.b16 %v171
        %v309 = vunpack.c.h.b16 %v171
        %v310 = vunpack.c.l.b16 %v172
        %v311 = vunpack.c.h.b16 %v172
        %v312 = vunpack.c.l.b16 %v173
        %v313 = vunpack.c.h.b16 %v173
        %v314 = vunpack.c.l.b16 %v174
        %v315 = vunpack.c.h.b16 %v174
        %v316 = vunpack.c.l.b16 %v175
        %v317 = vunpack.c.h.b16 %v175
        %v318 = vunpack.c.l.b16 %v176
        %v319 = vunpack.c.h.b16 %v176
        %v320 = vunpack.c.l.b16 %v177
        %v321 = vunpack.c.h.b16 %v177
        %v322 = vunpack.c.l.b16 %v178
        %v323 = vunpack.c.h.b16 %v178
        %v324 = vunpack.c.l.b16 %v179
        %v325 = vunpack.c.h.b16 %v179
        %v326 = vunpack.c.l.b16 %v180
        %v327 = vunpack.c.h.b16 %v180
        %v328 = vunpack.c.l.b16 %v181
        %v329 = vunpack.c.h.b16 %v181
        %v330 = vunpack.c.l.b16 %v182
        %v331 = vunpack.c.h.b16 %v182
        %v332 = vunpack.c.l.b16 %v183
        %v333 = vunpack.c.h.b16 %v183
        %v334 = vunpack.c.l.b16 %v184
        %v335 = vunpack.c.h.b16 %v184
        %v336 = vunpack.c.l.b16 %v185
        %v337 = vunpack.c.h.b16 %v185
        %v338 = vunpack.c.l.b16 %v186
        %v339 = vunpack.c.h.b16 %v186
        %v340 = vunpack.c.l.b16 %v187
        %v341 = vunpack.c.h.b16 %v187
        %v342 = vunpack.c.l.b16 %v188
        %v343 = vunpack.c.h.b16 %v188
        %v344 = vunpack.c.l.b16 %v189
        %v345 = vunpack.c.h.b16 %v189
        %v346 = vunpack.c.l.b16 %v190
        %v347 = vunpack.c.h.b16 %v190
        %v348 = vunpack.c.l.b16 %v191
        %v349 = vunpack.c.h.b16 %v191
        %v350 = vunpack.c.l.b16 %v192
        %v351 = vunpack.c.h.b16 %v192
        %v352 = vunpack.c.l.b16 %v193
        %v353 = vunpack.c.h.b16 %v193
        %v354 = vunpack.c.l.b16 %v194
        %v355 = vunpack.c.h.b16 %v194
        %v356 = vunpack.c.l.b16 %v195
        %v357 = vunpack.c.h.b16 %v195
        %v358 = vunpack.c.l.b16 %v196
        %v359 = vunpack.c.h.b16 %v196
        %v360 = vunpack.c.l.b16 %v197
        %v361 = vunpack.c.h.b16 %v197
        %v362 = vunpack.c.l.b16 %v198
        %v363 = vunpack.c.h.b16 %v198
        %v364 = vunpack.c.l.b16 %v199
        %v365 = vunpack.c.h.b16 %v199
        %v366 = vunpack.c.l.b16 %v200
        %v367 = vunpack.c.h.b16 %v200
        %v368 = vunpack.c.l.b16 %v201
        %v369 = vunpack.c.h.b16 %v201
        %v370 = vunpack.c.l.b16 %v202
        %v371 = vunpack.c.h.b16 %v202
        %v372 = vunpack.c.l.b16 %v203
        %v373 = vunpack.c.h.b16 %v203
        %v374 = vunpack.c.l.b16 %v204
        %v375 = vunpack.c.h.b16 %v204
        %v376 = vunpack.c.l.b16 %v205
        %v377 = vunpack.c.h.b16 %v205
        %v378 = vunpack.c.l.b16 %v206
        %v379 = vunpack.c.h.b16 %v206
        %v380 = vunpack.c.l.b16 %v207
        %v381 = vunpack.c.h.b16 %v207
        %v382 = vunpack.c.l.b16 %v208
        %v383 = vunpack.c.h.b16 %v208
        %v384 = vunpack.c.l.b16 %v209
        %v385 = vunpack.c.h.b16 %v209
        %v386 = vunpack.c.l.b16 %v210
        %v387 = vunpack.c.h.b16 %v210
        %v388 = vunpack.c.l.b16 %v211
        %v389 = vunpack.c.h.b16 %v211
        %v390 = vunpack.c.l.b16 %v212
        %v391 = vunpack.c.h.b16 %v212
        %v392 = vunpack.c.l.b16 %v213
        %v393 = vunpack.c.h.b16 %v213
        %v394 = vunpack.c.l.b16 %v214
        %v395 = vunpack.c.h.b16 %v214
        %v396 = vunpack.c.l.b16 %v215
        %v397 = vunpack.c.h.b16 %v215
        %v398 = vunpack.c.l.b16 %v216
        %v399 = vunpack.c.h.b16 %v216
        %v400 = vunpack.c.l.b16 %v217
        %v401 = vunpack.c.h.b16 %v217
        %v402 = vunpack.c.l.b16 %v218
        %v403 = vunpack.c.h.b16 %v218
        %v404 = vunpack.c.l.b16 %v219
        %v405 = vunpack.c.h.b16 %v219
        %v406 = vunpack.c.l.b16 %v220
        %v407 = vunpack.c.h.b16 %v220
        %v408 = vunpack.c.l.b16 %v221
        %v409 = vunpack.c.h.b16 %v221
        %v410 = vunpack.c.l.b16 %v222
        %v411 = vunpack.c.h.b16 %v222
        %v412 = vunpack.c.l.b16 %v223
        %v413 = vunpack.c.h.b16 %v223
        %v414 = vunpack.c.l.b16 %v224
        %v415 = vunpack.c.h.b16 %v224
        %v416 = vunpack.c.l.b16 %v225
        %v417 = vunpack.c.h.b16 %v225
        %v418 = vunpack.c.l.b16 %v226
        %v419 = vunpack.c.h.b16 %v226
        %v420 = vunpack.c.l.b16 %v227
        %v421 = vunpack.c.h.b16 %v227
        %v422 = vunpack.c.l.b16 %v228
        %v423 = vunpack.c.h.b16 %v228
        %v424 = vunpack.c.l.b16 %v229
        %v425 = vunpack.c.h.b16 %v229
        %v426 = vunpack.c.l.b16 %v230
        %v427 = vunpack.c.h.b16 %v230
        %v428 = vunpack.c.l.b16 %v231
        %v429 = vunpack.c.h.b16 %v231
        %v430 = vpack.c.b16 %v310, %v302
        %v431 = vpack.c.b16 %v311, %v303
        %v432 = vpack.c.b16 %v312, %v304
        %v433 = vpack.c.b16 %v313, %v305
        %v434 = vpack.c.b16 %v314, %v306
        %v435 = vpack.c.b16 %v315, %v307
        %v436 = vpack.c.b16 %v316, %v308
        %v437 = vpack.c.b16 %v317, %v309
        %v438 = vpack.c.b16 %v326, %v318
        %v439 = vpack.c.b16 %v327, %v319
        %v440 = vpack.c.b16 %v328, %v320
        %v441 = vpack.c.b16 %v329, %v321
        %v442 = vpack.c.b16 %v330, %v322
        %v443 = vpack.c.b16 %v331, %v323
        %v444 = vpack.c.b16 %v332, %v324
        %v445 = vpack.c.b16 %v333, %v325
        %v446 = vpack.c.b16 %v342, %v334
        %v447 = vpack.c.b16 %v343, %v335
        %v448 = vpack.c.b16 %v344, %v336
        %v449 = vpack.c.b16 %v345, %v337
        %v450 = vpack.c.b16 %v346, %v338
        %v451 = vpack.c.b16 %v347, %v339
        %v452 = vpack.c.b16 %v348, %v340
        %v453 = vpack.c.b16 %v349, %v341
        %v454 = vpack.c.b16 %v358, %v350
        %v455 = vpack.c.b16 %v359, %v351
        %v456 = vpack.c.b16 %v360, %v352
        %v457 = vpack.c.b16 %v361, %v353
        %v458 = vpack.c.b16 %v362, %v354
        %v459 = vpack.c.b16 %v363, %v355
        %v460 = vpack.c.b16 %v364, %v356
        %v461 = vpack.c.b16 %v365, %v357
        %v462 = vpack.c.b16 %v374, %v366
        %v463 = vpack.c.b16 %v375, %v367
        %v464 = vpack.c.b16 %v376, %v368
        %v465 = vpack.c.b16 %v377, %v369
        %v466 = vpack.c.b16 %v378, %v370
        %v467 = vpack.c.b16 %v379, %v371
        %v468 = vpack.c.b16 %v380, %v372
        %v469 = vpack.c.b16 %v381, %v373
        %v470 = vpack.c.b16 %v390, %v382
        %v471 = vpack.c.b16 %v391, %v383
        %v472 = vpack.c.b16 %v392, %v384
        %v473 = vpack.c.b16 %v393, %v385
        %v474 = vpack.c.b16 %v394, %v386
        %v475 = vpack.c.b16 %v395, %v387
        %v476 = vpack.c.b16 %v396, %v388
        %v477 = vpack.c.b16 %v397, %v389
        %v478 = vpack.c.b16 %v406, %v398
        %v479 = vpack.c.b16 %v407, %v399
        %v480 = vpack.c.b16 %v408, %v400
        %v481 = vpack.c.b16 %v409, %v401
        %v482 = vpack.c.b16 %v410, %v402
        %v483 = vpack.c.b16 %v411, %v403
        %v484 = vpack.c.b16 %v412, %v404
        %v485 = vpack.c.b16 %v413, %v405
        %v486 = vpack.c.b16 %v422, %v414
        %v487 = vpack.c.b16 %v423, %v415
        %v488 = vpack.c.b16 %v424, %v416
        %v489 = vpack.c.b16 %v425, %v417
        %v490 = vpack.c.b16 %v426, %v418
        %v491 = vpack.c.b16 %v427, %v419
        %v492 = vpack.c.b16 %v428, %v420
        %v493 = vpack.c.b16 %v429, %v421
        %558 = vmatpush.bf16.msra.mxu0 %v486
        %559 = vmatpush.bf16.msra.mxu0 %v478
        %560 = vmatpush.bf16.msra.mxu0 %v470
        %561 = vmatpush.bf16.msra.mxu0 %v462
        %562 = vmatpush.bf16.msra.mxu0 %v454
        %563 = vmatpush.bf16.msra.mxu0 %v446
        %564 = vmatpush.bf16.msra.mxu0 %v438
        %565 = vmatpush.bf16.msra.mxu0 %v430
        %566 = vmatmul.bf16.gmra.mxu0 %v236
        %v567 = vpop.f32.mrf.mxu0
        %v568 = vadd.f32 0.0, %v567
        %v569 = vpop.f32.mrf.mxu0
        %v570 = vadd.f32 0.0, %v569
        %571 = vdwg.mxu0
        %572 = vmatpush.bf16.msra.mxu0 %v487
        %573 = vmatpush.bf16.msra.mxu0 %v479
        %574 = vmatpush.bf16.msra.mxu0 %v471
        %575 = vmatpush.bf16.msra.mxu0 %v463
        %576 = vmatpush.bf16.msra.mxu0 %v455
        %577 = vmatpush.bf16.msra.mxu0 %v447
        %578 = vmatpush.bf16.msra.mxu0 %v439
        %579 = vmatpush.bf16.msra.mxu0 %v431
        %580 = vmatmul.bf16.gmra.mxu0 %v236
        %v581 = vpop.f32.mrf.mxu0
        %v582 = vadd.f32 0.0, %v581
        %v583 = vpop.f32.mrf.mxu0
        %v584 = vadd.f32 0.0, %v583
        %585 = vdwg.mxu0
        %586 = vmatpush.bf16.msra.mxu0 %v488
        %587 = vmatpush.bf16.msra.mxu0 %v480
        %588 = vmatpush.bf16.msra.mxu0 %v472
        %589 = vmatpush.bf16.msra.mxu0 %v464
        %590 = vmatpush.bf16.msra.mxu0 %v456
        %591 = vmatpush.bf16.msra.mxu0 %v448
        %592 = vmatpush.bf16.msra.mxu0 %v440
        %593 = vmatpush.bf16.msra.mxu0 %v432
        %594 = vmatmul.bf16.gmra.mxu0 %v236
        %v595 = vpop.f32.mrf.mxu0
        %v596 = vadd.f32 0.0, %v595
        %v597 = vpop.f32.mrf.mxu0
        %v598 = vadd.f32 0.0, %v597
        %599 = vdwg.mxu0
        %600 = vmatpush.bf16.msra.mxu0 %v489
        %601 = vmatpush.bf16.msra.mxu0 %v481
        %602 = vmatpush.bf16.msra.mxu0 %v473
        %603 = vmatpush.bf16.msra.mxu0 %v465
        %604 = vmatpush.bf16.msra.mxu0 %v457
        %605 = vmatpush.bf16.msra.mxu0 %v449
        %606 = vmatpush.bf16.msra.mxu0 %v441
        %607 = vmatpush.bf16.msra.mxu0 %v433
        %608 = vmatmul.bf16.gmra.mxu0 %v236
        %v609 = vpop.f32.mrf.mxu0
        %v610 = vadd.f32 0.0, %v609
        %v611 = vpop.f32.mrf.mxu0
        %v612 = vadd.f32 0.0, %v611
        %613 = vdwg.mxu0
        %614 = vmatpush.bf16.msra.mxu0 %v490
        %615 = vmatpush.bf16.msra.mxu0 %v482
        %616 = vmatpush.bf16.msra.mxu0 %v474
        %617 = vmatpush.bf16.msra.mxu0 %v466
        %618 = vmatpush.bf16.msra.mxu0 %v458
        %619 = vmatpush.bf16.msra.mxu0 %v450
        %620 = vmatpush.bf16.msra.mxu0 %v442
        %621 = vmatpush.bf16.msra.mxu0 %v434
        %622 = vmatmul.bf16.gmra.mxu0 %v236
        %v623 = vpop.f32.mrf.mxu0
        %v624 = vadd.f32 0.0, %v623
        %v625 = vpop.f32.mrf.mxu0
        %v626 = vadd.f32 0.0, %v625
        %627 = vdwg.mxu0
        %628 = vmatpush.bf16.msra.mxu0 %v491
        %629 = vmatpush.bf16.msra.mxu0 %v483
        %630 = vmatpush.bf16.msra.mxu0 %v475
        %631 = vmatpush.bf16.msra.mxu0 %v467
        %632 = vmatpush.bf16.msra.mxu0 %v459
        %633 = vmatpush.bf16.msra.mxu0 %v451
        %634 = vmatpush.bf16.msra.mxu0 %v443
        %635 = vmatpush.bf16.msra.mxu0 %v435
        %636 = vmatmul.bf16.gmra.mxu0 %v236
        %v637 = vpop.f32.mrf.mxu0
        %v638 = vadd.f32 0.0, %v637
        %v639 = vpop.f32.mrf.mxu0
        %v640 = vadd.f32 0.0, %v639
        %641 = vdwg.mxu0
        %642 = vmatpush.bf16.msra.mxu0 %v492
        %643 = vmatpush.bf16.msra.mxu0 %v484
        %644 = vmatpush.bf16.msra.mxu0 %v476
        %645 = vmatpush.bf16.msra.mxu0 %v468
        %646 = vmatpush.bf16.msra.mxu0 %v460
        %647 = vmatpush.bf16.msra.mxu0 %v452
        %648 = vmatpush.bf16.msra.mxu0 %v444
        %649 = vmatpush.bf16.msra.mxu0 %v436
        %650 = vmatmul.bf16.gmra.mxu0 %v236
        %v651 = vpop.f32.mrf.mxu0
        %v652 = vadd.f32 0.0, %v651
        %v653 = vpop.f32.mrf.mxu0
        %v654 = vadd.f32 0.0, %v653
        %655 = vdwg.mxu0
        %656 = vmatpush.bf16.msra.mxu0 %v493
        %657 = vmatpush.bf16.msra.mxu0 %v485
        %658 = vmatpush.bf16.msra.mxu0 %v477
        %659 = vmatpush.bf16.msra.mxu0 %v469
        %660 = vmatpush.bf16.msra.mxu0 %v461
        %661 = vmatpush.bf16.msra.mxu0 %v453
        %662 = vmatpush.bf16.msra.mxu0 %v445
        %663 = vmatpush.bf16.msra.mxu0 %v437
        %664 = vmatmul.bf16.gmra.mxu0 %v236
        %v665 = vpop.f32.mrf.mxu0
        %v666 = vadd.f32 0.0, %v665
        %v667 = vpop.f32.mrf.mxu0
        %v668 = vadd.f32 0.0, %v667
        %669 = vdwg.mxu0
        %670 = vst [vmem:[%s164] sm:$0xff] %v568
        %671 = vst [vmem:[%s164 + $0x8] sm:$0xff] %v582
        %672 = vst [vmem:[%s164 + $0x10] sm:$0xff] %v596
        %673 = vst [vmem:[%s164 + $0x18] sm:$0xff] %v610
        %674 = vst [vmem:[%s164 + $0x20] sm:$0xff] %v624
        %675 = vst [vmem:[%s164 + $0x28] sm:$0xff] %v638
        %676 = vst [vmem:[%s164 + $0x30] sm:$0xff] %v652
        %677 = vst [vmem:[%s164 + $0x38] sm:$0xff] %v666
        %678 = vst [vmem:[%s164 + $0x40] sm:$0xff] %v570
        %679 = vst [vmem:[%s164 + $0x48] sm:$0xff] %v584
        %680 = vst [vmem:[%s164 + $0x50] sm:$0xff] %v598
        %681 = vst [vmem:[%s164 + $0x58] sm:$0xff] %v612
        %682 = vst [vmem:[%s164 + $0x60] sm:$0xff] %v626
        %683 = vst [vmem:[%s164 + $0x68] sm:$0xff] %v640
        %684 = vst [vmem:[%s164 + $0x70] sm:$0xff] %v654
        %685 = vst [vmem:[%s164 + $0x78] sm:$0xff] %v668
        %s686 = smul.u32 2, %s14
        %p687 = scmp.lt.s32.totalorder %s686, 3
        %s688 = scalar_select %p687, %s686, 3
        %s689 = smul.addr %s688, 8
        %s690 = smul.addr %s689, 8
        %s691 = scalar_lea.vmem %s2, %s690
        // Predicated region
        $region33: #{_lambda_.6} parent=27 // pred_check
          %p692 = pneg %p79
        $region34: #{_lambda_.6} parent=27 // pred_check_branch
          %694 = sbr.rel (%p692) target = $region36
        $region35: #{_lambda_.6} parent=27 // pred_region
          %s695 = smul.u32 2, %s14
        $region36: #{_lambda_.6} parent=27 // pred_fallthru
          _
      $region28: #{_lambda_.6} parent=5 // pred_fallthru
        _
      %p696 = scmp.le.s32.totalorder 2, %s9
      // Predicated region
      $region37: #{_lambda_.6} parent=5 // pred_check
        %p697 = pneg %p696
      $region38: #{_lambda_.6} parent=5 // pred_check_branch
        %699 = sbr.rel (%p697) target = $region40
      $region39: #{_lambda_.6} parent=5 // pred_region
        %s700 = ssub.s32 %s9, 2
        // Predicated region
        $region41: #{_lambda_.6} parent=39 // pred_check
          %p701 = pneg %p85
        $region42: #{_lambda_.6} parent=39 // pred_check_branch
          %703 = sbr.rel (%p701) target = $region44
        $region43: #{_lambda_.6} parent=39 // pred_region
          %s704 = smul.u32 2, %s15
          %p705 = scmp.lt.s32.totalorder %s704, 3
          %s706 = scalar_select %p705, %s704, 3
          %s707 = smul.addr %s706, 8
          %s708 = smul.addr %s707, 8
          %s709 = scalar_lea.vmem %s2, %s708
        $region44: #{_lambda_.6} parent=39 // pred_fallthru
          _
      $region40: #{_lambda_.6} parent=5 // pred_fallthru
        _
    $region6: #{_lambda_.6} parent=1 // loop_footer
      %s13 = sadd.s32 1, %s9
    $region7: #{_lambda_.6} parent=1 // loop_footer_branch
      %8 = sbr.rel target = $region3
    $region8: #{_lambda_.6} parent=1 // loop_exit
      _
    %710 = vsyncpa [#allocation3], 1
    %s711 = scalar_lea.sflag [#allocation3], 1
    %712 = vsyncpa %s711, 1

// kernel: _lambda_.5
$region0: #{_lambda_.5}
  #allocation0 [shape = 'u32[]', space=smem, size = 0x4, offset = 0x4, fixed_abs, tag = 'smem constant byte address 0x4 - core index']
  #allocation1 [shape = 'u32[72,128]{1,0:T(1,128)}', space=vmem, size = 0x9000, scoped, tag = 'internal scratch']
  %s0 = inlined_call_operand.vmem [shape: bf16[2,32], index: 0, kind: input, shape index: {}]
  %s1 = inlined_call_operand.hbm [shape: bf16[32,256], index: 1, kind: input, shape index: {}]
  %s2 = inlined_call_operand.hbm [shape: f32[1,256], index: 2, kind: input, shape index: {}]
  %s3 = inlined_call_operand.hbm [shape: bf16[256,2048], index: 3, kind: input, shape index: {}]
  %s4 = inlined_call_operand.hbm [shape: f32[1,2048], index: 4, kind: input, shape index: {}]
  %s5 = inlined_call_operand.vmem [shape: f32[2,2048], index: 5, kind: output, shape index: {}]
  %s6 = sld [smem:[#allocation0]]
  $region46: #{_lambda_.5} parent=0
    _
  %s8 = ssub.s32 1, %s6
  %s9 = scalar_select 0, %s8, %s6
  $region1: #{_lambda_.5} parent=0
    #allocation2 [shape = 'u8[16384]{0}', space=vmem, size = 0x4000, scoped, tag = 'input window, operand 1, single buffered']
    #allocation3 [shape = 's32[1]{0}', space=sflag, size = 0x4, scoped, tag = 'scoped memory for _lambda_.5']
    #allocation4 [shape = 'u8[1024]{0}', space=vmem, size = 0x400, scoped, tag = 'input window, operand 2, single buffered']
    #allocation5 [shape = 's32[1]{0}', space=sflag, size = 0x4, scoped, tag = 'scoped memory for _lambda_.5']
    #allocation6 [shape = 'u8[1048576]{0}', space=vmem, size = 0x100000, scoped, tag = 'input window, operand 3, single buffered']
    #allocation7 [shape = 'u8[8192]{0}', space=vmem, size = 0x2000, scoped, tag = 'input window, operand 4, single buffered']
    #allocation8 [shape = 's32[1]{0}', space=sflag, size = 0x4, scoped, tag = 'scoped memory for _lambda_.5']
    %10 = vsyncpa [#allocation3], 0
    %11 = vsyncpa [#allocation5], 0
    %12 = vsyncpa [#allocation8], 0
    // Predicated region
    $region2: #{_lambda_.5} parent=1 // pred_check
      _
    $region3: #{_lambda_.5} parent=1 // pred_check_branch
      %14 = sbr.rel (0) target = $region5
    $region4: #{_lambda_.5} parent=1 // pred_region
      _
    $region5: #{_lambda_.5} parent=1 // pred_fallthru
      _
    // Predicated region
    $region6: #{_lambda_.5} parent=1 // pred_check
      _
    $region7: #{_lambda_.5} parent=1 // pred_check_branch
      %16 = sbr.rel (0) target = $region9
    $region8: #{_lambda_.5} parent=1 // pred_region
      %18 = vsyncadd [#allocation3], 0
      %s19 = sshll.u32 %s1, 4
      %s20 = int_to_ptr.hbm [resolvable:$true] %s19
      %s21 = sshll.u32 [#allocation2], 4
      %s22 = int_to_ptr.vmem [resolvable:$true] %s21
      %27 = dma.hbm_to_vmem [thread:$0]  %s20, 512, %s22, [#allocation3], 128, 128, 8
    $region9: #{_lambda_.5} parent=1 // pred_fallthru
      _
    // Predicated region
    $region10: #{_lambda_.5} parent=1 // pred_check
      _
    $region11: #{_lambda_.5} parent=1 // pred_check_branch
      %29 = sbr.rel (0) target = $region13
    $region12: #{_lambda_.5} parent=1 // pred_region
      %31 = vsyncadd [#allocation5], 0
      %s33 = sshll.u32 %s2, 4
      %s34 = int_to_ptr.hbm [resolvable:$true] %s33
      %s35 = sshll.u32 [#allocation4], 4
      %s36 = int_to_ptr.vmem [resolvable:$true] %s35
      %38 = dma.hbm_to_vmem [thread:$0]  %s34, 32, %s36, [#allocation5]
    $region13: #{_lambda_.5} parent=1 // pred_fallthru
      _
    // Predicated region
    $region14: #{_lambda_.5} parent=1 // pred_check
      _
    $region15: #{_lambda_.5} parent=1 // pred_check_branch
      %40 = sbr.rel (0) target = $region17
    $region16: #{_lambda_.5} parent=1 // pred_region
      %42 = vsyncadd [#allocation5], 0
      %s43 = sshll.u32 %s3, 4
      %s44 = int_to_ptr.hbm [resolvable:$true] %s43
      %s45 = sshll.u32 [#allocation6], 4
      %s46 = int_to_ptr.vmem [resolvable:$true] %s45
      %51 = dma.hbm_to_vmem [thread:$0]  %s44, 32768, %s46, [#allocation5], 1024, 1024, 64
    $region17: #{_lambda_.5} parent=1 // pred_fallthru
      _
    // Predicated region
    $region18: #{_lambda_.5} parent=1 // pred_check
      _
    $region19: #{_lambda_.5} parent=1 // pred_check_branch
      %53 = sbr.rel (0) target = $region21
    $region20: #{_lambda_.5} parent=1 // pred_region
      %55 = vsyncadd [#allocation8], 0
      %s57 = sshll.u32 %s4, 4
      %s58 = int_to_ptr.hbm [resolvable:$true] %s57
      %s59 = sshll.u32 [#allocation7], 4
      %s60 = int_to_ptr.vmem [resolvable:$true] %s59
      %62 = dma.hbm_to_vmem [thread:$0]  %s58, 256, %s60, [#allocation8]
    $region21: #{_lambda_.5} parent=1 // pred_fallthru
      _
    // Predicated region
    $region22: #{_lambda_.5} parent=1 // pred_check
      _
    $region23: #{_lambda_.5} parent=1 // pred_check_branch
      %64 = sbr.rel (0) target = $region25
    $region24: #{_lambda_.5} parent=1 // pred_region
      %66 = dma.done [#allocation3], 512
    $region25: #{_lambda_.5} parent=1 // pred_fallthru
      _
    // Predicated region
    $region26: #{_lambda_.5} parent=1 // pred_check
      _
    $region27: #{_lambda_.5} parent=1 // pred_check_branch
      %68 = sbr.rel (0) target = $region29
    $region28: #{_lambda_.5} parent=1 // pred_region
      %70 = dma.done [#allocation5], 32
    $region29: #{_lambda_.5} parent=1 // pred_fallthru
      _
    // Predicated region
    $region30: #{_lambda_.5} parent=1 // pred_check
      _
    $region31: #{_lambda_.5} parent=1 // pred_check_branch
      %72 = sbr.rel (0) target = $region33
    $region32: #{_lambda_.5} parent=1 // pred_region
      %74 = dma.done [#allocation5], 32768
    $region33: #{_lambda_.5} parent=1 // pred_fallthru
      _
    // Predicated region
    $region34: #{_lambda_.5} parent=1 // pred_check
      _
    $region35: #{_lambda_.5} parent=1 // pred_check_branch
      %76 = sbr.rel (0) target = $region37
    $region36: #{_lambda_.5} parent=1 // pred_region
      %78 = dma.done [#allocation8], 256
    $region37: #{_lambda_.5} parent=1 // pred_fallthru
      _
    %v80 = vld [vmem:[%s0] sm:$0x1]
    %v81 = vld [vmem:[#allocation2] sm:$0xff]
    %v82 = vld [vmem:[#allocation2 + $0x8] sm:$0xff]
    %v83 = vld [vmem:[#allocation2 + $0x10] sm:$0xff]
    %v84 = vld [vmem:[#allocation2 + $0x18] sm:$0xff]
    %v85 = vld [vmem:[#allocation4] sm:$0x3]
    %v87 = vperm.slane %v85, 0
    %v88 = vperm.slane %v85, 1
    %v95 = vunpack.c.l.b16 %v81
    %v96 = vunpack.c.h.b16 %v81
    %v97 = vunpack.c.l.b16 %v82
    %v98 = vunpack.c.h.b16 %v82
    %v99 = vunpack.c.l.b16 %v83
    %v100 = vunpack.c.h.b16 %v83
    %v101 = vunpack.c.l.b16 %v84
    %v102 = vunpack.c.h.b16 %v84
    %v103 = vpack.c.b16 %v97, %v95
    %v104 = vpack.c.b16 %v98, %v96
    %v105 = vpack.c.b16 %v101, %v99
    %v106 = vpack.c.b16 %v102, %v100
    %vm111 = vcmask 261120
    %v113 = vsel %vm111, %v80, 0
    %115 = vmatpush.bf16.msra.mxu0 0
    %116 = vmatpush.bf16.msra.mxu0 0
    %117 = vmatpush.bf16.msra.mxu0 0
    %118 = vmatpush.bf16.msra.mxu0 0
    %119 = vmatpush.bf16.msra.mxu0 0
    %120 = vmatpush.bf16.msra.mxu0 0
    %121 = vmatpush.bf16.msra.mxu0 %v105
    %122 = vmatpush.bf16.msra.mxu0 %v103
    %123 = vmatmul.bf16.gmra.mxu0 %v113
    %v124 = vpop.f32.mrf.mxu0
    %v125 = vadd.f32 %v87, %v124
    %v126 = vpop.f32.mrf.mxu0
    %127 = vdwg.mxu0
    %128 = vmatpush.bf16.msra.mxu0 0
    %129 = vmatpush.bf16.msra.mxu0 0
    %130 = vmatpush.bf16.msra.mxu0 0
    %131 = vmatpush.bf16.msra.mxu0 0
    %132 = vmatpush.bf16.msra.mxu0 0
    %133 = vmatpush.bf16.msra.mxu0 0
    %134 = vmatpush.bf16.msra.mxu0 %v106
    %135 = vmatpush.bf16.msra.mxu0 %v104
    %136 = vmatmul.bf16.gmra.mxu0 %v113
    %v137 = vpop.f32.mrf.mxu0
    %v138 = vadd.f32 %v88, %v137
    %v139 = vpop.f32.mrf.mxu0
    %140 = vdwg.mxu0
    %v141 = vmax.f32 %v125, 0.0
    %v142 = vmax.f32 %v138, 0.0
    %v143 = vpack.c.bf16 %v141, %v141
    %v144 = vpack.c.bf16 %v142, %v142
    %v145 = vld [vmem:[#allocation6] sm:$0xff]
    %v146 = vld [vmem:[#allocation6 + $0x8] sm:$0xff]
    %v147 = vld [vmem:[#allocation6 + $0x10] sm:$0xff]
    %v148 = vld [vmem:[#allocation6 + $0x18] sm:$0xff]
    %v149 = vld [vmem:[#allocation6 + $0x20] sm:$0xff]
    %v150 = vld [vmem:[#allocation6 + $0x28] sm:$0xff]
    %v151 = vld [vmem:[#allocation6 + $0x30] sm:$0xff]
    %v152 = vld [vmem:[#allocation6 + $0x38] sm:$0xff]
    %v153 = vld [vmem:[#allocation6 + $0x40] sm:$0xff]
    %v154 = vld [vmem:[#allocation6 + $0x48] sm:$0xff]
    %v155 = vld [vmem:[#allocation6 + $0x50] sm:$0xff]
    %v156 = vld [vmem:[#allocation6 + $0x58] sm:$0xff]
    %v157 = vld [vmem:[#allocation6 + $0x60] sm:$0xff]
    %v158 = vld [vmem:[#allocation6 + $0x68] sm:$0xff]
    %v159 = vld [vmem:[#allocation6 + $0x70] sm:$0xff]
    %v160 = vld [vmem:[#allocation6 + $0x78] sm:$0xff]
    %v161 = vld [vmem:[#allocation6 + $0x80] sm:$0xff]
    %v162 = vld [vmem:[#allocation6 + $0x88] sm:$0xff]
    %v163 = vld [vmem:[#allocation6 + $0x90] sm:$0xff]
    %v164 = vld [vmem:[#allocation6 + $0x98] sm:$0xff]
    %v165 = vld [vmem:[#allocation6 + $0xa0] sm:$0xff]
    %v166 = vld [vmem:[#allocation6 + $0xa8] sm:$0xff]
    %v167 = vld [vmem:[#allocation6 + $0xb0] sm:$0xff]
    %v168 = vld [vmem:[#allocation6 + $0xb8] sm:$0xff]
    %v169 = vld [vmem:[#allocation6 + $0xc0] sm:$0xff]
    %v170 = vld [vmem:[#allocation6 + $0xc8] sm:$0xff]
    %v171 = vld [vmem:[#allocation6 + $0xd0] sm:$0xff]
    %v172 = vld [vmem:[#allocation6 + $0xd8] sm:$0xff]
    %v173 = vld [vmem:[#allocation6 + $0xe0] sm:$0xff]
    %v174 = vld [vmem:[#allocation6 + $0xe8] sm:$0xff]
    %v175 = vld [vmem:[#allocation6 + $0xf0] sm:$0xff]
    %v176 = vld [vmem:[#allocation6 + $0xf8] sm:$0xff]
    %v177 = vld [vmem:[#allocation6 + $0x100] sm:$0xff]
    %v178 = vld [vmem:[#allocation6 + $0x108] sm:$0xff]
    %v179 = vld [vmem:[#allocation6 + $0x110] sm:$0xff]
    %v180 = vld [vmem:[#allocation6 + $0x118] sm:$0xff]
    %v181 = vld [vmem:[#allocation6 + $0x120] sm:$0xff]
    %v182 = vld [vmem:[#allocation6 + $0x128] sm:$0xff]
    %v183 = vld [vmem:[#allocation6 + $0x130] sm:$0xff]
    %v184 = vld [vmem:[#allocation6 + $0x138] sm:$0xff]
    %v185 = vld [vmem:[#allocation6 + $0x140] sm:$0xff]
    %v186 = vld [vmem:[#allocation6 + $0x148] sm:$0xff]
    %v187 = vld [vmem:[#allocation6 + $0x150] sm:$0xff]
    %v188 = vld [vmem:[#allocation6 + $0x158] sm:$0xff]
    %v189 = vld [vmem:[#allocation6 + $0x160] sm:$0xff]
    %v190 = vld [vmem:[#allocation6 + $0x168] sm:$0xff]
    %v191 = vld [vmem:[#allocation6 + $0x170] sm:$0xff]
    %v192 = vld [vmem:[#allocation6 + $0x178] sm:$0xff]
    %v193 = vld [vmem:[#allocation6 + $0x180] sm:$0xff]
    %v194 = vld [vmem:[#allocation6 + $0x188] sm:$0xff]
    %v195 = vld [vmem:[#allocation6 + $0x190] sm:$0xff]
    %v196 = vld [vmem:[#allocation6 + $0x198] sm:$0xff]
    %v197 = vld [vmem:[#allocation6 + $0x1a0] sm:$0xff]
    %v198 = vld [vmem:[#allocation6 + $0x1a8] sm:$0xff]
    %v199 = vld [vmem:[#allocation6 + $0x1b0] sm:$0xff]
    %v200 = vld [vmem:[#allocation6 + $0x1b8] sm:$0xff]
    %v201 = vld [vmem:[#allocation6 + $0x1c0] sm:$0xff]
    %v202 = vld [vmem:[#allocation6 + $0x1c8] sm:$0xff]
    %v203 = vld [vmem:[#allocation6 + $0x1d0] sm:$0xff]
    %v204 = vld [vmem:[#allocation6 + $0x1d8] sm:$0xff]
    %v205 = vld [vmem:[#allocation6 + $0x1e0] sm:$0xff]
    %v206 = vld [vmem:[#allocation6 + $0x1e8] sm:$0xff]
    %v207 = vld [vmem:[#allocation6 + $0x1f0] sm:$0xff]
    %v208 = vld [vmem:[#allocation6 + $0x1f8] sm:$0xff]
    %v209 = vld [vmem:[#allocation6 + $0x200] sm:$0xff]
    %v210 = vld [vmem:[#allocation6 + $0x208] sm:$0xff]
    %v211 = vld [vmem:[#allocation6 + $0x210] sm:$0xff]
    %v212 = vld [vmem:[#allocation6 + $0x218] sm:$0xff]
    %v213 = vld [vmem:[#allocation6 + $0x220] sm:$0xff]
    %v214 = vld [vmem:[#allocation6 + $0x228] sm:$0xff]
    %v215 = vld [vmem:[#allocation6 + $0x230] sm:$0xff]
    %v216 = vld [vmem:[#allocation6 + $0x238] sm:$0xff]
    %v217 = vld [vmem:[#allocation6 + $0x240] sm:$0xff]
    %v218 = vld [vmem:[#allocation6 + $0x248] sm:$0xff]
    %v219 = vld [vmem:[#allocation6 + $0x250] sm:$0xff]
    %v220 = vld [vmem:[#allocation6 + $0x258] sm:$0xff]
    %v221 = vld [vmem:[#allocation6 + $0x260] sm:$0xff]
    %v222 = vld [vmem:[#allocation6 + $0x268] sm:$0xff]
    %v223 = vld [vmem:[#allocation6 + $0x270] sm:$0xff]
    %v224 = vld [vmem:[#allocation6 + $0x278] sm:$0xff]
    %v225 = vld [vmem:[#allocation6 + $0x280] sm:$0xff]
    %v226 = vld [vmem:[#allocation6 + $0x288] sm:$0xff]
    %v227 = vld [vmem:[#allocation6 + $0x290] sm:$0xff]
    %v228 = vld [vmem:[#allocation6 + $0x298] sm:$0xff]
    %v229 = vld [vmem:[#allocation6 + $0x2a0] sm:$0xff]
    %v230 = vld [vmem:[#allocation6 + $0x2a8] sm:$0xff]
    %v231 = vld [vmem:[#allocation6 + $0x2b0] sm:$0xff]
    %v232 = vld [vmem:[#allocation6 + $0x2b8] sm:$0xff]
    %v233 = vld [vmem:[#allocation6 + $0x2c0] sm:$0xff]
    %v234 = vld [vmem:[#allocation6 + $0x2c8] sm:$0xff]
    %v235 = vld [vmem:[#allocation6 + $0x2d0] sm:$0xff]
    %v236 = vld [vmem:[#allocation6 + $0x2d8] sm:$0xff]
    %v237 = vld [vmem:[#allocation6 + $0x2e0] sm:$0xff]
    %v238 = vld [vmem:[#allocation6 + $0x2e8] sm:$0xff]
    %v239 = vld [vmem:[#allocation6 + $0x2f0] sm:$0xff]
    %v240 = vld [vmem:[#allocation6 + $0x2f8] sm:$0xff]
    %v241 = vld [vmem:[#allocation6 + $0x300] sm:$0xff]
    %v242 = vld [vmem:[#allocation6 + $0x308] sm:$0xff]
    %v243 = vld [vmem:[#allocation6 + $0x310] sm:$0xff]
    %v244 = vld [vmem:[#allocation6 + $0x318] sm:$0xff]
    %v245 = vld [vmem:[#allocation6 + $0x320] sm:$0xff]
    %v246 = vld [vmem:[#allocation6 + $0x328] sm:$0xff]
    %v247 = vld [vmem:[#allocation6 + $0x330] sm:$0xff]
    %v248 = vld [vmem:[#allocation6 + $0x338] sm:$0xff]
    %v249 = vld [vmem:[#allocation6 + $0x340] sm:$0xff]
    %v250 = vld [vmem:[#allocation6 + $0x348] sm:$0xff]
    %v251 = vld [vmem:[#allocation6 + $0x350] sm:$0xff]
    %v252 = vld [vmem:[#allocation6 + $0x358] sm:$0xff]
    %v253 = vld [vmem:[#allocation6 + $0x360] sm:$0xff]
    %v254 = vld [vmem:[#allocation6 + $0x368] sm:$0xff]
    %v255 = vld [vmem:[#allocation6 + $0x370] sm:$0xff]
    %v256 = vld [vmem:[#allocation6 + $0x378] sm:$0xff]
    %v257 = vld [vmem:[#allocation6 + $0x380] sm:$0xff]
    %v258 = vld [vmem:[#allocation6 + $0x388] sm:$0xff]
    %v259 = vld [vmem:[#allocation6 + $0x390] sm:$0xff]
    %v260 = vld [vmem:[#allocation6 + $0x398] sm:$0xff]
    %v261 = vld [vmem:[#allocation6 + $0x3a0] sm:$0xff]
    %v262 = vld [vmem:[#allocation6 + $0x3a8] sm:$0xff]
    %v263 = vld [vmem:[#allocation6 + $0x3b0] sm:$0xff]
    %v264 = vld [vmem:[#allocation6 + $0x3b8] sm:$0xff]
    %v265 = vld [vmem:[#allocation6 + $0x3c0] sm:$0xff]
    %v266 = vld [vmem:[#allocation6 + $0x3c8] sm:$0xff]
    %v267 = vld [vmem:[#allocation6 + $0x3d0] sm:$0xff]
    %v268 = vld [vmem:[#allocation6 + $0x3d8] sm:$0xff]
    %v269 = vld [vmem:[#allocation6 + $0x3e0] sm:$0xff]
    %v270 = vld [vmem:[#allocation6 + $0x3e8] sm:$0xff]
    %v271 = vld [vmem:[#allocation6 + $0x3f0] sm:$0xff]
    %v272 = vld [vmem:[#allocation6 + $0x3f8] sm:$0xff]
    %v273 = vld [vmem:[#allocation6 + $0x400] sm:$0xff]
    %v274 = vld [vmem:[#allocation6 + $0x408] sm:$0xff]
    %v275 = vld [vmem:[#allocation6 + $0x410] sm:$0xff]
    %v276 = vld [vmem:[#allocation6 + $0x418] sm:$0xff]
    %v277 = vld [vmem:[#allocation6 + $0x420] sm:$0xff]
    %v278 = vld [vmem:[#allocation6 + $0x428] sm:$0xff]
    %v279 = vld [vmem:[#allocation6 + $0x430] sm:$0xff]
    %v280 = vld [vmem:[#allocation6 + $0x438] sm:$0xff]
    %v281 = vld [vmem:[#allocation6 + $0x440] sm:$0xff]
    %v282 = vld [vmem:[#allocation6 + $0x448] sm:$0xff]
    %v283 = vld [vmem:[#allocation6 + $0x450] sm:$0xff]
    %v284 = vld [vmem:[#allocation6 + $0x458] sm:$0xff]
    %v285 = vld [vmem:[#allocation6 + $0x460] sm:$0xff]
    %v286 = vld [vmem:[#allocation6 + $0x468] sm:$0xff]
    %v287 = vld [vmem:[#allocation6 + $0x470] sm:$0xff]
    %v288 = vld [vmem:[#allocation6 + $0x478] sm:$0xff]
    %v289 = vld [vmem:[#allocation6 + $0x480] sm:$0xff]
    %v290 = vld [vmem:[#allocation6 + $0x488] sm:$0xff]
    %v291 = vld [vmem:[#allocation6 + $0x490] sm:$0xff]
    %v292 = vld [vmem:[#allocation6 + $0x498] sm:$0xff]
    %v293 = vld [vmem:[#allocation6 + $0x4a0] sm:$0xff]
    %v294 = vld [vmem:[#allocation6 + $0x4a8] sm:$0xff]
    %v295 = vld [vmem:[#allocation6 + $0x4b0] sm:$0xff]
    %v296 = vld [vmem:[#allocation6 + $0x4b8] sm:$0xff]
    %v297 = vld [vmem:[#allocation6 + $0x4c0] sm:$0xff]
    %v298 = vld [vmem:[#allocation6 + $0x4c8] sm:$0xff]
    %v299 = vld [vmem:[#allocation6 + $0x4d0] sm:$0xff]
    %v300 = vld [vmem:[#allocation6 + $0x4d8] sm:$0xff]
    %v301 = vld [vmem:[#allocation6 + $0x4e0] sm:$0xff]
    %v302 = vld [vmem:[#allocation6 + $0x4e8] sm:$0xff]
    %v303 = vld [vmem:[#allocation6 + $0x4f0] sm:$0xff]
    %v304 = vld [vmem:[#allocation6 + $0x4f8] sm:$0xff]
    %v305 = vld [vmem:[#allocation6 + $0x500] sm:$0xff]
    %v306 = vld [vmem:[#allocation6 + $0x508] sm:$0xff]
    %v307 = vld [vmem:[#allocation6 + $0x510] sm:$0xff]
    %v308 = vld [vmem:[#allocation6 + $0x518] sm:$0xff]
    %v309 = vld [vmem:[#allocation6 + $0x520] sm:$0xff]
    %v310 = vld [vmem:[#allocation6 + $0x528] sm:$0xff]
    %v311 = vld [vmem:[#allocation6 + $0x530] sm:$0xff]
    %v312 = vld [vmem:[#allocation6 + $0x538] sm:$0xff]
    %v313 = vld [vmem:[#allocation6 + $0x540] sm:$0xff]
    %v314 = vld [vmem:[#allocation6 + $0x548] sm:$0xff]
    %v315 = vld [vmem:[#allocation6 + $0x550] sm:$0xff]
    %v316 = vld [vmem:[#allocation6 + $0x558] sm:$0xff]
    %v317 = vld [vmem:[#allocation6 + $0x560] sm:$0xff]
    %v318 = vld [vmem:[#allocation6 + $0x568] sm:$0xff]
    %v319 = vld [vmem:[#allocation6 + $0x570] sm:$0xff]
    %v320 = vld [vmem:[#allocation6 + $0x578] sm:$0xff]
    %v321 = vld [vmem:[#allocation6 + $0x580] sm:$0xff]
    %v322 = vld [vmem:[#allocation6 + $0x588] sm:$0xff]
    %v323 = vld [vmem:[#allocation6 + $0x590] sm:$0xff]
    %v324 = vld [vmem:[#allocation6 + $0x598] sm:$0xff]
    %v325 = vld [vmem:[#allocation6 + $0x5a0] sm:$0xff]
    %v326 = vld [vmem:[#allocation6 + $0x5a8] sm:$0xff]
    %v327 = vld [vmem:[#allocation6 + $0x5b0] sm:$0xff]
    %v328 = vld [vmem:[#allocation6 + $0x5b8] sm:$0xff]
    %v329 = vld [vmem:[#allocation6 + $0x5c0] sm:$0xff]
    %v330 = vld [vmem:[#allocation6 + $0x5c8] sm:$0xff]
    %v331 = vld [vmem:[#allocation6 + $0x5d0] sm:$0xff]
    %v332 = vld [vmem:[#allocation6 + $0x5d8] sm:$0xff]
    %v333 = vld [vmem:[#allocation6 + $0x5e0] sm:$0xff]
    %v334 = vld [vmem:[#allocation6 + $0x5e8] sm:$0xff]
    %v335 = vld [vmem:[#allocation6 + $0x5f0] sm:$0xff]
    %v336 = vld [vmem:[#allocation6 + $0x5f8] sm:$0xff]
    %v337 = vld [vmem:[#allocation6 + $0x600] sm:$0xff]
    %v338 = vld [vmem:[#allocation6 + $0x608] sm:$0xff]
    %v339 = vld [vmem:[#allocation6 + $0x610] sm:$0xff]
    %v340 = vld [vmem:[#allocation6 + $0x618] sm:$0xff]
    %v341 = vld [vmem:[#allocation6 + $0x620] sm:$0xff]
    %v342 = vld [vmem:[#allocation6 + $0x628] sm:$0xff]
    %v343 = vld [vmem:[#allocation6 + $0x630] sm:$0xff]
    %v344 = vld [vmem:[#allocation6 + $0x638] sm:$0xff]
    %v345 = vld [vmem:[#allocation6 + $0x640] sm:$0xff]
    %v346 = vld [vmem:[#allocation6 + $0x648] sm:$0xff]
    %v347 = vld [vmem:[#allocation6 + $0x650] sm:$0xff]
    %v348 = vld [vmem:[#allocation6 + $0x658] sm:$0xff]
    %v349 = vld [vmem:[#allocation6 + $0x660] sm:$0xff]
    %v350 = vld [vmem:[#allocation6 + $0x668] sm:$0xff]
    %v351 = vld [vmem:[#allocation6 + $0x670] sm:$0xff]
    %v352 = vld [vmem:[#allocation6 + $0x678] sm:$0xff]
    %v353 = vld [vmem:[#allocation6 + $0x680] sm:$0xff]
    %v354 = vld [vmem:[#allocation6 + $0x688] sm:$0xff]
    %v355 = vld [vmem:[#allocation6 + $0x690] sm:$0xff]
    %v356 = vld [vmem:[#allocation6 + $0x698] sm:$0xff]
    %v357 = vld [vmem:[#allocation6 + $0x6a0] sm:$0xff]
    %v358 = vld [vmem:[#allocation6 + $0x6a8] sm:$0xff]
    %v359 = vld [vmem:[#allocation6 + $0x6b0] sm:$0xff]
    %v360 = vld [vmem:[#allocation6 + $0x6b8] sm:$0xff]
    %v361 = vld [vmem:[#allocation6 + $0x6c0] sm:$0xff]
    %v362 = vld [vmem:[#allocation6 + $0x6c8] sm:$0xff]
    %v363 = vld [vmem:[#allocation6 + $0x6d0] sm:$0xff]
    %v364 = vld [vmem:[#allocation6 + $0x6d8] sm:$0xff]
    %v365 = vld [vmem:[#allocation6 + $0x6e0] sm:$0xff]
    %v366 = vld [vmem:[#allocation6 + $0x6e8] sm:$0xff]
    %v367 = vld [vmem:[#allocation6 + $0x6f0] sm:$0xff]
    %v368 = vld [vmem:[#allocation6 + $0x6f8] sm:$0xff]
    %v369 = vld [vmem:[#allocation6 + $0x700] sm:$0xff]
    %v370 = vld [vmem:[#allocation6 + $0x708] sm:$0xff]
    %v371 = vld [vmem:[#allocation6 + $0x710] sm:$0xff]
    %v372 = vld [vmem:[#allocation6 + $0x718] sm:$0xff]
    %v373 = vld [vmem:[#allocation6 + $0x720] sm:$0xff]
    %v374 = vld [vmem:[#allocation6 + $0x728] sm:$0xff]
    %v375 = vld [vmem:[#allocation6 + $0x730] sm:$0xff]
    %v376 = vld [vmem:[#allocation6 + $0x738] sm:$0xff]
    %v377 = vld [vmem:[#allocation6 + $0x740] sm:$0xff]
    %v378 = vld [vmem:[#allocation6 + $0x748] sm:$0xff]
    %v379 = vld [vmem:[#allocation6 + $0x750] sm:$0xff]
    %v380 = vld [vmem:[#allocation6 + $0x758] sm:$0xff]
    %v381 = vld [vmem:[#allocation6 + $0x760] sm:$0xff]
    %v382 = vld [vmem:[#allocation6 + $0x768] sm:$0xff]
    %v383 = vld [vmem:[#allocation6 + $0x770] sm:$0xff]
    %v384 = vld [vmem:[#allocation6 + $0x778] sm:$0xff]
    %v385 = vld [vmem:[#allocation6 + $0x780] sm:$0xff]
    %v386 = vld [vmem:[#allocation6 + $0x788] sm:$0xff]
    %v387 = vld [vmem:[#allocation6 + $0x790] sm:$0xff]
    %v388 = vld [vmem:[#allocation6 + $0x798] sm:$0xff]
    %v389 = vld [vmem:[#allocation6 + $0x7a0] sm:$0xff]
    %v390 = vld [vmem:[#allocation6 + $0x7a8] sm:$0xff]
    %v391 = vld [vmem:[#allocation6 + $0x7b0] sm:$0xff]
    %v392 = vld [vmem:[#allocation6 + $0x7b8] sm:$0xff]
    %v393 = vld [vmem:[#allocation6 + $0x7c0] sm:$0xff]
    %v394 = vld [vmem:[#allocation6 + $0x7c8] sm:$0xff]
    %v395 = vld [vmem:[#allocation6 + $0x7d0] sm:$0xff]
    %v396 = vld [vmem:[#allocation6 + $0x7d8] sm:$0xff]
    %v397 = vld [vmem:[#allocation6 + $0x7e0] sm:$0xff]
    %v398 = vld [vmem:[#allocation6 + $0x7e8] sm:$0xff]
    %v399 = vld [vmem:[#allocation6 + $0x7f0] sm:$0xff]
    %v400 = vld [vmem:[#allocation6 + $0x7f8] sm:$0xff]
    %v401 = vld [vmem:[#allocation7] sm:$0xff]
    %v402 = vld [vmem:[#allocation7 + $0x8] sm:$0xff]
    %v405 = vperm.slane %v401, 0
    %v406 = vperm.slane %v401, 1
    %v407 = vperm.slane %v401, 2
    %v408 = vperm.slane %v401, 3
    %v409 = vperm.slane %v401, 4
    %v410 = vperm.slane %v401, 5
    %v411 = vperm.slane %v401, 6
    %v412 = vperm.slane %v401, 7
    %v413 = vperm.slane %v402, 0
    %v414 = vperm.slane %v402, 1
    %v415 = vperm.slane %v402, 2
    %v416 = vperm.slane %v402, 3
    %v417 = vperm.slane %v402, 4
    %v418 = vperm.slane %v402, 5
    %v419 = vperm.slane %v402, 6
    %v420 = vperm.slane %v402, 7
    %v693 = vunpack.c.l.b16 %v145
    %v694 = vunpack.c.h.b16 %v145
    %v695 = vunpack.c.l.b16 %v146
    %v696 = vunpack.c.h.b16 %v146
    %v697 = vunpack.c.l.b16 %v147
    %v698 = vunpack.c.h.b16 %v147
    %v699 = vunpack.c.l.b16 %v148
    %v700 = vunpack.c.h.b16 %v148
    %v701 = vunpack.c.l.b16 %v149
    %v702 = vunpack.c.h.b16 %v149
    %v703 = vunpack.c.l.b16 %v150
    %v704 = vunpack.c.h.b16 %v150
    %v705 = vunpack.c.l.b16 %v151
    %v706 = vunpack.c.h.b16 %v151
    %v707 = vunpack.c.l.b16 %v152
    %v708 = vunpack.c.h.b16 %v152
    %v709 = vunpack.c.l.b16 %v153
    %v710 = vunpack.c.h.b16 %v153
    %v711 = vunpack.c.l.b16 %v154
    %v712 = vunpack.c.h.b16 %v154
    %v713 = vunpack.c.l.b16 %v155
    %v714 = vunpack.c.h.b16 %v155
    %v715 = vunpack.c.l.b16 %v156
    %v716 = vunpack.c.h.b16 %v156
    %v717 = vunpack.c.l.b16 %v157
    %v718 = vunpack.c.h.b16 %v157
    %v719 = vunpack.c.l.b16 %v158
    %v720 = vunpack.c.h.b16 %v158
    %v721 = vunpack.c.l.b16 %v159
    %v722 = vunpack.c.h.b16 %v159
    %v723 = vunpack.c.l.b16 %v160
    %v724 = vunpack.c.h.b16 %v160
    %v725 = vunpack.c.l.b16 %v161
    %v726 = vunpack.c.h.b16 %v161
    %v727 = vunpack.c.l.b16 %v162
    %v728 = vunpack.c.h.b16 %v162
    %v729 = vunpack.c.l.b16 %v163
    %v730 = vunpack.c.h.b16 %v163
    %v731 = vunpack.c.l.b16 %v164
    %v732 = vunpack.c.h.b16 %v164
    %v733 = vunpack.c.l.b16 %v165
    %v734 = vunpack.c.h.b16 %v165
    %v735 = vunpack.c.l.b16 %v166
    %v736 = vunpack.c.h.b16 %v166
    %v737 = vunpack.c.l.b16 %v167
    %v738 = vunpack.c.h.b16 %v167
    %v739 = vunpack.c.l.b16 %v168
    %v740 = vunpack.c.h.b16 %v168
    %v741 = vunpack.c.l.b16 %v169
    %v742 = vunpack.c.h.b16 %v169
    %v743 = vunpack.c.l.b16 %v170
    %v744 = vunpack.c.h.b16 %v170
    %v745 = vunpack.c.l.b16 %v171
    %v746 = vunpack.c.h.b16 %v171
    %v747 = vunpack.c.l.b16 %v172
    %v748 = vunpack.c.h.b16 %v172
    %v749 = vunpack.c.l.b16 %v173
    %v750 = vunpack.c.h.b16 %v173
    %v751 = vunpack.c.l.b16 %v174
    %v752 = vunpack.c.h.b16 %v174
    %v753 = vunpack.c.l.b16 %v175
    %v754 = vunpack.c.h.b16 %v175
    %v755 = vunpack.c.l.b16 %v176
    %v756 = vunpack.c.h.b16 %v176
    %v757 = vunpack.c.l.b16 %v177
    %v758 = vunpack.c.h.b16 %v177
    %v759 = vunpack.c.l.b16 %v178
    %v760 = vunpack.c.h.b16 %v178
    %v761 = vunpack.c.l.b16 %v179
    %v762 = vunpack.c.h.b16 %v179
    %v763 = vunpack.c.l.b16 %v180
    %v764 = vunpack.c.h.b16 %v180
    %v765 = vunpack.c.l.b16 %v181
    %v766 = vunpack.c.h.b16 %v181
    %v767 = vunpack.c.l.b16 %v182
    %v768 = vunpack.c.h.b16 %v182
    %v769 = vunpack.c.l.b16 %v183
    %v770 = vunpack.c.h.b16 %v183
    %v771 = vunpack.c.l.b16 %v184
    %v772 = vunpack.c.h.b16 %v184
    %v773 = vunpack.c.l.b16 %v185
    %v774 = vunpack.c.h.b16 %v185
    %v775 = vunpack.c.l.b16 %v186
    %v776 = vunpack.c.h.b16 %v186
    %v777 = vunpack.c.l.b16 %v187
    %v778 = vunpack.c.h.b16 %v187
    %v779 = vunpack.c.l.b16 %v188
    %v780 = vunpack.c.h.b16 %v188
    %v781 = vunpack.c.l.b16 %v189
    %v782 = vunpack.c.h.b16 %v189
    %v783 = vunpack.c.l.b16 %v190
    %v784 = vunpack.c.h.b16 %v190
    %v785 = vunpack.c.l.b16 %v191
    %v786 = vunpack.c.h.b16 %v191
    %v787 = vunpack.c.l.b16 %v192
    %v788 = vunpack.c.h.b16 %v192
    %v789 = vunpack.c.l.b16 %v193
    %v790 = vunpack.c.h.b16 %v193
    %v791 = vunpack.c.l.b16 %v194
    %v792 = vunpack.c.h.b16 %v194
    %v793 = vunpack.c.l.b16 %v195
    %v794 = vunpack.c.h.b16 %v195
    %v795 = vunpack.c.l.b16 %v196
    %v796 = vunpack.c.h.b16 %v196
    %v797 = vunpack.c.l.b16 %v197
    %v798 = vunpack.c.h.b16 %v197
    %v799 = vunpack.c.l.b16 %v198
    %v800 = vunpack.c.h.b16 %v198
    %v801 = vunpack.c.l.b16 %v199
    %v802 = vunpack.c.h.b16 %v199
    %v803 = vunpack.c.l.b16 %v200
    %v804 = vunpack.c.h.b16 %v200
    %v805 = vunpack.c.l.b16 %v201
    %v806 = vunpack.c.h.b16 %v201
    %v807 = vunpack.c.l.b16 %v202
    %v808 = vunpack.c.h.b16 %v202
    %v809 = vunpack.c.l.b16 %v203
    %v810 = vunpack.c.h.b16 %v203
    %v811 = vunpack.c.l.b16 %v204
    %v812 = vunpack.c.h.b16 %v204
    %v813 = vunpack.c.l.b16 %v205
    %v814 = vunpack.c.h.b16 %v205
    %v815 = vunpack.c.l.b16 %v206
    %v816 = vunpack.c.h.b16 %v206
    %v817 = vunpack.c.l.b16 %v207
    %v818 = vunpack.c.h.b16 %v207
    %v819 = vunpack.c.l.b16 %v208
    %v820 = vunpack.c.h.b16 %v208
    %v821 = vunpack.c.l.b16 %v209
    %v822 = vunpack.c.h.b16 %v209
    %v823 = vunpack.c.l.b16 %v210
    %v824 = vunpack.c.h.b16 %v210
    %v825 = vunpack.c.l.b16 %v211
    %v826 = vunpack.c.h.b16 %v211
    %v827 = vunpack.c.l.b16 %v212
    %v828 = vunpack.c.h.b16 %v212
    %v829 = vunpack.c.l.b16 %v213
    %v830 = vunpack.c.h.b16 %v213
    %v831 = vunpack.c.l.b16 %v214
    %v832 = vunpack.c.h.b16 %v214
    %v833 = vunpack.c.l.b16 %v215
    %v834 = vunpack.c.h.b16 %v215
    %v835 = vunpack.c.l.b16 %v216
    %v836 = vunpack.c.h.b16 %v216
    %v837 = vunpack.c.l.b16 %v217
    %v838 = vunpack.c.h.b16 %v217
    %v839 = vunpack.c.l.b16 %v218
    %v840 = vunpack.c.h.b16 %v218
    %v841 = vunpack.c.l.b16 %v219
    %v842 = vunpack.c.h.b16 %v219
    %v843 = vunpack.c.l.b16 %v220
    %v844 = vunpack.c.h.b16 %v220
    %v845 = vunpack.c.l.b16 %v221
    %v846 = vunpack.c.h.b16 %v221
    %v847 = vunpack.c.l.b16 %v222
    %v848 = vunpack.c.h.b16 %v222
    %v849 = vunpack.c.l.b16 %v223
    %v850 = vunpack.c.h.b16 %v223
    %v851 = vunpack.c.l.b16 %v224
    %v852 = vunpack.c.h.b16 %v224
    %v853 = vunpack.c.l.b16 %v225
    %v854 = vunpack.c.h.b16 %v225
    %v855 = vunpack.c.l.b16 %v226
    %v856 = vunpack.c.h.b16 %v226
    %v857 = vunpack.c.l.b16 %v227
    %v858 = vunpack.c.h.b16 %v227
    %v859 = vunpack.c.l.b16 %v228
    %v860 = vunpack.c.h.b16 %v228
    %v861 = vunpack.c.l.b16 %v229
    %v862 = vunpack.c.h.b16 %v229
    %v863 = vunpack.c.l.b16 %v230
    %v864 = vunpack.c.h.b16 %v230
    %v865 = vunpack.c.l.b16 %v231
    %v866 = vunpack.c.h.b16 %v231
    %v867 = vunpack.c.l.b16 %v232
    %v868 = vunpack.c.h.b16 %v232
    %v869 = vunpack.c.l.b16 %v233
    %v870 = vunpack.c.h.b16 %v233
    %v871 = vunpack.c.l.b16 %v234
    %v872 = vunpack.c.h.b16 %v234
    %v873 = vunpack.c.l.b16 %v235
    %v874 = vunpack.c.h.b16 %v235
    %v875 = vunpack.c.l.b16 %v236
    %v876 = vunpack.c.h.b16 %v236
    %v877 = vunpack.c.l.b16 %v237
    %v878 = vunpack.c.h.b16 %v237
    %v879 = vunpack.c.l.b16 %v238
    %v880 = vunpack.c.h.b16 %v238
    %v881 = vunpack.c.l.b16 %v239
    %v882 = vunpack.c.h.b16 %v239
    %v883 = vunpack.c.l.b16 %v240
    %v884 = vunpack.c.h.b16 %v240
    %v885 = vunpack.c.l.b16 %v241
    %v886 = vunpack.c.h.b16 %v241
    %v887 = vunpack.c.l.b16 %v242
    %v888 = vunpack.c.h.b16 %v242
    %v889 = vunpack.c.l.b16 %v243
    %v890 = vunpack.c.h.b16 %v243
    %v891 = vunpack.c.l.b16 %v244
    %v892 = vunpack.c.h.b16 %v244
    %v893 = vunpack.c.l.b16 %v245
    %v894 = vunpack.c.h.b16 %v245
    %v895 = vunpack.c.l.b16 %v246
    %v896 = vunpack.c.h.b16 %v246
    %v897 = vunpack.c.l.b16 %v247
    %v898 = vunpack.c.h.b16 %v247
    %v899 = vunpack.c.l.b16 %v248
    %v900 = vunpack.c.h.b16 %v248
    %v901 = vunpack.c.l.b16 %v249
    %v902 = vunpack.c.h.b16 %v249
    %v903 = vunpack.c.l.b16 %v250
    %v904 = vunpack.c.h.b16 %v250
    %v905 = vunpack.c.l.b16 %v251
    %v906 = vunpack.c.h.b16 %v251
    %v907 = vunpack.c.l.b16 %v252
    %v908 = vunpack.c.h.b16 %v252
    %v909 = vunpack.c.l.b16 %v253
    %v910 = vunpack.c.h.b16 %v253
    %v911 = vunpack.c.l.b16 %v254
    %v912 = vunpack.c.h.b16 %v254
    %v913 = vunpack.c.l.b16 %v255
    %v914 = vunpack.c.h.b16 %v255
    %v915 = vunpack.c.l.b16 %v256
    %v916 = vunpack.c.h.b16 %v256
    %v917 = vunpack.c.l.b16 %v257
    %v918 = vunpack.c.h.b16 %v257
    %v919 = vunpack.c.l.b16 %v258
    %v920 = vunpack.c.h.b16 %v258
    %v921 = vunpack.c.l.b16 %v259
    %v922 = vunpack.c.h.b16 %v259
    %v923 = vunpack.c.l.b16 %v260
    %v924 = vunpack.c.h.b16 %v260
    %v925 = vunpack.c.l.b16 %v261
    %v926 = vunpack.c.h.b16 %v261
    %v927 = vunpack.c.l.b16 %v262
    %v928 = vunpack.c.h.b16 %v262
    %v929 = vunpack.c.l.b16 %v263
    %v930 = vunpack.c.h.b16 %v263
    %v931 = vunpack.c.l.b16 %v264
    %v932 = vunpack.c.h.b16 %v264
    %v933 = vunpack.c.l.b16 %v265
    %v934 = vunpack.c.h.b16 %v265
    %v935 = vunpack.c.l.b16 %v266
    %v936 = vunpack.c.h.b16 %v266
    %v937 = vunpack.c.l.b16 %v267
    %v938 = vunpack.c.h.b16 %v267
    %v939 = vunpack.c.l.b16 %v268
    %v940 = vunpack.c.h.b16 %v268
    %v941 = vunpack.c.l.b16 %v269
    %v942 = vunpack.c.h.b16 %v269
    %v943 = vunpack.c.l.b16 %v270
    %v944 = vunpack.c.h.b16 %v270
    %v945 = vunpack.c.l.b16 %v271
    %v946 = vunpack.c.h.b16 %v271
    %v947 = vunpack.c.l.b16 %v272
    %v948 = vunpack.c.h.b16 %v272
    %v949 = vunpack.c.l.b16 %v273
    %v950 = vunpack.c.h.b16 %v273
    %v951 = vunpack.c.l.b16 %v274
    %v952 = vunpack.c.h.b16 %v274
    %v953 = vunpack.c.l.b16 %v275
    %v954 = vunpack.c.h.b16 %v275
    %v955 = vunpack.c.l.b16 %v276
    %v956 = vunpack.c.h.b16 %v276
    %v957 = vunpack.c.l.b16 %v277
    %v958 = vunpack.c.h.b16 %v277
    %v959 = vunpack.c.l.b16 %v278
    %v960 = vunpack.c.h.b16 %v278
    %v961 = vunpack.c.l.b16 %v279
    %v962 = vunpack.c.h.b16 %v279
    %v963 = vunpack.c.l.b16 %v280
    %v964 = vunpack.c.h.b16 %v280
    %v965 = vunpack.c.l.b16 %v281
    %v966 = vunpack.c.h.b16 %v281
    %v967 = vunpack.c.l.b16 %v282
    %v968 = vunpack.c.h.b16 %v282
    %v969 = vunpack.c.l.b16 %v283
    %v970 = vunpack.c.h.b16 %v283
    %v971 = vunpack.c.l.b16 %v284
    %v972 = vunpack.c.h.b16 %v284
    %v973 = vunpack.c.l.b16 %v285
    %v974 = vunpack.c.h.b16 %v285
    %v975 = vunpack.c.l.b16 %v286
    %v976 = vunpack.c.h.b16 %v286
    %v977 = vunpack.c.l.b16 %v287
    %v978 = vunpack.c.h.b16 %v287
    %v979 = vunpack.c.l.b16 %v288
    %v980 = vunpack.c.h.b16 %v288
    %v981 = vunpack.c.l.b16 %v289
    %v982 = vunpack.c.h.b16 %v289
    %v983 = vunpack.c.l.b16 %v290
    %v984 = vunpack.c.h.b16 %v290
    %v985 = vunpack.c.l.b16 %v291
    %v986 = vunpack.c.h.b16 %v291
    %v987 = vunpack.c.l.b16 %v292
    %v988 = vunpack.c.h.b16 %v292
    %v989 = vunpack.c.l.b16 %v293
    %v990 = vunpack.c.h.b16 %v293
    %v991 = vunpack.c.l.b16 %v294
    %v992 = vunpack.c.h.b16 %v294
    %v993 = vunpack.c.l.b16 %v295
    %v994 = vunpack.c.h.b16 %v295
    %v995 = vunpack.c.l.b16 %v296
    %v996 = vunpack.c.h.b16 %v296
    %v997 = vunpack.c.l.b16 %v297
    %v998 = vunpack.c.h.b16 %v297
    %v999 = vunpack.c.l.b16 %v298
    %v1000 = vunpack.c.h.b16 %v298
    %v1001 = vunpack.c.l.b16 %v299
    %v1002 = vunpack.c.h.b16 %v299
    %v1003 = vunpack.c.l.b16 %v300
    %v1004 = vunpack.c.h.b16 %v300
    %v1005 = vunpack.c.l.b16 %v301
    %v1006 = vunpack.c.h.b16 %v301
    %v1007 = vunpack.c.l.b16 %v302
    %v1008 = vunpack.c.h.b16 %v302
    %v1009 = vunpack.c.l.b16 %v303
    %v1010 = vunpack.c.h.b16 %v303
    %v1011 = vunpack.c.l.b16 %v304
    %v1012 = vunpack.c.h.b16 %v304
    %v1013 = vunpack.c.l.b16 %v305
    %v1014 = vunpack.c.h.b16 %v305
    %v1015 = vunpack.c.l.b16 %v306
    %v1016 = vunpack.c.h.b16 %v306
    %v1017 = vunpack.c.l.b16 %v307
    %v1018 = vunpack.c.h.b16 %v307
    %v1019 = vunpack.c.l.b16 %v308
    %v1020 = vunpack.c.h.b16 %v308
    %v1021 = vunpack.c.l.b16 %v309
    %v1022 = vunpack.c.h.b16 %v309
    %v1023 = vunpack.c.l.b16 %v310
    %v1024 = vunpack.c.h.b16 %v310
    %v1025 = vunpack.c.l.b16 %v311
    %v1026 = vunpack.c.h.b16 %v311
    %v1027 = vunpack.c.l.b16 %v312
    %v1028 = vunpack.c.h.b16 %v312
    %v1029 = vunpack.c.l.b16 %v313
    %v1030 = vunpack.c.h.b16 %v313
    %v1031 = vunpack.c.l.b16 %v314
    %v1032 = vunpack.c.h.b16 %v314
    %v1033 = vunpack.c.l.b16 %v315
    %v1034 = vunpack.c.h.b16 %v315
    %v1035 = vunpack.c.l.b16 %v316
    %v1036 = vunpack.c.h.b16 %v316
    %v1037 = vunpack.c.l.b16 %v317
    %v1038 = vunpack.c.h.b16 %v317
    %v1039 = vunpack.c.l.b16 %v318
    %v1040 = vunpack.c.h.b16 %v318
    %v1041 = vunpack.c.l.b16 %v319
    %v1042 = vunpack.c.h.b16 %v319
    %v1043 = vunpack.c.l.b16 %v320
    %v1044 = vunpack.c.h.b16 %v320
    %v1045 = vunpack.c.l.b16 %v321
    %v1046 = vunpack.c.h.b16 %v321
    %v1047 = vunpack.c.l.b16 %v322
    %v1048 = vunpack.c.h.b16 %v322
    %v1049 = vunpack.c.l.b16 %v323
    %v1050 = vunpack.c.h.b16 %v323
    %v1051 = vunpack.c.l.b16 %v324
    %v1052 = vunpack.c.h.b16 %v324
    %v1053 = vunpack.c.l.b16 %v325
    %v1054 = vunpack.c.h.b16 %v325
    %v1055 = vunpack.c.l.b16 %v326
    %v1056 = vunpack.c.h.b16 %v326
    %v1057 = vunpack.c.l.b16 %v327
    %v1058 = vunpack.c.h.b16 %v327
    %v1059 = vunpack.c.l.b16 %v328
    %v1060 = vunpack.c.h.b16 %v328
    %v1061 = vunpack.c.l.b16 %v329
    %v1062 = vunpack.c.h.b16 %v329
    %v1063 = vunpack.c.l.b16 %v330
    %v1064 = vunpack.c.h.b16 %v330
    %v1065 = vunpack.c.l.b16 %v331
    %v1066 = vunpack.c.h.b16 %v331
    %v1067 = vunpack.c.l.b16 %v332
    %v1068 = vunpack.c.h.b16 %v332
    %v1069 = vunpack.c.l.b16 %v333
    %v1070 = vunpack.c.h.b16 %v333
    %v1071 = vunpack.c.l.b16 %v334
    %v1072 = vunpack.c.h.b16 %v334
    %v1073 = vunpack.c.l.b16 %v335
    %v1074 = vunpack.c.h.b16 %v335
    %v1075 = vunpack.c.l.b16 %v336
    %v1076 = vunpack.c.h.b16 %v336
    %v1077 = vunpack.c.l.b16 %v337
    %v1078 = vunpack.c.h.b16 %v337
    %v1079 = vunpack.c.l.b16 %v338
    %v1080 = vunpack.c.h.b16 %v338
    %v1081 = vunpack.c.l.b16 %v339
    %v1082 = vunpack.c.h.b16 %v339
    %v1083 = vunpack.c.l.b16 %v340
    %v1084 = vunpack.c.h.b16 %v340
    %v1085 = vunpack.c.l.b16 %v341
    %v1086 = vunpack.c.h.b16 %v341
    %v1087 = vunpack.c.l.b16 %v342
    %v1088 = vunpack.c.h.b16 %v342
    %v1089 = vunpack.c.l.b16 %v343
    %v1090 = vunpack.c.h.b16 %v343
    %v1091 = vunpack.c.l.b16 %v344
    %v1092 = vunpack.c.h.b16 %v344
    %v1093 = vunpack.c.l.b16 %v345
    %v1094 = vunpack.c.h.b16 %v345
    %v1095 = vunpack.c.l.b16 %v346
    %v1096 = vunpack.c.h.b16 %v346
    %v1097 = vunpack.c.l.b16 %v347
    %v1098 = vunpack.c.h.b16 %v347
    %v1099 = vunpack.c.l.b16 %v348
    %v1100 = vunpack.c.h.b16 %v348
    %v1101 = vunpack.c.l.b16 %v349
    %v1102 = vunpack.c.h.b16 %v349
    %v1103 = vunpack.c.l.b16 %v350
    %v1104 = vunpack.c.h.b16 %v350
    %v1105 = vunpack.c.l.b16 %v351
    %v1106 = vunpack.c.h.b16 %v351
    %v1107 = vunpack.c.l.b16 %v352
    %v1108 = vunpack.c.h.b16 %v352
    %v1109 = vunpack.c.l.b16 %v353
    %v1110 = vunpack.c.h.b16 %v353
    %v1111 = vunpack.c.l.b16 %v354
    %v1112 = vunpack.c.h.b16 %v354
    %v1113 = vunpack.c.l.b16 %v355
    %v1114 = vunpack.c.h.b16 %v355
    %v1115 = vunpack.c.l.b16 %v356
    %v1116 = vunpack.c.h.b16 %v356
    %v1117 = vunpack.c.l.b16 %v357
    %v1118 = vunpack.c.h.b16 %v357
    %v1119 = vunpack.c.l.b16 %v358
    %v1120 = vunpack.c.h.b16 %v358
    %v1121 = vunpack.c.l.b16 %v359
    %v1122 = vunpack.c.h.b16 %v359
    %v1123 = vunpack.c.l.b16 %v360
    %v1124 = vunpack.c.h.b16 %v360
    %v1125 = vunpack.c.l.b16 %v361
    %v1126 = vunpack.c.h.b16 %v361
    %v1127 = vunpack.c.l.b16 %v362
    %v1128 = vunpack.c.h.b16 %v362
    %v1129 = vunpack.c.l.b16 %v363
    %v1130 = vunpack.c.h.b16 %v363
    %v1131 = vunpack.c.l.b16 %v364
    %v1132 = vunpack.c.h.b16 %v364
    %v1133 = vunpack.c.l.b16 %v365
    %v1134 = vunpack.c.h.b16 %v365
    %v1135 = vunpack.c.l.b16 %v366
    %v1136 = vunpack.c.h.b16 %v366
    %v1137 = vunpack.c.l.b16 %v367
    %v1138 = vunpack.c.h.b16 %v367
    %v1139 = vunpack.c.l.b16 %v368
    %v1140 = vunpack.c.h.b16 %v368
    %v1141 = vunpack.c.l.b16 %v369
    %v1142 = vunpack.c.h.b16 %v369
    %v1143 = vunpack.c.l.b16 %v370
    %v1144 = vunpack.c.h.b16 %v370
    %v1145 = vunpack.c.l.b16 %v371
    %v1146 = vunpack.c.h.b16 %v371
    %v1147 = vunpack.c.l.b16 %v372
    %v1148 = vunpack.c.h.b16 %v372
    %v1149 = vunpack.c.l.b16 %v373
    %v1150 = vunpack.c.h.b16 %v373
    %v1151 = vunpack.c.l.b16 %v374
    %v1152 = vunpack.c.h.b16 %v374
    %v1153 = vunpack.c.l.b16 %v375
    %v1154 = vunpack.c.h.b16 %v375
    %v1155 = vunpack.c.l.b16 %v376
    %v1156 = vunpack.c.h.b16 %v376
    %v1157 = vunpack.c.l.b16 %v377
    %v1158 = vunpack.c.h.b16 %v377
    %v1159 = vunpack.c.l.b16 %v378
    %v1160 = vunpack.c.h.b16 %v378
    %v1161 = vunpack.c.l.b16 %v379
    %v1162 = vunpack.c.h.b16 %v379
    %v1163 = vunpack.c.l.b16 %v380
    %v1164 = vunpack.c.h.b16 %v380
    %v1165 = vunpack.c.l.b16 %v381
    %v1166 = vunpack.c.h.b16 %v381
    %v1167 = vunpack.c.l.b16 %v382
    %v1168 = vunpack.c.h.b16 %v382
    %v1169 = vunpack.c.l.b16 %v383
    %v1170 = vunpack.c.h.b16 %v383
    %v1171 = vunpack.c.l.b16 %v384
    %v1172 = vunpack.c.h.b16 %v384
    %v1173 = vunpack.c.l.b16 %v385
    %v1174 = vunpack.c.h.b16 %v385
    %v1175 = vunpack.c.l.b16 %v386
    %v1176 = vunpack.c.h.b16 %v386
    %v1177 = vunpack.c.l.b16 %v387
    %v1178 = vunpack.c.h.b16 %v387
    %v1179 = vunpack.c.l.b16 %v388
    %v1180 = vunpack.c.h.b16 %v388
    %v1181 = vunpack.c.l.b16 %v389
    %v1182 = vunpack.c.h.b16 %v389
    %v1183 = vunpack.c.l.b16 %v390
    %v1184 = vunpack.c.h.b16 %v390
    %v1185 = vunpack.c.l.b16 %v391
    %v1186 = vunpack.c.h.b16 %v391
    %v1187 = vunpack.c.l.b16 %v392
    %v1188 = vunpack.c.h.b16 %v392
    %v1189 = vunpack.c.l.b16 %v393
    %v1190 = vunpack.c.h.b16 %v393
    %v1191 = vunpack.c.l.b16 %v394
    %v1192 = vunpack.c.h.b16 %v394
    %v1193 = vunpack.c.l.b16 %v395
    %v1194 = vunpack.c.h.b16 %v395
    %v1195 = vunpack.c.l.b16 %v396
    %v1196 = vunpack.c.h.b16 %v396
    %v1197 = vunpack.c.l.b16 %v397
    %v1198 = vunpack.c.h.b16 %v397
    %v1199 = vunpack.c.l.b16 %v398
    %v1200 = vunpack.c.h.b16 %v398
    %v1201 = vunpack.c.l.b16 %v399
    %v1202 = vunpack.c.h.b16 %v399
    %v1203 = vunpack.c.l.b16 %v400
    %v1204 = vunpack.c.h.b16 %v400
    %v1205 = vpack.c.b16 %v709, %v693
    %v1206 = vpack.c.b16 %v710, %v694
    %v1207 = vpack.c.b16 %v711, %v695
    %v1208 = vpack.c.b16 %v712, %v696
    %v1209 = vpack.c.b16 %v713, %v697
    %v1210 = vpack.c.b16 %v714, %v698
    %v1211 = vpack.c.b16 %v715, %v699
    %v1212 = vpack.c.b16 %v716, %v700
    %v1213 = vpack.c.b16 %v717, %v701
    %v1214 = vpack.c.b16 %v718, %v702
    %v1215 = vpack.c.b16 %v719, %v703
    %v1216 = vpack.c.b16 %v720, %v704
    %v1217 = vpack.c.b16 %v721, %v705
    %v1218 = vpack.c.b16 %v722, %v706
    %v1219 = vpack.c.b16 %v723, %v707
    %v1220 = vpack.c.b16 %v724, %v708
    %v1221 = vpack.c.b16 %v741, %v725
    %v1222 = vpack.c.b16 %v742, %v726
    %v1223 = vpack.c.b16 %v743, %v727
    %v1224 = vpack.c.b16 %v744, %v728
    %v1225 = vpack.c.b16 %v745, %v729
    %v1226 = vpack.c.b16 %v746, %v730
    %v1227 = vpack.c.b16 %v747, %v731
    %v1228 = vpack.c.b16 %v748, %v732
    %v1229 = vpack.c.b16 %v749, %v733
    %v1230 = vpack.c.b16 %v750, %v734
    %v1231 = vpack.c.b16 %v751, %v735
    %v1232 = vpack.c.b16 %v752, %v736
    %v1233 = vpack.c.b16 %v753, %v737
    %v1234 = vpack.c.b16 %v754, %v738
    %v1235 = vpack.c.b16 %v755, %v739
    %v1236 = vpack.c.b16 %v756, %v740
    %v1237 = vpack.c.b16 %v773, %v757
    %v1238 = vpack.c.b16 %v774, %v758
    %v1239 = vpack.c.b16 %v775, %v759
    %v1240 = vpack.c.b16 %v776, %v760
    %v1241 = vpack.c.b16 %v777, %v761
    %v1242 = vpack.c.b16 %v778, %v762
    %v1243 = vpack.c.b16 %v779, %v763
    %v1244 = vpack.c.b16 %v780, %v764
    %v1245 = vpack.c.b16 %v781, %v765
    %v1246 = vpack.c.b16 %v782, %v766
    %v1247 = vpack.c.b16 %v783, %v767
    %v1248 = vpack.c.b16 %v784, %v768
    %v1249 = vpack.c.b16 %v785, %v769
    %v1250 = vpack.c.b16 %v786, %v770
    %v1251 = vpack.c.b16 %v787, %v771
    %v1252 = vpack.c.b16 %v788, %v772
    %v1253 = vpack.c.b16 %v805, %v789
    %v1254 = vpack.c.b16 %v806, %v790
    %v1255 = vpack.c.b16 %v807, %v791
    %v1256 = vpack.c.b16 %v808, %v792
    %v1257 = vpack.c.b16 %v809, %v793
    %v1258 = vpack.c.b16 %v810, %v794
    %v1259 = vpack.c.b16 %v811, %v795
    %v1260 = vpack.c.b16 %v812, %v796
    %v1261 = vpack.c.b16 %v813, %v797
    %v1262 = vpack.c.b16 %v814, %v798
    %v1263 = vpack.c.b16 %v815, %v799
    %v1264 = vpack.c.b16 %v816, %v800
    %v1265 = vpack.c.b16 %v817, %v801
    %v1266 = vpack.c.b16 %v818, %v802
    %v1267 = vpack.c.b16 %v819, %v803
    %v1268 = vpack.c.b16 %v820, %v804
    %v1269 = vpack.c.b16 %v837, %v821
    %v1270 = vpack.c.b16 %v838, %v822
    %v1271 = vpack.c.b16 %v839, %v823
    %v1272 = vpack.c.b16 %v840, %v824
    %v1273 = vpack.c.b16 %v841, %v825
    %v1274 = vpack.c.b16 %v842, %v826
    %v1275 = vpack.c.b16 %v843, %v827
    %v1276 = vpack.c.b16 %v844, %v828
    %v1277 = vpack.c.b16 %v845, %v829
    %v1278 = vpack.c.b16 %v846, %v830
    %v1279 = vpack.c.b16 %v847, %v831
    %v1280 = vpack.c.b16 %v848, %v832
    %v1281 = vpack.c.b16 %v849, %v833
    %v1282 = vpack.c.b16 %v850, %v834
    %v1283 = vpack.c.b16 %v851, %v835
    %v1284 = vpack.c.b16 %v852, %v836
    %v1285 = vpack.c.b16 %v869, %v853
    %v1286 = vpack.c.b16 %v870, %v854
    %v1287 = vpack.c.b16 %v871, %v855
    %v1288 = vpack.c.b16 %v872, %v856
    %v1289 = vpack.c.b16 %v873, %v857
    %v1290 = vpack.c.b16 %v874, %v858
    %v1291 = vpack.c.b16 %v875, %v859
    %v1292 = vpack.c.b16 %v876, %v860
    %v1293 = vpack.c.b16 %v877, %v861
    %v1294 = vpack.c.b16 %v878, %v862
    %v1295 = vpack.c.b16 %v879, %v863
    %v1296 = vpack.c.b16 %v880, %v864
    %v1297 = vpack.c.b16 %v881, %v865
    %v1298 = vpack.c.b16 %v882, %v866
    %v1299 = vpack.c.b16 %v883, %v867
    %v1300 = vpack.c.b16 %v884, %v868
    %v1301 = vpack.c.b16 %v901, %v885
    %v1302 = vpack.c.b16 %v902, %v886
    %v1303 = vpack.c.b16 %v903, %v887
    %v1304 = vpack.c.b16 %v904, %v888
    %v1305 = vpack.c.b16 %v905, %v889
    %v1306 = vpack.c.b16 %v906, %v890
    %v1307 = vpack.c.b16 %v907, %v891
    %v1308 = vpack.c.b16 %v908, %v892
    %v1309 = vpack.c.b16 %v909, %v893
    %v1310 = vpack.c.b16 %v910, %v894
    %v1311 = vpack.c.b16 %v911, %v895
    %v1312 = vpack.c.b16 %v912, %v896
    %v1313 = vpack.c.b16 %v913, %v897
    %v1314 = vpack.c.b16 %v914, %v898
    %v1315 = vpack.c.b16 %v915, %v899
    %v1316 = vpack.c.b16 %v916, %v900
    %v1317 = vpack.c.b16 %v933, %v917
    %v1318 = vpack.c.b16 %v934, %v918
    %v1319 = vpack.c.b16 %v935, %v919
    %v1320 = vpack.c.b16 %v936, %v920
    %v1321 = vpack.c.b16 %v937, %v921
    %v1322 = vpack.c.b16 %v938, %v922
    %v1323 = vpack.c.b16 %v939, %v923
    %v1324 = vpack.c.b16 %v940, %v924
    %v1325 = vpack.c.b16 %v941, %v925
    %v1326 = vpack.c.b16 %v942, %v926
    %v1327 = vpack.c.b16 %v943, %v927
    %v1328 = vpack.c.b16 %v944, %v928
    %v1329 = vpack.c.b16 %v945, %v929
    %v1330 = vpack.c.b16 %v946, %v930
    %v1331 = vpack.c.b16 %v947, %v931
    %v1332 = vpack.c.b16 %v948, %v932
    %v1333 = vpack.c.b16 %v965, %v949
    %v1334 = vpack.c.b16 %v966, %v950
    %v1335 = vpack.c.b16 %v967, %v951
    %v1336 = vpack.c.b16 %v968, %v952
    %v1337 = vpack.c.b16 %v969, %v953
    %v1338 = vpack.c.b16 %v970, %v954
    %v1339 = vpack.c.b16 %v971, %v955
    %v1340 = vpack.c.b16 %v972, %v956
    %v1341 = vpack.c.b16 %v973, %v957
    %v1342 = vpack.c.b16 %v974, %v958
    %v1343 = vpack.c.b16 %v975, %v959
    %v1344 = vpack.c.b16 %v976, %v960
    %v1345 = vpack.c.b16 %v977, %v961
    %v1346 = vpack.c.b16 %v978, %v962
    %v1347 = vpack.c.b16 %v979, %v963
    %v1348 = vpack.c.b16 %v980, %v964
    %v1349 = vpack.c.b16 %v997, %v981
    %v1350 = vpack.c.b16 %v998, %v982
    %v1351 = vpack.c.b16 %v999, %v983
    %v1352 = vpack.c.b16 %v1000, %v984
    %v1353 = vpack.c.b16 %v1001, %v985
    %v1354 = vpack.c.b16 %v1002, %v986
    %v1355 = vpack.c.b16 %v1003, %v987
    %v1356 = vpack.c.b16 %v1004, %v988
    %v1357 = vpack.c.b16 %v1005, %v989
    %v1358 = vpack.c.b16 %v1006, %v990
    %v1359 = vpack.c.b16 %v1007, %v991
    %v1360 = vpack.c.b16 %v1008, %v992
    %v1361 = vpack.c.b16 %v1009, %v993
    %v1362 = vpack.c.b16 %v1010, %v994
    %v1363 = vpack.c.b16 %v1011, %v995
    %v1364 = vpack.c.b16 %v1012, %v996
    %v1365 = vpack.c.b16 %v1029, %v1013
    %v1366 = vpack.c.b16 %v1030, %v1014
    %v1367 = vpack.c.b16 %v1031, %v1015
    %v1368 = vpack.c.b16 %v1032, %v1016
    %v1369 = vpack.c.b16 %v1033, %v1017
    %v1370 = vpack.c.b16 %v1034, %v1018
    %v1371 = vpack.c.b16 %v1035, %v1019
    %v1372 = vpack.c.b16 %v1036, %v1020
    %v1373 = vpack.c.b16 %v1037, %v1021
    %v1374 = vpack.c.b16 %v1038, %v1022
    %v1375 = vpack.c.b16 %v1039, %v1023
    %v1376 = vpack.c.b16 %v1040, %v1024
    %v1377 = vpack.c.b16 %v1041, %v1025
    %v1378 = vpack.c.b16 %v1042, %v1026
    %v1379 = vpack.c.b16 %v1043, %v1027
    %v1380 = vpack.c.b16 %v1044, %v1028
    %v1381 = vpack.c.b16 %v1061, %v1045
    %v1382 = vpack.c.b16 %v1062, %v1046
    %v1383 = vpack.c.b16 %v1063, %v1047
    %v1384 = vpack.c.b16 %v1064, %v1048
    %v1385 = vpack.c.b16 %v1065, %v1049
    %v1386 = vpack.c.b16 %v1066, %v1050
    %v1387 = vpack.c.b16 %v1067, %v1051
    %v1388 = vpack.c.b16 %v1068, %v1052
    %v1389 = vpack.c.b16 %v1069, %v1053
    %v1390 = vpack.c.b16 %v1070, %v1054
    %v1391 = vpack.c.b16 %v1071, %v1055
    %v1392 = vpack.c.b16 %v1072, %v1056
    %v1393 = vpack.c.b16 %v1073, %v1057
    %v1394 = vpack.c.b16 %v1074, %v1058
    %v1395 = vpack.c.b16 %v1075, %v1059
    %v1396 = vpack.c.b16 %v1076, %v1060
    %v1397 = vpack.c.b16 %v1093, %v1077
    %v1398 = vpack.c.b16 %v1094, %v1078
    %v1399 = vpack.c.b16 %v1095, %v1079
    %v1400 = vpack.c.b16 %v1096, %v1080
    %v1401 = vpack.c.b16 %v1097, %v1081
    %v1402 = vpack.c.b16 %v1098, %v1082
    %v1403 = vpack.c.b16 %v1099, %v1083
    %v1404 = vpack.c.b16 %v1100, %v1084
    %v1405 = vpack.c.b16 %v1101, %v1085
    %v1406 = vpack.c.b16 %v1102, %v1086
    %v1407 = vpack.c.b16 %v1103, %v1087
    %v1408 = vpack.c.b16 %v1104, %v1088
    %v1409 = vpack.c.b16 %v1105, %v1089
    %v1410 = vpack.c.b16 %v1106, %v1090
    %v1411 = vpack.c.b16 %v1107, %v1091
    %v1412 = vpack.c.b16 %v1108, %v1092
    %v1413 = vpack.c.b16 %v1125, %v1109
    %v1414 = vpack.c.b16 %v1126, %v1110
    %v1415 = vpack.c.b16 %v1127, %v1111
    %v1416 = vpack.c.b16 %v1128, %v1112
    %v1417 = vpack.c.b16 %v1129, %v1113
    %v1418 = vpack.c.b16 %v1130, %v1114
    %v1419 = vpack.c.b16 %v1131, %v1115
    %v1420 = vpack.c.b16 %v1132, %v1116
    %v1421 = vpack.c.b16 %v1133, %v1117
    %v1422 = vpack.c.b16 %v1134, %v1118
    %v1423 = vpack.c.b16 %v1135, %v1119
    %v1424 = vpack.c.b16 %v1136, %v1120
    %v1425 = vpack.c.b16 %v1137, %v1121
    %v1426 = vpack.c.b16 %v1138, %v1122
    %v1427 = vpack.c.b16 %v1139, %v1123
    %v1428 = vpack.c.b16 %v1140, %v1124
    %v1429 = vpack.c.b16 %v1157, %v1141
    %v1430 = vpack.c.b16 %v1158, %v1142
    %v1431 = vpack.c.b16 %v1159, %v1143
    %v1432 = vpack.c.b16 %v1160, %v1144
    %v1433 = vpack.c.b16 %v1161, %v1145
    %v1434 = vpack.c.b16 %v1162, %v1146
    %v1435 = vpack.c.b16 %v1163, %v1147
    %v1436 = vpack.c.b16 %v1164, %v1148
    %v1437 = vpack.c.b16 %v1165, %v1149
    %v1438 = vpack.c.b16 %v1166, %v1150
    %v1439 = vpack.c.b16 %v1167, %v1151
    %v1440 = vpack.c.b16 %v1168, %v1152
    %v1441 = vpack.c.b16 %v1169, %v1153
    %v1442 = vpack.c.b16 %v1170, %v1154
    %v1443 = vpack.c.b16 %v1171, %v1155
    %v1444 = vpack.c.b16 %v1172, %v1156
    %v1445 = vpack.c.b16 %v1189, %v1173
    %v1446 = vpack.c.b16 %v1190, %v1174
    %v1447 = vpack.c.b16 %v1191, %v1175
    %v1448 = vpack.c.b16 %v1192, %v1176
    %v1449 = vpack.c.b16 %v1193, %v1177
    %v1450 = vpack.c.b16 %v1194, %v1178
    %v1451 = vpack.c.b16 %v1195, %v1179
    %v1452 = vpack.c.b16 %v1196, %v1180
    %v1453 = vpack.c.b16 %v1197, %v1181
    %v1454 = vpack.c.b16 %v1198, %v1182
    %v1455 = vpack.c.b16 %v1199, %v1183
    %v1456 = vpack.c.b16 %v1200, %v1184
    %v1457 = vpack.c.b16 %v1201, %v1185
    %v1458 = vpack.c.b16 %v1202, %v1186
    %v1459 = vpack.c.b16 %v1203, %v1187
    %v1460 = vpack.c.b16 %v1204, %v1188
    %1717 = vmatpush.bf16.msra.mxu0 %v1317
    %1718 = vmatpush.bf16.msra.mxu0 %v1301
    %1719 = vmatpush.bf16.msra.mxu0 %v1285
    %1720 = vmatpush.bf16.msra.mxu0 %v1269
    %1721 = vmatpush.bf16.msra.mxu0 %v1253
    %1722 = vmatpush.bf16.msra.mxu0 %v1237
    %1723 = vmatpush.bf16.msra.mxu0 %v1221
    %1724 = vmatpush.bf16.msra.mxu0 %v1205
    %1725 = vmatmul.bf16.gmra.mxu0 %v143
    %v1726 = vpop.f32.mrf.mxu0
    %v1727 = vadd.f32 %v405, %v1726
    %v1728 = vpop.f32.mrf.mxu0
    %1729 = vdwg.mxu0
    %1730 = vmatpush.bf16.msra.mxu0 %v1445
    %1731 = vmatpush.bf16.msra.mxu0 %v1429
    %1732 = vmatpush.bf16.msra.mxu0 %v1413
    %1733 = vmatpush.bf16.msra.mxu0 %v1397
    %1734 = vmatpush.bf16.msra.mxu0 %v1381
    %1735 = vmatpush.bf16.msra.mxu0 %v1365
    %1736 = vmatpush.bf16.msra.mxu0 %v1349
    %1737 = vmatpush.bf16.msra.mxu0 %v1333
    %1738 = vmatmul.bf16.gmra.mxu0 %v144
    %v1739 = vpop.f32.mrf.mxu0
    %v1740 = vadd.f32 %v1727, %v1739
    %v1741 = vpop.f32.mrf.mxu0
    %1742 = vdwg.mxu0
    %1743 = vmatpush.bf16.msra.mxu0 %v1318
    %1744 = vmatpush.bf16.msra.mxu0 %v1302
    %1745 = vmatpush.bf16.msra.mxu0 %v1286
    %1746 = vmatpush.bf16.msra.mxu0 %v1270
    %1747 = vmatpush.bf16.msra.mxu0 %v1254
    %1748 = vmatpush.bf16.msra.mxu0 %v1238
    %1749 = vmatpush.bf16.msra.mxu0 %v1222
    %1750 = vmatpush.bf16.msra.mxu0 %v1206
    %1751 = vmatmul.bf16.gmra.mxu0 %v143
    %v1752 = vpop.f32.mrf.mxu0
    %v1753 = vadd.f32 %v406, %v1752
    %v1754 = vpop.f32.mrf.mxu0
    %1755 = vdwg.mxu0
    %1756 = vmatpush.bf16.msra.mxu0 %v1446
    %1757 = vmatpush.bf16.msra.mxu0 %v1430
    %1758 = vmatpush.bf16.msra.mxu0 %v1414
    %1759 = vmatpush.bf16.msra.mxu0 %v1398
    %1760 = vmatpush.bf16.msra.mxu0 %v1382
    %1761 = vmatpush.bf16.msra.mxu0 %v1366
    %1762 = vmatpush.bf16.msra.mxu0 %v1350
    %1763 = vmatpush.bf16.msra.mxu0 %v1334
    %1764 = vmatmul.bf16.gmra.mxu0 %v144
    %v1765 = vpop.f32.mrf.mxu0
    %v1766 = vadd.f32 %v1753, %v1765
    %v1767 = vpop.f32.mrf.mxu0
    %1768 = vdwg.mxu0
    %1769 = vmatpush.bf16.msra.mxu0 %v1319
    %1770 = vmatpush.bf16.msra.mxu0 %v1303
    %1771 = vmatpush.bf16.msra.mxu0 %v1287
    %1772 = vmatpush.bf16.msra.mxu0 %v1271
    %1773 = vmatpush.bf16.msra.mxu0 %v1255
    %1774 = vmatpush.bf16.msra.mxu0 %v1239
    %1775 = vmatpush.bf16.msra.mxu0 %v1223
    %1776 = vmatpush.bf16.msra.mxu0 %v1207
    %1777 = vmatmul.bf16.gmra.mxu0 %v143
    %v1778 = vpop.f32.mrf.mxu0
    %v1779 = vadd.f32 %v407, %v1778
    %v1780 = vpop.f32.mrf.mxu0
    %1781 = vdwg.mxu0
    %1782 = vmatpush.bf16.msra.mxu0 %v1447
    %1783 = vmatpush.bf16.msra.mxu0 %v1431
    %1784 = vmatpush.bf16.msra.mxu0 %v1415
    %1785 = vmatpush.bf16.msra.mxu0 %v1399
    %1786 = vmatpush.bf16.msra.mxu0 %v1383
    %1787 = vmatpush.bf16.msra.mxu0 %v1367
    %1788 = vmatpush.bf16.msra.mxu0 %v1351
    %1789 = vmatpush.bf16.msra.mxu0 %v1335
    %1790 = vmatmul.bf16.gmra.mxu0 %v144
    %v1791 = vpop.f32.mrf.mxu0
    %v1792 = vadd.f32 %v1779, %v1791
    %v1793 = vpop.f32.mrf.mxu0
    %1794 = vdwg.mxu0
    %1795 = vmatpush.bf16.msra.mxu0 %v1320
    %1796 = vmatpush.bf16.msra.mxu0 %v1304
    %1797 = vmatpush.bf16.msra.mxu0 %v1288
    %1798 = vmatpush.bf16.msra.mxu0 %v1272
    %1799 = vmatpush.bf16.msra.mxu0 %v1256
    %1800 = vmatpush.bf16.msra.mxu0 %v1240
    %1801 = vmatpush.bf16.msra.mxu0 %v1224
    %1802 = vmatpush.bf16.msra.mxu0 %v1208
    %1803 = vmatmul.bf16.gmra.mxu0 %v143
    %v1804 = vpop.f32.mrf.mxu0
    %v1805 = vadd.f32 %v408, %v1804
    %v1806 = vpop.f32.mrf.mxu0
    %1807 = vdwg.mxu0
    %1808 = vmatpush.bf16.msra.mxu0 %v1448
    %1809 = vmatpush.bf16.msra.mxu0 %v1432
    %1810 = vmatpush.bf16.msra.mxu0 %v1416
    %1811 = vmatpush.bf16.msra.mxu0 %v1400
    %1812 = vmatpush.bf16.msra.mxu0 %v1384
    %1813 = vmatpush.bf16.msra.mxu0 %v1368
    %1814 = vmatpush.bf16.msra.mxu0 %v1352
    %1815 = vmatpush.bf16.msra.mxu0 %v1336
    %1816 = vmatmul.bf16.gmra.mxu0 %v144
    %v1817 = vpop.f32.mrf.mxu0
    %v1818 = vadd.f32 %v1805, %v1817
    %v1819 = vpop.f32.mrf.mxu0
    %1820 = vdwg.mxu0
    %1821 = vmatpush.bf16.msra.mxu0 %v1321
    %1822 = vmatpush.bf16.msra.mxu0 %v1305
    %1823 = vmatpush.bf16.msra.mxu0 %v1289
    %1824 = vmatpush.bf16.msra.mxu0 %v1273
    %1825 = vmatpush.bf16.msra.mxu0 %v1257
    %1826 = vmatpush.bf16.msra.mxu0 %v1241
    %1827 = vmatpush.bf16.msra.mxu0 %v1225
    %1828 = vmatpush.bf16.msra.mxu0 %v1209
    %1829 = vmatmul.bf16.gmra.mxu0 %v143
    %v1830 = vpop.f32.mrf.mxu0
    %v1831 = vadd.f32 %v409, %v1830
    %v1832 = vpop.f32.mrf.mxu0
    %1833 = vdwg.mxu0
    %1834 = vmatpush.bf16.msra.mxu0 %v1449
    %1835 = vmatpush.bf16.msra.mxu0 %v1433
    %1836 = vmatpush.bf16.msra.mxu0 %v1417
    %1837 = vmatpush.bf16.msra.mxu0 %v1401
    %1838 = vmatpush.bf16.msra.mxu0 %v1385
    %1839 = vmatpush.bf16.msra.mxu0 %v1369
    %1840 = vmatpush.bf16.msra.mxu0 %v1353
    %1841 = vmatpush.bf16.msra.mxu0 %v1337
    %1842 = vmatmul.bf16.gmra.mxu0 %v144
    %v1843 = vpop.f32.mrf.mxu0
    %v1844 = vadd.f32 %v1831, %v1843
    %v1845 = vpop.f32.mrf.mxu0
    %1846 = vdwg.mxu0
    %1847 = vmatpush.bf16.msra.mxu0 %v1322
    %1848 = vmatpush.bf16.msra.mxu0 %v1306
    %1849 = vmatpush.bf16.msra.mxu0 %v1290
    %1850 = vmatpush.bf16.msra.mxu0 %v1274
    %1851 = vmatpush.bf16.msra.mxu0 %v1258
    %1852 = vmatpush.bf16.msra.mxu0 %v1242
    %1853 = vmatpush.bf16.msra.mxu0 %v1226
    %1854 = vmatpush.bf16.msra.mxu0 %v1210
    %1855 = vmatmul.bf16.gmra.mxu0 %v143
    %v1856 = vpop.f32.mrf.mxu0
    %v1857 = vadd.f32 %v410, %v1856
    %v1858 = vpop.f32.mrf.mxu0
    %1859 = vdwg.mxu0
    %1860 = vmatpush.bf16.msra.mxu0 %v1450
    %1861 = vmatpush.bf16.msra.mxu0 %v1434
    %1862 = vmatpush.bf16.msra.mxu0 %v1418
    %1863 = vmatpush.bf16.msra.mxu0 %v1402
    %1864 = vmatpush.bf16.msra.mxu0 %v1386
    %1865 = vmatpush.bf16.msra.mxu0 %v1370
    %1866 = vmatpush.bf16.msra.mxu0 %v1354
    %1867 = vmatpush.bf16.msra.mxu0 %v1338
    %1868 = vmatmul.bf16.gmra.mxu0 %v144
    %v1869 = vpop.f32.mrf.mxu0
    %v1870 = vadd.f32 %v1857, %v1869
    %v1871 = vpop.f32.mrf.mxu0
    %1872 = vdwg.mxu0
    %1873 = vmatpush.bf16.msra.mxu0 %v1323
    %1874 = vmatpush.bf16.msra.mxu0 %v1307
    %1875 = vmatpush.bf16.msra.mxu0 %v1291
    %1876 = vmatpush.bf16.msra.mxu0 %v1275
    %1877 = vmatpush.bf16.msra.mxu0 %v1259
    %1878 = vmatpush.bf16.msra.mxu0 %v1243
    %1879 = vmatpush.bf16.msra.mxu0 %v1227
    %1880 = vmatpush.bf16.msra.mxu0 %v1211
    %1881 = vmatmul.bf16.gmra.mxu0 %v143
    %v1882 = vpop.f32.mrf.mxu0
    %v1883 = vadd.f32 %v411, %v1882
    %v1884 = vpop.f32.mrf.mxu0
    %1885 = vdwg.mxu0
    %1886 = vmatpush.bf16.msra.mxu0 %v1451
    %1887 = vmatpush.bf16.msra.mxu0 %v1435
    %1888 = vmatpush.bf16.msra.mxu0 %v1419
    %1889 = vmatpush.bf16.msra.mxu0 %v1403
    %1890 = vmatpush.bf16.msra.mxu0 %v1387
    %1891 = vmatpush.bf16.msra.mxu0 %v1371
    %1892 = vmatpush.bf16.msra.mxu0 %v1355
    %1893 = vmatpush.bf16.msra.mxu0 %v1339
    %1894 = vmatmul.bf16.gmra.mxu0 %v144
    %v1895 = vpop.f32.mrf.mxu0
    %v1896 = vadd.f32 %v1883, %v1895
    %v1897 = vpop.f32.mrf.mxu0
    %1898 = vdwg.mxu0
    %1899 = vmatpush.bf16.msra.mxu0 %v1324
    %1900 = vmatpush.bf16.msra.mxu0 %v1308
    %1901 = vmatpush.bf16.msra.mxu0 %v1292
    %1902 = vmatpush.bf16.msra.mxu0 %v1276
    %1903 = vmatpush.bf16.msra.mxu0 %v1260
    %1904 = vmatpush.bf16.msra.mxu0 %v1244
    %1905 = vmatpush.bf16.msra.mxu0 %v1228
    %1906 = vmatpush.bf16.msra.mxu0 %v1212
    %1907 = vmatmul.bf16.gmra.mxu0 %v143
    %v1908 = vpop.f32.mrf.mxu0
    %v1909 = vadd.f32 %v412, %v1908
    %v1910 = vpop.f32.mrf.mxu0
    %1911 = vdwg.mxu0
    %1912 = vmatpush.bf16.msra.mxu0 %v1452
    %1913 = vmatpush.bf16.msra.mxu0 %v1436
    %1914 = vmatpush.bf16.msra.mxu0 %v1420
    %1915 = vmatpush.bf16.msra.mxu0 %v1404
    %1916 = vmatpush.bf16.msra.mxu0 %v1388
    %1917 = vmatpush.bf16.msra.mxu0 %v1372
    %1918 = vmatpush.bf16.msra.mxu0 %v1356
    %1919 = vmatpush.bf16.msra.mxu0 %v1340
    %1920 = vmatmul.bf16.gmra.mxu0 %v144
    %v1921 = vpop.f32.mrf.mxu0
    %v1922 = vadd.f32 %v1909, %v1921
    %v1923 = vpop.f32.mrf.mxu0
    %1924 = vdwg.mxu0
    %1925 = vmatpush.bf16.msra.mxu0 %v1325
    %1926 = vmatpush.bf16.msra.mxu0 %v1309
    %1927 = vmatpush.bf16.msra.mxu0 %v1293
    %1928 = vmatpush.bf16.msra.mxu0 %v1277
    %1929 = vmatpush.bf16.msra.mxu0 %v1261
    %1930 = vmatpush.bf16.msra.mxu0 %v1245
    %1931 = vmatpush.bf16.msra.mxu0 %v1229
    %1932 = vmatpush.bf16.msra.mxu0 %v1213
    %1933 = vmatmul.bf16.gmra.mxu0 %v143
    %v1934 = vpop.f32.mrf.mxu0
    %v1935 = vadd.f32 %v413, %v1934
    %v1936 = vpop.f32.mrf.mxu0
    %1937 = vdwg.mxu0
    %1938 = vmatpush.bf16.msra.mxu0 %v1453
    %1939 = vmatpush.bf16.msra.mxu0 %v1437
    %1940 = vmatpush.bf16.msra.mxu0 %v1421
    %1941 = vmatpush.bf16.msra.mxu0 %v1405
    %1942 = vmatpush.bf16.msra.mxu0 %v1389
    %1943 = vmatpush.bf16.msra.mxu0 %v1373
    %1944 = vmatpush.bf16.msra.mxu0 %v1357
    %1945 = vmatpush.bf16.msra.mxu0 %v1341
    %1946 = vmatmul.bf16.gmra.mxu0 %v144
    %v1947 = vpop.f32.mrf.mxu0
    %v1948 = vadd.f32 %v1935, %v1947
    %v1949 = vpop.f32.mrf.mxu0
    %1950 = vdwg.mxu0
    %1951 = vmatpush.bf16.msra.mxu0 %v1326
    %1952 = vmatpush.bf16.msra.mxu0 %v1310
    %1953 = vmatpush.bf16.msra.mxu0 %v1294
    %1954 = vmatpush.bf16.msra.mxu0 %v1278
    %1955 = vmatpush.bf16.msra.mxu0 %v1262
    %1956 = vmatpush.bf16.msra.mxu0 %v1246
    %1957 = vmatpush.bf16.msra.mxu0 %v1230
    %1958 = vmatpush.bf16.msra.mxu0 %v1214
    %1959 = vmatmul.bf16.gmra.mxu0 %v143
    %v1960 = vpop.f32.mrf.mxu0
    %v1961 = vadd.f32 %v414, %v1960
    %v1962 = vpop.f32.mrf.mxu0
    %1963 = vdwg.mxu0
    %1964 = vmatpush.bf16.msra.mxu0 %v1454
    %1965 = vmatpush.bf16.msra.mxu0 %v1438
    %1966 = vmatpush.bf16.msra.mxu0 %v1422
    %1967 = vmatpush.bf16.msra.mxu0 %v1406
    %1968 = vmatpush.bf16.msra.mxu0 %v1390
    %1969 = vmatpush.bf16.msra.mxu0 %v1374
    %1970 = vmatpush.bf16.msra.mxu0 %v1358
    %1971 = vmatpush.bf16.msra.mxu0 %v1342
    %1972 = vmatmul.bf16.gmra.mxu0 %v144
    %v1973 = vpop.f32.mrf.mxu0
    %v1974 = vadd.f32 %v1961, %v1973
    %v1975 = vpop.f32.mrf.mxu0
    %1976 = vdwg.mxu0
    %1977 = vmatpush.bf16.msra.mxu0 %v1327
    %1978 = vmatpush.bf16.msra.mxu0 %v1311
    %1979 = vmatpush.bf16.msra.mxu0 %v1295
    %1980 = vmatpush.bf16.msra.mxu0 %v1279
    %1981 = vmatpush.bf16.msra.mxu0 %v1263
    %1982 = vmatpush.bf16.msra.mxu0 %v1247
    %1983 = vmatpush.bf16.msra.mxu0 %v1231
    %1984 = vmatpush.bf16.msra.mxu0 %v1215
    %1985 = vmatmul.bf16.gmra.mxu0 %v143
    %v1986 = vpop.f32.mrf.mxu0
    %v1987 = vadd.f32 %v415, %v1986
    %v1988 = vpop.f32.mrf.mxu0
    %1989 = vdwg.mxu0
    %1990 = vmatpush.bf16.msra.mxu0 %v1455
    %1991 = vmatpush.bf16.msra.mxu0 %v1439
    %1992 = vmatpush.bf16.msra.mxu0 %v1423
    %1993 = vmatpush.bf16.msra.mxu0 %v1407
    %1994 = vmatpush.bf16.msra.mxu0 %v1391
    %1995 = vmatpush.bf16.msra.mxu0 %v1375
    %1996 = vmatpush.bf16.msra.mxu0 %v1359
    %1997 = vmatpush.bf16.msra.mxu0 %v1343
    %1998 = vmatmul.bf16.gmra.mxu0 %v144
    %v1999 = vpop.f32.mrf.mxu0
    %v2000 = vadd.f32 %v1987, %v1999
    %v2001 = vpop.f32.mrf.mxu0
    %2002 = vdwg.mxu0
    %2003 = vmatpush.bf16.msra.mxu0 %v1328
    %2004 = vmatpush.bf16.msra.mxu0 %v1312
    %2005 = vmatpush.bf16.msra.mxu0 %v1296
    %2006 = vmatpush.bf16.msra.mxu0 %v1280
    %2007 = vmatpush.bf16.msra.mxu0 %v1264
    %2008 = vmatpush.bf16.msra.mxu0 %v1248
    %2009 = vmatpush.bf16.msra.mxu0 %v1232
    %2010 = vmatpush.bf16.msra.mxu0 %v1216
    %2011 = vmatmul.bf16.gmra.mxu0 %v143
    %v2012 = vpop.f32.mrf.mxu0
    %v2013 = vadd.f32 %v416, %v2012
    %v2014 = vpop.f32.mrf.mxu0
    %2015 = vdwg.mxu0
    %2016 = vmatpush.bf16.msra.mxu0 %v1456
    %2017 = vmatpush.bf16.msra.mxu0 %v1440
    %2018 = vmatpush.bf16.msra.mxu0 %v1424
    %2019 = vmatpush.bf16.msra.mxu0 %v1408
    %2020 = vmatpush.bf16.msra.mxu0 %v1392
    %2021 = vmatpush.bf16.msra.mxu0 %v1376
    %2022 = vmatpush.bf16.msra.mxu0 %v1360
    %2023 = vmatpush.bf16.msra.mxu0 %v1344
    %2024 = vmatmul.bf16.gmra.mxu0 %v144
    %v2025 = vpop.f32.mrf.mxu0
    %v2026 = vadd.f32 %v2013, %v2025
    %v2027 = vpop.f32.mrf.mxu0
    %2028 = vdwg.mxu0
    %2029 = vmatpush.bf16.msra.mxu0 %v1329
    %2030 = vmatpush.bf16.msra.mxu0 %v1313
    %2031 = vmatpush.bf16.msra.mxu0 %v1297
    %2032 = vmatpush.bf16.msra.mxu0 %v1281
    %2033 = vmatpush.bf16.msra.mxu0 %v1265
    %2034 = vmatpush.bf16.msra.mxu0 %v1249
    %2035 = vmatpush.bf16.msra.mxu0 %v1233
    %2036 = vmatpush.bf16.msra.mxu0 %v1217
    %2037 = vmatmul.bf16.gmra.mxu0 %v143
    %v2038 = vpop.f32.mrf.mxu0
    %v2039 = vadd.f32 %v417, %v2038
    %v2040 = vpop.f32.mrf.mxu0
    %2041 = vdwg.mxu0
    %2042 = vmatpush.bf16.msra.mxu0 %v1457
    %2043 = vmatpush.bf16.msra.mxu0 %v1441
    %2044 = vmatpush.bf16.msra.mxu0 %v1425
    %2045 = vmatpush.bf16.msra.mxu0 %v1409
    %2046 = vmatpush.bf16.msra.mxu0 %v1393
    %2047 = vmatpush.bf16.msra.mxu0 %v1377
    %2048 = vmatpush.bf16.msra.mxu0 %v1361
    %2049 = vmatpush.bf16.msra.mxu0 %v1345
    %2050 = vmatmul.bf16.gmra.mxu0 %v144
    %v2051 = vpop.f32.mrf.mxu0
    %v2052 = vadd.f32 %v2039, %v2051
    %v2053 = vpop.f32.mrf.mxu0
    %2054 = vdwg.mxu0
    %2055 = vmatpush.bf16.msra.mxu0 %v1330
    %2056 = vmatpush.bf16.msra.mxu0 %v1314
    %2057 = vmatpush.bf16.msra.mxu0 %v1298
    %2058 = vmatpush.bf16.msra.mxu0 %v1282
    %2059 = vmatpush.bf16.msra.mxu0 %v1266
    %2060 = vmatpush.bf16.msra.mxu0 %v1250
    %2061 = vmatpush.bf16.msra.mxu0 %v1234
    %2062 = vmatpush.bf16.msra.mxu0 %v1218
    %2063 = vmatmul.bf16.gmra.mxu0 %v143
    %v2064 = vpop.f32.mrf.mxu0
    %v2065 = vadd.f32 %v418, %v2064
    %v2066 = vpop.f32.mrf.mxu0
    %2067 = vdwg.mxu0
    %2068 = vmatpush.bf16.msra.mxu0 %v1458
    %2069 = vmatpush.bf16.msra.mxu0 %v1442
    %2070 = vmatpush.bf16.msra.mxu0 %v1426
    %2071 = vmatpush.bf16.msra.mxu0 %v1410
    %2072 = vmatpush.bf16.msra.mxu0 %v1394
    %2073 = vmatpush.bf16.msra.mxu0 %v1378
    %2074 = vmatpush.bf16.msra.mxu0 %v1362
    %2075 = vmatpush.bf16.msra.mxu0 %v1346
    %2076 = vmatmul.bf16.gmra.mxu0 %v144
    %v2077 = vpop.f32.mrf.mxu0
    %v2078 = vadd.f32 %v2065, %v2077
    %v2079 = vpop.f32.mrf.mxu0
    %2080 = vdwg.mxu0
    %2081 = vmatpush.bf16.msra.mxu0 %v1331
    %2082 = vmatpush.bf16.msra.mxu0 %v1315
    %2083 = vmatpush.bf16.msra.mxu0 %v1299
    %2084 = vmatpush.bf16.msra.mxu0 %v1283
    %2085 = vmatpush.bf16.msra.mxu0 %v1267
    %2086 = vmatpush.bf16.msra.mxu0 %v1251
    %2087 = vmatpush.bf16.msra.mxu0 %v1235
    %2088 = vmatpush.bf16.msra.mxu0 %v1219
    %2089 = vmatmul.bf16.gmra.mxu0 %v143
    %v2090 = vpop.f32.mrf.mxu0
    %v2091 = vadd.f32 %v419, %v2090
    %v2092 = vpop.f32.mrf.mxu0
    %2093 = vdwg.mxu0
    %2094 = vmatpush.bf16.msra.mxu0 %v1459
    %2095 = vmatpush.bf16.msra.mxu0 %v1443
    %2096 = vmatpush.bf16.msra.mxu0 %v1427
    %2097 = vmatpush.bf16.msra.mxu0 %v1411
    %2098 = vmatpush.bf16.msra.mxu0 %v1395
    %2099 = vmatpush.bf16.msra.mxu0 %v1379
    %2100 = vmatpush.bf16.msra.mxu0 %v1363
    %2101 = vmatpush.bf16.msra.mxu0 %v1347
    %2102 = vmatmul.bf16.gmra.mxu0 %v144
    %v2103 = vpop.f32.mrf.mxu0
    %v2104 = vadd.f32 %v2091, %v2103
    %v2105 = vpop.f32.mrf.mxu0
    %2106 = vdwg.mxu0
    %2107 = vmatpush.bf16.msra.mxu0 %v1332
    %2108 = vmatpush.bf16.msra.mxu0 %v1316
    %2109 = vmatpush.bf16.msra.mxu0 %v1300
    %2110 = vmatpush.bf16.msra.mxu0 %v1284
    %2111 = vmatpush.bf16.msra.mxu0 %v1268
    %2112 = vmatpush.bf16.msra.mxu0 %v1252
    %2113 = vmatpush.bf16.msra.mxu0 %v1236
    %2114 = vmatpush.bf16.msra.mxu0 %v1220
    %2115 = vmatmul.bf16.gmra.mxu0 %v143
    %v2116 = vpop.f32.mrf.mxu0
    %v2117 = vadd.f32 %v420, %v2116
    %v2118 = vpop.f32.mrf.mxu0
    %2119 = vdwg.mxu0
    %2120 = vmatpush.bf16.msra.mxu0 %v1460
    %2121 = vmatpush.bf16.msra.mxu0 %v1444
    %2122 = vmatpush.bf16.msra.mxu0 %v1428
    %2123 = vmatpush.bf16.msra.mxu0 %v1412
    %2124 = vmatpush.bf16.msra.mxu0 %v1396
    %2125 = vmatpush.bf16.msra.mxu0 %v1380
    %2126 = vmatpush.bf16.msra.mxu0 %v1364
    %2127 = vmatpush.bf16.msra.mxu0 %v1348
    %2128 = vmatmul.bf16.gmra.mxu0 %v144
    %v2129 = vpop.f32.mrf.mxu0
    %v2130 = vadd.f32 %v2117, %v2129
    %v2131 = vpop.f32.mrf.mxu0
    %2132 = vdwg.mxu0
    %v2133 = vmax.f32 %v1740, 0.0
    %v2134 = vmax.f32 %v1766, 0.0
    %v2135 = vmax.f32 %v1792, 0.0
    %v2136 = vmax.f32 %v1818, 0.0
    %v2137 = vmax.f32 %v1844, 0.0
    %v2138 = vmax.f32 %v1870, 0.0
    %v2139 = vmax.f32 %v1896, 0.0
    %v2140 = vmax.f32 %v1922, 0.0
    %v2141 = vmax.f32 %v1948, 0.0
    %v2142 = vmax.f32 %v1974, 0.0
    %v2143 = vmax.f32 %v2000, 0.0
    %v2144 = vmax.f32 %v2026, 0.0
    %v2145 = vmax.f32 %v2052, 0.0
    %v2146 = vmax.f32 %v2078, 0.0
    %v2147 = vmax.f32 %v2104, 0.0
    %v2148 = vmax.f32 %v2130, 0.0
    %v2165 = vrot.slane %v2134, 6
    %v2166 = vrot.slane %v2135, 4
    %v2167 = vrot.slane %v2136, 2
    %v2168 = vrot.slane %v2138, 6
    %v2169 = vrot.slane %v2139, 4
    %v2170 = vrot.slane %v2140, 2
    %v2171 = vrot.slane %v2142, 6
    %v2172 = vrot.slane %v2143, 4
    %v2173 = vrot.slane %v2144, 2
    %v2174 = vrot.slane %v2146, 6
    %v2175 = vrot.slane %v2147, 4
    %v2176 = vrot.slane %v2148, 2
    %vm2177 = vcmask 1041408
    %v2178 = vsel %vm2177, %v2133, %v2165
    %vm2179 = vcmask 1045508
    %v2180 = vsel %vm2179, %v2166, %v2167
    %vm2181 = vcmask 1043456
    %v2182 = vsel %vm2181, %v2178, %v2180
    %v2183 = vsel %vm2177, %v2137, %v2168
    %v2184 = vsel %vm2179, %v2169, %v2170
    %v2185 = vsel %vm2181, %v2183, %v2184
    %v2186 = vsel %vm2177, %v2141, %v2171
    %v2187 = vsel %vm2179, %v2172, %v2173
    %v2188 = vsel %vm2181, %v2186, %v2187
    %v2189 = vsel %vm2177, %v2145, %v2174
    %v2190 = vsel %vm2179, %v2175, %v2176
    %v2191 = vsel %vm2181, %v2189, %v2190
    %2196 = vst [vmem:[%s5] sm:$0xff] %v2182
    %2197 = vst [vmem:[%s5 + $0x8] sm:$0xff] %v2185
    %2198 = vst [vmem:[%s5 + $0x10] sm:$0xff] %v2188
    %2199 = vst [vmem:[%s5 + $0x18] sm:$0xff] %v2191
    // Predicated region
    $region38: #{_lambda_.5} parent=1 // pred_check
      _
    $region39: #{_lambda_.5} parent=1 // pred_check_branch
      %2201 = sbr.rel (0) target = $region41
    $region40: #{_lambda_.5} parent=1 // pred_region
      _
    $region41: #{_lambda_.5} parent=1 // pred_fallthru
      _
    // Predicated region
    $region42: #{_lambda_.5} parent=1 // pred_check
      _
    $region43: #{_lambda_.5} parent=1 // pred_check_branch
      %2203 = sbr.rel (0) target = $region45
    $region44: #{_lambda_.5} parent=1 // pred_region
      _
    $region45: #{_lambda_.5} parent=1 // pred_fallthru
      _
    %2204 = vsyncpa [#allocation3], 1
    %2205 = vsyncpa [#allocation5], 1
    %2206 = vsyncpa [#allocation8], 1

// kernel: _lambda_.7
$region0: #{_lambda_.7}
  #allocation0 [shape = 'u32[]', space=smem, size = 0x4, offset = 0x4, fixed_abs, tag = 'smem constant byte address 0x4 - core index']
  #allocation1 [shape = 'u32[72,128]{1,0:T(1,128)}', space=vmem, size = 0x9000, scoped, tag = 'internal scratch']
  %s0 = inlined_call_operand.vmem [shape: bf16[128,64], index: 0, kind: input, shape index: {}]
  %s1 = inlined_call_operand.vmem [shape: bf16[64,512], index: 1, kind: input, shape index: {}]
  %s2 = inlined_call_operand.vmem [shape: f32[128,512], index: 2, kind: output, shape index: {}]
  %s3 = sld [smem:[#allocation0]]
  $region41: #{_lambda_.7} parent=0
    _
  %s5 = ssub.s32 1, %s3
  %s6 = scalar_select 0, %s5, %s3
  loop: start=0, step=1, limit=4
  $region2: #{_lambda_.7} parent=0 // loop_pre_header
    _
  $region3: #{_lambda_.7} parent=0 // loop_header
    %s8 = sphi 0, %s12
    %p9 = scmp.ge.s32.totalorder %s8, 4
    %s18 = sphi 0, %s20
    %s21 = sphi 0, %s18
    %s22 = sphi 0, %s21
    %s38 = sphi 0, %s22
    %s42 = sphi 0, %s42
    %s44 = sphi 0, %s42
    %s45 = sphi 0, %s44
    %s59 = sphi 0, %s45
    %s65 = sphi 0, %s67
    %s68 = sphi 0, %s65
    %s69 = sphi 0, %s68
    %s85 = sphi 0, %s69
  $region4: #{_lambda_.7} parent=0 // loop_header_branch
    %11 = sbr.rel (%p9) target = $region8
  $region5: #{_lambda_.7} parent=0 // loop_body
    %s13 = ssub.s32 %s8, 1
    %s14 = ssub.s32 %s8, 2
    %s15 = sadd.s32 %s8, 1
    %s16 = ssub.s32 %s8, %s15
    %p17 = scmp.eq.s32.totalorder %s16, 0
    %s19 = sadd.s32 %s18, 1
    %s20 = scalar_select %p17, %s18, %s19
    %p23 = pneg %p17
    %p24 = scmp.eq.s32.totalorder %s8, 1
    %p25 = por %p23, %p24
    %p26 = scmp.ne.s32.totalorder %s18, %s21
    %p27 = scmp.eq.s32.totalorder %s8, 0
    %p28 = por %p26, %p27
    %p29 = scmp.ne.s32.totalorder %s18, %s21
    %p30 = scmp.eq.s32.totalorder %s13, 1
    %p31 = por %p29, %p30
    %p32 = scmp.ne.s32.totalorder %s21, %s22
    %p33 = scmp.eq.s32.totalorder %s13, 0
    %p34 = por %p32, %p33
    %p35 = scmp.ne.s32.totalorder %s21, %s22
    %p36 = scmp.eq.s32.totalorder %s14, 1
    %p37 = por %p35, %p36
    %p39 = scmp.ne.s32.totalorder %s22, %s38
    %p40 = scmp.eq.s32.totalorder %s14, 0
    %p41 = por %p39, %p40
    %s43 = sadd.s32 %s42, 1
    %p46 = scmp.eq.s32.totalorder %s8, 1
    %p47 = scmp.ne.s32.totalorder %s42, %s44
    %p48 = scmp.eq.s32.totalorder %s8, 0
    %p49 = por %p47, %p48
    %p50 = scmp.ne.s32.totalorder %s42, %s44
    %p51 = scmp.eq.s32.totalorder %s13, 1
    %p52 = por %p50, %p51
    %p53 = scmp.ne.s32.totalorder %s44, %s45
    %p54 = scmp.eq.s32.totalorder %s13, 0
    %p55 = por %p53, %p54
    %p56 = scmp.ne.s32.totalorder %s44, %s45
    %p57 = scmp.eq.s32.totalorder %s14, 1
    %p58 = por %p56, %p57
    %p60 = scmp.ne.s32.totalorder %s45, %s59
    %p61 = scmp.eq.s32.totalorder %s14, 0
    %p62 = por %p60, %p61
    %s63 = ssub.s32 %s8, %s15
    %p64 = scmp.eq.s32.totalorder %s63, 0
    %s66 = sadd.s32 %s65, 1
    %s67 = scalar_select %p64, %s65, %s66
    %p70 = pneg %p64
    %p71 = scmp.eq.s32.totalorder %s8, 1
    %p72 = por %p70, %p71
    %p73 = scmp.ne.s32.totalorder %s65, %s68
    %p74 = scmp.eq.s32.totalorder %s8, 0
    %p75 = por %p73, %p74
    %p76 = scmp.ne.s32.totalorder %s65, %s68
    %p77 = scmp.eq.s32.totalorder %s13, 1
    %p78 = por %p76, %p77
    %p79 = scmp.ne.s32.totalorder %s68, %s69
    %p80 = scmp.eq.s32.totalorder %s13, 0
    %p81 = por %p79, %p80
    %p82 = scmp.ne.s32.totalorder %s68, %s69
    %p83 = scmp.eq.s32.totalorder %s14, 1
    %p84 = por %p82, %p83
    %p86 = scmp.ne.s32.totalorder %s69, %s85
    %p87 = scmp.eq.s32.totalorder %s14, 0
    %p88 = por %p86, %p87
    %p89 = scmp.le.s32.totalorder 1, %s8
    %p90 = scmp.lt.s32.totalorder %s8, 3
    %p91 = pnand %p89, %p90
    %p92 = pneg %p91
    // Predicated region
    $region9: #{_lambda_.7} parent=5 // pred_check
      _
    $region10: #{_lambda_.7} parent=5 // pred_check_branch
      %94 = sbr.rel (%p91) target = $region12
    $region11: #{_lambda_.7} parent=5 // pred_region
      %s95 = ssub.s32 %s8, 1
      // Predicated region
      $region13: #{_lambda_.7} parent=11 // pred_check
        %p96 = pneg %p55
      $region14: #{_lambda_.7} parent=11 // pred_check_branch
        %98 = sbr.rel (%p96) target = $region16
      $region15: #{_lambda_.7} parent=11 // pred_region
        _
      $region16: #{_lambda_.7} parent=11 // pred_fallthru
        _
    $region12: #{_lambda_.7} parent=5 // pred_fallthru
      _
    %p99 = scmp.lt.s32.totalorder %s8, 2
    // Predicated region
    $region17: #{_lambda_.7} parent=5 // pred_check
      %p100 = pneg %p99
    $region18: #{_lambda_.7} parent=5 // pred_check_branch
      %102 = sbr.rel (%p100) target = $region20
    $region19: #{_lambda_.7} parent=5 // pred_region
      // Predicated region
      $region21: #{_lambda_.7} parent=19 // pred_check
        %p103 = pneg %p28
      $region22: #{_lambda_.7} parent=19 // pred_check_branch
        %105 = sbr.rel (%p103) target = $region24
      $region23: #{_lambda_.7} parent=19 // pred_region
        %s106 = smul.u32 8, %s8
        %p107 = scmp.lt.s32.totalorder %s106, 15
        %s108 = scalar_select %p107, %s106, 15
        %s109 = smul.addr %s108, 4
        %s110 = scalar_lea.vmem %s0, %s109
        %s111 = smul.u32 8, %s8
      $region24: #{_lambda_.7} parent=19 // pred_fallthru
        _
    $region20: #{_lambda_.7} parent=5 // pred_fallthru
      _
    %p112 = scmp.le.s32.totalorder 1, %s8
    %p113 = scmp.lt.s32.totalorder %s8, 3
    %p114 = pnand %p112, %p113
    %p115 = pneg %p114
    // Predicated region
    $region25: #{_lambda_.7} parent=5 // pred_check
      _
    $region26: #{_lambda_.7} parent=5 // pred_check_branch
      %117 = sbr.rel (%p114) target = $region28
    $region27: #{_lambda_.7} parent=5 // pred_region
      %s118 = ssub.s32 %s8, 1
      %s119 = smul.u32 8, %s13
      %p120 = scmp.lt.s32.totalorder %s119, 15
      %s121 = scalar_select %p120, %s119, 15
      %s122 = smul.addr %s121, 4
      %s123 = scalar_lea.vmem %s0, %s122
      %p124 = pneg %p34
      %p125 = pneg %p31
      %p126 = pneg %p55
      %p127 = pneg %p52
      %p128 = pneg %p81
      %p129 = pneg %p78
      %s130 = smul.u32 8, %s13
      %p131 = scmp.lt.s32.totalorder %s130, 15
      %s132 = scalar_select %p131, %s130, 15
      %s133 = smul.addr %s132, 4
      %s134 = smul.addr %s133, 8
      %s135 = scalar_lea.vmem %s2, %s134
      %s136 = smul.u32 8, %s13
      %p137 = scmp.lt.s32.totalorder %s136, 15
      %s138 = scalar_select %p137, %s136, 15
      %s139 = smul.addr %s138, 4
      %s140 = scalar_lea.vmem %s0, %s139
      %s141 = smul.u32 8, %s13
      %s142 = smul.u32 8, %s13
      %p143 = scmp.lt.s32.totalorder %s142, 15
      %s144 = scalar_select %p143, %s142, 15
      %s145 = smul.addr %s144, 4
      %s146 = smul.addr %s145, 8
      %s147 = scalar_lea.vmem %s2, %s146
      %s148 = smul.u32 8, %s13
      %v150 = vld [vmem:[%s140] sm:$0xf]
      %v151 = vld [vmem:[%s140 + $0x4] sm:$0xf]
      %v152 = vld [vmem:[%s140 + $0x8] sm:$0xf]
      %v153 = vld [vmem:[%s140 + $0xc] sm:$0xf]
      %v154 = vld [vmem:[%s140 + $0x10] sm:$0xf]
      %v155 = vld [vmem:[%s140 + $0x14] sm:$0xf]
      %v156 = vld [vmem:[%s140 + $0x18] sm:$0xf]
      %v157 = vld [vmem:[%s140 + $0x1c] sm:$0xf]
      %v158 = vld [vmem:[%s1] sm:$0xff]
      %v159 = vld [vmem:[%s1 + $0x8] sm:$0xff]
      %v160 = vld [vmem:[%s1 + $0x10] sm:$0xff]
      %v161 = vld [vmem:[%s1 + $0x18] sm:$0xff]
      %v162 = vld [vmem:[%s1 + $0x20] sm:$0xff]
      %v163 = vld [vmem:[%s1 + $0x28] sm:$0xff]
      %v164 = vld [vmem:[%s1 + $0x30] sm:$0xff]
      %v165 = vld [vmem:[%s1 + $0x38] sm:$0xff]
      %v166 = vld [vmem:[%s1 + $0x40] sm:$0xff]
      %v167 = vld [vmem:[%s1 + $0x48] sm:$0xff]
      %v168 = vld [vmem:[%s1 + $0x50] sm:$0xff]
      %v169 = vld [vmem:[%s1 + $0x58] sm:$0xff]
      %v170 = vld [vmem:[%s1 + $0x60] sm:$0xff]
      %v171 = vld [vmem:[%s1 + $0x68] sm:$0xff]
      %v172 = vld [vmem:[%s1 + $0x70] sm:$0xff]
      %v173 = vld [vmem:[%s1 + $0x78] sm:$0xff]
      %v182 = vunpack.c.l.b16 %v150
      %v183 = vunpack.c.l.b16 %v151
      %v184 = vunpack.c.l.b16 %v152
      %v185 = vunpack.c.l.b16 %v153
      %v186 = vunpack.c.l.b16 %v154
      %v187 = vunpack.c.l.b16 %v155
      %v188 = vunpack.c.l.b16 %v156
      %v189 = vunpack.c.l.b16 %v157
      %v190 = vpack.c.b16 %v183, %v182
      %v191 = vpack.c.b16 %v185, %v184
      %v192 = vpack.c.b16 %v187, %v186
      %v193 = vpack.c.b16 %v189, %v188
      %v210 = vunpack.c.l.b16 %v158
      %v211 = vunpack.c.h.b16 %v158
      %v212 = vunpack.c.l.b16 %v159
      %v213 = vunpack.c.h.b16 %v159
      %v214 = vunpack.c.l.b16 %v160
      %v215 = vunpack.c.h.b16 %v160
      %v216 = vunpack.c.l.b16 %v161
      %v217 = vunpack.c.h.b16 %v161
      %v218 = vunpack.c.l.b16 %v162
      %v219 = vunpack.c.h.b16 %v162
      %v220 = vunpack.c.l.b16 %v163
      %v221 = vunpack.c.h.b16 %v163
      %v222 = vunpack.c.l.b16 %v164
      %v223 = vunpack.c.h.b16 %v164
      %v224 = vunpack.c.l.b16 %v165
      %v225 = vunpack.c.h.b16 %v165
      %v226 = vunpack.c.l.b16 %v166
      %v227 = vunpack.c.h.b16 %v166
      %v228 = vunpack.c.l.b16 %v167
      %v229 = vunpack.c.h.b16 %v167
      %v230 = vunpack.c.l.b16 %v168
      %v231 = vunpack.c.h.b16 %v168
      %v232 = vunpack.c.l.b16 %v169
      %v233 = vunpack.c.h.b16 %v169
      %v234 = vunpack.c.l.b16 %v170
      %v235 = vunpack.c.h.b16 %v170
      %v236 = vunpack.c.l.b16 %v171
      %v237 = vunpack.c.h.b16 %v171
      %v238 = vunpack.c.l.b16 %v172
      %v239 = vunpack.c.h.b16 %v172
      %v240 = vunpack.c.l.b16 %v173
      %v241 = vunpack.c.h.b16 %v173
      %v242 = vpack.c.b16 %v214, %v210
      %v243 = vpack.c.b16 %v215, %v211
      %v244 = vpack.c.b16 %v216, %v212
      %v245 = vpack.c.b16 %v217, %v213
      %v246 = vpack.c.b16 %v222, %v218
      %v247 = vpack.c.b16 %v223, %v219
      %v248 = vpack.c.b16 %v224, %v220
      %v249 = vpack.c.b16 %v225, %v221
      %v250 = vpack.c.b16 %v230, %v226
      %v251 = vpack.c.b16 %v231, %v227
      %v252 = vpack.c.b16 %v232, %v228
      %v253 = vpack.c.b16 %v233, %v229
      %v254 = vpack.c.b16 %v238, %v234
      %v255 = vpack.c.b16 %v239, %v235
      %v256 = vpack.c.b16 %v240, %v236
      %v257 = vpack.c.b16 %v241, %v237
      %vm274 = vcmask 523264
      %v276 = vsel %vm274, %v190, 0
      %v279 = vsel %vm274, %v191, 0
      %v282 = vsel %vm274, %v192, 0
      %v285 = vsel %vm274, %v193, 0
      %287 = vmatpush.bf16.msra.mxu0 0
      %288 = vmatpush.bf16.msra.mxu0 0
      %289 = vmatpush.bf16.msra.mxu0 0
      %290 = vmatpush.bf16.msra.mxu0 0
      %291 = vmatpush.bf16.msra.mxu0 %v254
      %292 = vmatpush.bf16.msra.mxu0 %v250
      %293 = vmatpush.bf16.msra.mxu0 %v246
      %294 = vmatpush.bf16.msra.mxu0 %v242
      %295 = vmatmul.bf16.gmra.mxu0 %v276
      %v296 = vpop.f32.mrf.mxu0
      %v297 = vadd.f32 0.0, %v296
      %v298 = vpop.f32.mrf.mxu0
      %v299 = vadd.f32 0.0, %v298
      %300 = vmatmul.bf16.gmra.mxu0 %v279
      %v301 = vpop.f32.mrf.mxu0
      %v302 = vadd.f32 0.0, %v301
      %v303 = vpop.f32.mrf.mxu0
      %v304 = vadd.f32 0.0, %v303
      %305 = vmatmul.bf16.gmra.mxu0 %v282
      %v306 = vpop.f32.mrf.mxu0
      %v307 = vadd.f32 0.0, %v306
      %v308 = vpop.f32.mrf.mxu0
      %v309 = vadd.f32 0.0, %v308
      %310 = vmatmul.bf16.gmra.mxu0 %v285
      %v311 = vpop.f32.mrf.mxu0
      %v312 = vadd.f32 0.0, %v311
      %v313 = vpop.f32.mrf.mxu0
      %v314 = vadd.f32 0.0, %v313
      %315 = vdwg.mxu0
      %316 = vmatpush.bf16.msra.mxu0 0
      %317 = vmatpush.bf16.msra.mxu0 0
      %318 = vmatpush.bf16.msra.mxu0 0
      %319 = vmatpush.bf16.msra.mxu0 0
      %320 = vmatpush.bf16.msra.mxu0 %v255
      %321 = vmatpush.bf16.msra.mxu0 %v251
      %322 = vmatpush.bf16.msra.mxu0 %v247
      %323 = vmatpush.bf16.msra.mxu0 %v243
      %324 = vmatmul.bf16.gmra.mxu0 %v276
      %v325 = vpop.f32.mrf.mxu0
      %v326 = vadd.f32 0.0, %v325
      %v327 = vpop.f32.mrf.mxu0
      %v328 = vadd.f32 0.0, %v327
      %329 = vmatmul.bf16.gmra.mxu0 %v279
      %v330 = vpop.f32.mrf.mxu0
      %v331 = vadd.f32 0.0, %v330
      %v332 = vpop.f32.mrf.mxu0
      %v333 = vadd.f32 0.0, %v332
      %334 = vmatmul.bf16.gmra.mxu0 %v282
      %v335 = vpop.f32.mrf.mxu0
      %v336 = vadd.f32 0.0, %v335
      %v337 = vpop.f32.mrf.mxu0
      %v338 = vadd.f32 0.0, %v337
      %339 = vmatmul.bf16.gmra.mxu0 %v285
      %v340 = vpop.f32.mrf.mxu0
      %v341 = vadd.f32 0.0, %v340
      %v342 = vpop.f32.mrf.mxu0
      %v343 = vadd.f32 0.0, %v342
      %344 = vdwg.mxu0
      %345 = vmatpush.bf16.msra.mxu0 0
      %346 = vmatpush.bf16.msra.mxu0 0
      %347 = vmatpush.bf16.msra.mxu0 0
      %348 = vmatpush.bf16.msra.mxu0 0
      %349 = vmatpush.bf16.msra.mxu0 %v256
      %350 = vmatpush.bf16.msra.mxu0 %v252
      %351 = vmatpush.bf16.msra.mxu0 %v248
      %352 = vmatpush.bf16.msra.mxu0 %v244
      %353 = vmatmul.bf16.gmra.mxu0 %v276
      %v354 = vpop.f32.mrf.mxu0
      %v355 = vadd.f32 0.0, %v354
      %v356 = vpop.f32.mrf.mxu0
      %v357 = vadd.f32 0.0, %v356
      %358 = vmatmul.bf16.gmra.mxu0 %v279
      %v359 = vpop.f32.mrf.mxu0
      %v360 = vadd.f32 0.0, %v359
      %v361 = vpop.f32.mrf.mxu0
      %v362 = vadd.f32 0.0, %v361
      %363 = vmatmul.bf16.gmra.mxu0 %v282
      %v364 = vpop.f32.mrf.mxu0
      %v365 = vadd.f32 0.0, %v364
      %v366 = vpop.f32.mrf.mxu0
      %v367 = vadd.f32 0.0, %v366
      %368 = vmatmul.bf16.gmra.mxu0 %v285
      %v369 = vpop.f32.mrf.mxu0
      %v370 = vadd.f32 0.0, %v369
      %v371 = vpop.f32.mrf.mxu0
      %v372 = vadd.f32 0.0, %v371
      %373 = vdwg.mxu0
      %374 = vmatpush.bf16.msra.mxu0 0
      %375 = vmatpush.bf16.msra.mxu0 0
      %376 = vmatpush.bf16.msra.mxu0 0
      %377 = vmatpush.bf16.msra.mxu0 0
      %378 = vmatpush.bf16.msra.mxu0 %v257
      %379 = vmatpush.bf16.msra.mxu0 %v253
      %380 = vmatpush.bf16.msra.mxu0 %v249
      %381 = vmatpush.bf16.msra.mxu0 %v245
      %382 = vmatmul.bf16.gmra.mxu0 %v276
      %v383 = vpop.f32.mrf.mxu0
      %v384 = vadd.f32 0.0, %v383
      %v385 = vpop.f32.mrf.mxu0
      %v386 = vadd.f32 0.0, %v385
      %387 = vmatmul.bf16.gmra.mxu0 %v279
      %v388 = vpop.f32.mrf.mxu0
      %v389 = vadd.f32 0.0, %v388
      %v390 = vpop.f32.mrf.mxu0
      %v391 = vadd.f32 0.0, %v390
      %392 = vmatmul.bf16.gmra.mxu0 %v282
      %v393 = vpop.f32.mrf.mxu0
      %v394 = vadd.f32 0.0, %v393
      %v395 = vpop.f32.mrf.mxu0
      %v396 = vadd.f32 0.0, %v395
      %397 = vmatmul.bf16.gmra.mxu0 %v285
      %v398 = vpop.f32.mrf.mxu0
      %v399 = vadd.f32 0.0, %v398
      %v400 = vpop.f32.mrf.mxu0
      %v401 = vadd.f32 0.0, %v400
      %402 = vdwg.mxu0
      %403 = vst [vmem:[%s147] sm:$0xff] %v297
      %404 = vst [vmem:[%s147 + $0x8] sm:$0xff] %v326
      %405 = vst [vmem:[%s147 + $0x10] sm:$0xff] %v355
      %406 = vst [vmem:[%s147 + $0x18] sm:$0xff] %v384
      %407 = vst [vmem:[%s147 + $0x20] sm:$0xff] %v299
      %408 = vst [vmem:[%s147 + $0x28] sm:$0xff] %v328
      %409 = vst [vmem:[%s147 + $0x30] sm:$0xff] %v357
      %410 = vst [vmem:[%s147 + $0x38] sm:$0xff] %v386
      %411 = vst [vmem:[%s147 + $0x40] sm:$0xff] %v302
      %412 = vst [vmem:[%s147 + $0x48] sm:$0xff] %v331
      %413 = vst [vmem:[%s147 + $0x50] sm:$0xff] %v360
      %414 = vst [vmem:[%s147 + $0x58] sm:$0xff] %v389
      %415 = vst [vmem:[%s147 + $0x60] sm:$0xff] %v304
      %416 = vst [vmem:[%s147 + $0x68] sm:$0xff] %v333
      %417 = vst [vmem:[%s147 + $0x70] sm:$0xff] %v362
      %418 = vst [vmem:[%s147 + $0x78] sm:$0xff] %v391
      %419 = vst [vmem:[%s147 + $0x80] sm:$0xff] %v307
      %420 = vst [vmem:[%s147 + $0x88] sm:$0xff] %v336
      %421 = vst [vmem:[%s147 + $0x90] sm:$0xff] %v365
      %422 = vst [vmem:[%s147 + $0x98] sm:$0xff] %v394
      %423 = vst [vmem:[%s147 + $0xa0] sm:$0xff] %v309
      %424 = vst [vmem:[%s147 + $0xa8] sm:$0xff] %v338
      %425 = vst [vmem:[%s147 + $0xb0] sm:$0xff] %v367
      %426 = vst [vmem:[%s147 + $0xb8] sm:$0xff] %v396
      %427 = vst [vmem:[%s147 + $0xc0] sm:$0xff] %v312
      %428 = vst [vmem:[%s147 + $0xc8] sm:$0xff] %v341
      %429 = vst [vmem:[%s147 + $0xd0] sm:$0xff] %v370
      %430 = vst [vmem:[%s147 + $0xd8] sm:$0xff] %v399
      %431 = vst [vmem:[%s147 + $0xe0] sm:$0xff] %v314
      %432 = vst [vmem:[%s147 + $0xe8] sm:$0xff] %v343
      %433 = vst [vmem:[%s147 + $0xf0] sm:$0xff] %v372
      %434 = vst [vmem:[%s147 + $0xf8] sm:$0xff] %v401
      %s435 = smul.u32 8, %s13
      %p436 = scmp.lt.s32.totalorder %s435, 15
      %s437 = scalar_select %p436, %s435, 15
      %s438 = smul.addr %s437, 4
      %s439 = smul.addr %s438, 8
      %s440 = scalar_lea.vmem %s2, %s439
      // Predicated region
      $region29: #{_lambda_.7} parent=27 // pred_check
        %p441 = pneg %p78
      $region30: #{_lambda_.7} parent=27 // pred_check_branch
        %443 = sbr.rel (%p441) target = $region32
      $region31: #{_lambda_.7} parent=27 // pred_region
        %s444 = smul.u32 8, %s13
      $region32: #{_lambda_.7} parent=27 // pred_fallthru
        _
    $region28: #{_lambda_.7} parent=5 // pred_fallthru
      _
    %p445 = scmp.le.s32.totalorder 2, %s8
    // Predicated region
    $region33: #{_lambda_.7} parent=5 // pred_check
      %p446 = pneg %p445
    $region34: #{_lambda_.7} parent=5 // pred_check_branch
      %448 = sbr.rel (%p446) target = $region36
    $region35: #{_lambda_.7} parent=5 // pred_region
      %s449 = ssub.s32 %s8, 2
      // Predicated region
      $region37: #{_lambda_.7} parent=35 // pred_check
        %p450 = pneg %p84
      $region38: #{_lambda_.7} parent=35 // pred_check_branch
        %452 = sbr.rel (%p450) target = $region40
      $region39: #{_lambda_.7} parent=35 // pred_region
        %s453 = smul.u32 8, %s14
        %p454 = scmp.lt.s32.totalorder %s453, 15
        %s455 = scalar_select %p454, %s453, 15
        %s456 = smul.addr %s455, 4
        %s457 = smul.addr %s456, 8
        %s458 = scalar_lea.vmem %s2, %s457
      $region40: #{_lambda_.7} parent=35 // pred_fallthru
        _
    $region36: #{_lambda_.7} parent=5 // pred_fallthru
      _
  $region6: #{_lambda_.7} parent=0 // loop_footer
    %s12 = sadd.s32 1, %s8
  $region7: #{_lambda_.7} parent=0 // loop_footer_branch
    %7 = sbr.rel target = $region3
  $region8: #{_lambda_.7} parent=0 // loop_exit
    _

// kernel: _lambda_.8
$region0: #{_lambda_.8}
  #allocation0 [shape = 'u32[]', space=smem, size = 0x4, offset = 0x4, fixed_abs, tag = 'smem constant byte address 0x4 - core index']
  #allocation1 [shape = 'u32[72,128]{1,0:T(1,128)}', space=vmem, size = 0x9000, scoped, tag = 'internal scratch']
  %s0 = inlined_call_operand.vmem [shape: bf16[512,32], index: 0, kind: input, shape index: {}]
  %s1 = inlined_call_operand.vmem [shape: bf16[32,512], index: 1, kind: input, shape index: {}]
  %s2 = inlined_call_operand.vmem [shape: f32[512,512], index: 2, kind: output, shape index: {}]
  %s3 = sld [smem:[#allocation0]]
  $region41: #{_lambda_.8} parent=0
    _
  %s5 = ssub.s32 1, %s3
  %s6 = scalar_select 0, %s5, %s3
  loop: start=0, step=1, limit=4
  $region2: #{_lambda_.8} parent=0 // loop_pre_header
    _
  $region3: #{_lambda_.8} parent=0 // loop_header
    %s8 = sphi 0, %s12
    %p9 = scmp.ge.s32.totalorder %s8, 4
    %s18 = sphi 0, %s20
    %s21 = sphi 0, %s18
    %s22 = sphi 0, %s21
    %s38 = sphi 0, %s22
    %s42 = sphi 0, %s42
    %s44 = sphi 0, %s42
    %s45 = sphi 0, %s44
    %s59 = sphi 0, %s45
    %s65 = sphi 0, %s67
    %s68 = sphi 0, %s65
    %s69 = sphi 0, %s68
    %s85 = sphi 0, %s69
  $region4: #{_lambda_.8} parent=0 // loop_header_branch
    %11 = sbr.rel (%p9) target = $region8
  $region5: #{_lambda_.8} parent=0 // loop_body
    %s13 = ssub.s32 %s8, 1
    %s14 = ssub.s32 %s8, 2
    %s15 = sadd.s32 %s8, 1
    %s16 = ssub.s32 %s8, %s15
    %p17 = scmp.eq.s32.totalorder %s16, 0
    %s19 = sadd.s32 %s18, 1
    %s20 = scalar_select %p17, %s18, %s19
    %p23 = pneg %p17
    %p24 = scmp.eq.s32.totalorder %s8, 1
    %p25 = por %p23, %p24
    %p26 = scmp.ne.s32.totalorder %s18, %s21
    %p27 = scmp.eq.s32.totalorder %s8, 0
    %p28 = por %p26, %p27
    %p29 = scmp.ne.s32.totalorder %s18, %s21
    %p30 = scmp.eq.s32.totalorder %s13, 1
    %p31 = por %p29, %p30
    %p32 = scmp.ne.s32.totalorder %s21, %s22
    %p33 = scmp.eq.s32.totalorder %s13, 0
    %p34 = por %p32, %p33
    %p35 = scmp.ne.s32.totalorder %s21, %s22
    %p36 = scmp.eq.s32.totalorder %s14, 1
    %p37 = por %p35, %p36
    %p39 = scmp.ne.s32.totalorder %s22, %s38
    %p40 = scmp.eq.s32.totalorder %s14, 0
    %p41 = por %p39, %p40
    %s43 = sadd.s32 %s42, 1
    %p46 = scmp.eq.s32.totalorder %s8, 1
    %p47 = scmp.ne.s32.totalorder %s42, %s44
    %p48 = scmp.eq.s32.totalorder %s8, 0
    %p49 = por %p47, %p48
    %p50 = scmp.ne.s32.totalorder %s42, %s44
    %p51 = scmp.eq.s32.totalorder %s13, 1
    %p52 = por %p50, %p51
    %p53 = scmp.ne.s32.totalorder %s44, %s45
    %p54 = scmp.eq.s32.totalorder %s13, 0
    %p55 = por %p53, %p54
    %p56 = scmp.ne.s32.totalorder %s44, %s45
    %p57 = scmp.eq.s32.totalorder %s14, 1
    %p58 = por %p56, %p57
    %p60 = scmp.ne.s32.totalorder %s45, %s59
    %p61 = scmp.eq.s32.totalorder %s14, 0
    %p62 = por %p60, %p61
    %s63 = ssub.s32 %s8, %s15
    %p64 = scmp.eq.s32.totalorder %s63, 0
    %s66 = sadd.s32 %s65, 1
    %s67 = scalar_select %p64, %s65, %s66
    %p70 = pneg %p64
    %p71 = scmp.eq.s32.totalorder %s8, 1
    %p72 = por %p70, %p71
    %p73 = scmp.ne.s32.totalorder %s65, %s68
    %p74 = scmp.eq.s32.totalorder %s8, 0
    %p75 = por %p73, %p74
    %p76 = scmp.ne.s32.totalorder %s65, %s68
    %p77 = scmp.eq.s32.totalorder %s13, 1
    %p78 = por %p76, %p77
    %p79 = scmp.ne.s32.totalorder %s68, %s69
    %p80 = scmp.eq.s32.totalorder %s13, 0
    %p81 = por %p79, %p80
    %p82 = scmp.ne.s32.totalorder %s68, %s69
    %p83 = scmp.eq.s32.totalorder %s14, 1
    %p84 = por %p82, %p83
    %p86 = scmp.ne.s32.totalorder %s69, %s85
    %p87 = scmp.eq.s32.totalorder %s14, 0
    %p88 = por %p86, %p87
    %p89 = scmp.le.s32.totalorder 1, %s8
    %p90 = scmp.lt.s32.totalorder %s8, 3
    %p91 = pnand %p89, %p90
    %p92 = pneg %p91
    // Predicated region
    $region9: #{_lambda_.8} parent=5 // pred_check
      _
    $region10: #{_lambda_.8} parent=5 // pred_check_branch
      %94 = sbr.rel (%p91) target = $region12
    $region11: #{_lambda_.8} parent=5 // pred_region
      %s95 = ssub.s32 %s8, 1
      // Predicated region
      $region13: #{_lambda_.8} parent=11 // pred_check
        %p96 = pneg %p55
      $region14: #{_lambda_.8} parent=11 // pred_check_branch
        %98 = sbr.rel (%p96) target = $region16
      $region15: #{_lambda_.8} parent=11 // pred_region
        _
      $region16: #{_lambda_.8} parent=11 // pred_fallthru
        _
    $region12: #{_lambda_.8} parent=5 // pred_fallthru
      _
    %p99 = scmp.lt.s32.totalorder %s8, 2
    // Predicated region
    $region17: #{_lambda_.8} parent=5 // pred_check
      %p100 = pneg %p99
    $region18: #{_lambda_.8} parent=5 // pred_check_branch
      %102 = sbr.rel (%p100) target = $region20
    $region19: #{_lambda_.8} parent=5 // pred_region
      // Predicated region
      $region21: #{_lambda_.8} parent=19 // pred_check
        %p103 = pneg %p28
      $region22: #{_lambda_.8} parent=19 // pred_check_branch
        %105 = sbr.rel (%p103) target = $region24
      $region23: #{_lambda_.8} parent=19 // pred_region
        %s106 = smul.u32 32, %s8
        %p107 = scmp.lt.s32.totalorder %s106, 63
        %s108 = scalar_select %p107, %s106, 63
        %s109 = smul.addr %s108, 4
        %s110 = scalar_lea.vmem %s0, %s109
        %s111 = smul.u32 32, %s8
      $region24: #{_lambda_.8} parent=19 // pred_fallthru
        _
    $region20: #{_lambda_.8} parent=5 // pred_fallthru
      _
    %p112 = scmp.le.s32.totalorder 1, %s8
    %p113 = scmp.lt.s32.totalorder %s8, 3
    %p114 = pnand %p112, %p113
    %p115 = pneg %p114
    // Predicated region
    $region25: #{_lambda_.8} parent=5 // pred_check
      _
    $region26: #{_lambda_.8} parent=5 // pred_check_branch
      %117 = sbr.rel (%p114) target = $region28
    $region27: #{_lambda_.8} parent=5 // pred_region
      %s118 = ssub.s32 %s8, 1
      %s119 = smul.u32 32, %s13
      %p120 = scmp.lt.s32.totalorder %s119, 63
      %s121 = scalar_select %p120, %s119, 63
      %s122 = smul.addr %s121, 4
      %s123 = scalar_lea.vmem %s0, %s122
      %p124 = pneg %p34
      %p125 = pneg %p31
      %p126 = pneg %p55
      %p127 = pneg %p52
      %p128 = pneg %p81
      %p129 = pneg %p78
      %s130 = smul.u32 32, %s13
      %p131 = scmp.lt.s32.totalorder %s130, 63
      %s132 = scalar_select %p131, %s130, 63
      %s133 = smul.addr %s132, 4
      %s134 = smul.addr %s133, 8
      %s135 = scalar_lea.vmem %s2, %s134
      %s136 = smul.u32 32, %s13
      %p137 = scmp.lt.s32.totalorder %s136, 63
      %s138 = scalar_select %p137, %s136, 63
      %s139 = smul.addr %s138, 4
      %s140 = scalar_lea.vmem %s0, %s139
      %s141 = smul.u32 32, %s13
      %s142 = smul.u32 32, %s13
      %p143 = scmp.lt.s32.totalorder %s142, 63
      %s144 = scalar_select %p143, %s142, 63
      %s145 = smul.addr %s144, 4
      %s146 = smul.addr %s145, 8
      %s147 = scalar_lea.vmem %s2, %s146
      %s148 = smul.u32 32, %s13
      %v150 = vld [vmem:[%s140] sm:$0xf]
      %v151 = vld [vmem:[%s140 + $0x4] sm:$0xf]
      %v152 = vld [vmem:[%s140 + $0x8] sm:$0xf]
      %v153 = vld [vmem:[%s140 + $0xc] sm:$0xf]
      %v154 = vld [vmem:[%s140 + $0x10] sm:$0xf]
      %v155 = vld [vmem:[%s140 + $0x14] sm:$0xf]
      %v156 = vld [vmem:[%s140 + $0x18] sm:$0xf]
      %v157 = vld [vmem:[%s140 + $0x1c] sm:$0xf]
      %v158 = vld [vmem:[%s140 + $0x20] sm:$0xf]
      %v159 = vld [vmem:[%s140 + $0x24] sm:$0xf]
      %v160 = vld [vmem:[%s140 + $0x28] sm:$0xf]
      %v161 = vld [vmem:[%s140 + $0x2c] sm:$0xf]
      %v162 = vld [vmem:[%s140 + $0x30] sm:$0xf]
      %v163 = vld [vmem:[%s140 + $0x34] sm:$0xf]
      %v164 = vld [vmem:[%s140 + $0x38] sm:$0xf]
      %v165 = vld [vmem:[%s140 + $0x3c] sm:$0xf]
      %v166 = vld [vmem:[%s140 + $0x40] sm:$0xf]
      %v167 = vld [vmem:[%s140 + $0x44] sm:$0xf]
      %v168 = vld [vmem:[%s140 + $0x48] sm:$0xf]
      %v169 = vld [vmem:[%s140 + $0x4c] sm:$0xf]
      %v170 = vld [vmem:[%s140 + $0x50] sm:$0xf]
      %v171 = vld [vmem:[%s140 + $0x54] sm:$0xf]
      %v172 = vld [vmem:[%s140 + $0x58] sm:$0xf]
      %v173 = vld [vmem:[%s140 + $0x5c] sm:$0xf]
      %v174 = vld [vmem:[%s140 + $0x60] sm:$0xf]
      %v175 = vld [vmem:[%s140 + $0x64] sm:$0xf]
      %v176 = vld [vmem:[%s140 + $0x68] sm:$0xf]
      %v177 = vld [vmem:[%s140 + $0x6c] sm:$0xf]
      %v178 = vld [vmem:[%s140 + $0x70] sm:$0xf]
      %v179 = vld [vmem:[%s140 + $0x74] sm:$0xf]
      %v180 = vld [vmem:[%s140 + $0x78] sm:$0xf]
      %v181 = vld [vmem:[%s140 + $0x7c] sm:$0xf]
      %v182 = vld [vmem:[%s1] sm:$0xff]
      %v183 = vld [vmem:[%s1 + $0x8] sm:$0xff]
      %v184 = vld [vmem:[%s1 + $0x10] sm:$0xff]
      %v185 = vld [vmem:[%s1 + $0x18] sm:$0xff]
      %v186 = vld [vmem:[%s1 + $0x20] sm:$0xff]
      %v187 = vld [vmem:[%s1 + $0x28] sm:$0xff]
      %v188 = vld [vmem:[%s1 + $0x30] sm:$0xff]
      %v189 = vld [vmem:[%s1 + $0x38] sm:$0xff]
      %v222 = vunpack.c.l.b16 %v150
      %v223 = vunpack.c.l.b16 %v151
      %v224 = vunpack.c.l.b16 %v152
      %v225 = vunpack.c.l.b16 %v153
      %v226 = vunpack.c.l.b16 %v154
      %v227 = vunpack.c.l.b16 %v155
      %v228 = vunpack.c.l.b16 %v156
      %v229 = vunpack.c.l.b16 %v157
      %v230 = vunpack.c.l.b16 %v158
      %v231 = vunpack.c.l.b16 %v159
      %v232 = vunpack.c.l.b16 %v160
      %v233 = vunpack.c.l.b16 %v161
      %v234 = vunpack.c.l.b16 %v162
      %v235 = vunpack.c.l.b16 %v163
      %v236 = vunpack.c.l.b16 %v164
      %v237 = vunpack.c.l.b16 %v165
      %v238 = vunpack.c.l.b16 %v166
      %v239 = vunpack.c.l.b16 %v167
      %v240 = vunpack.c.l.b16 %v168
      %v241 = vunpack.c.l.b16 %v169
      %v242 = vunpack.c.l.b16 %v170
      %v243 = vunpack.c.l.b16 %v171
      %v244 = vunpack.c.l.b16 %v172
      %v245 = vunpack.c.l.b16 %v173
      %v246 = vunpack.c.l.b16 %v174
      %v247 = vunpack.c.l.b16 %v175
      %v248 = vunpack.c.l.b16 %v176
      %v249 = vunpack.c.l.b16 %v177
      %v250 = vunpack.c.l.b16 %v178
      %v251 = vunpack.c.l.b16 %v179
      %v252 = vunpack.c.l.b16 %v180
      %v253 = vunpack.c.l.b16 %v181
      %v254 = vpack.c.b16 %v223, %v222
      %v255 = vpack.c.b16 %v225, %v224
      %v256 = vpack.c.b16 %v227, %v226
      %v257 = vpack.c.b16 %v229, %v228
      %v258 = vpack.c.b16 %v231, %v230
      %v259 = vpack.c.b16 %v233, %v232
      %v260 = vpack.c.b16 %v235, %v234
      %v261 = vpack.c.b16 %v237, %v236
      %v262 = vpack.c.b16 %v239, %v238
      %v263 = vpack.c.b16 %v241, %v240
      %v264 = vpack.c.b16 %v243, %v242
      %v265 = vpack.c.b16 %v245, %v244
      %v266 = vpack.c.b16 %v247, %v246
      %v267 = vpack.c.b16 %v249, %v248
      %v268 = vpack.c.b16 %v251, %v250
      %v269 = vpack.c.b16 %v253, %v252
      %v278 = vunpack.c.l.b16 %v182
      %v279 = vunpack.c.h.b16 %v182
      %v280 = vunpack.c.l.b16 %v183
      %v281 = vunpack.c.h.b16 %v183
      %v282 = vunpack.c.l.b16 %v184
      %v283 = vunpack.c.h.b16 %v184
      %v284 = vunpack.c.l.b16 %v185
      %v285 = vunpack.c.h.b16 %v185
      %v286 = vunpack.c.l.b16 %v186
      %v287 = vunpack.c.h.b16 %v186
      %v288 = vunpack.c.l.b16 %v187
      %v289 = vunpack.c.h.b16 %v187
      %v290 = vunpack.c.l.b16 %v188
      %v291 = vunpack.c.h.b16 %v188
      %v292 = vunpack.c.l.b16 %v189
      %v293 = vunpack.c.h.b16 %v189
      %v294 = vpack.c.b16 %v282, %v278
      %v295 = vpack.c.b16 %v283, %v279
      %v296 = vpack.c.b16 %v284, %v280
      %v297 = vpack.c.b16 %v285, %v281
      %v298 = vpack.c.b16 %v290, %v286
      %v299 = vpack.c.b16 %v291, %v287
      %v300 = vpack.c.b16 %v292, %v288
      %v301 = vpack.c.b16 %v293, %v289
      %vm310 = vcmask 261120
      %v312 = vsel %vm310, %v254, 0
      %v315 = vsel %vm310, %v255, 0
      %v318 = vsel %vm310, %v256, 0
      %v321 = vsel %vm310, %v257, 0
      %v324 = vsel %vm310, %v258, 0
      %v327 = vsel %vm310, %v259, 0
      %v330 = vsel %vm310, %v260, 0
      %v333 = vsel %vm310, %v261, 0
      %v336 = vsel %vm310, %v262, 0
      %v339 = vsel %vm310, %v263, 0
      %v342 = vsel %vm310, %v264, 0
      %v345 = vsel %vm310, %v265, 0
      %v348 = vsel %vm310, %v266, 0
      %v351 = vsel %vm310, %v267, 0
      %v354 = vsel %vm310, %v268, 0
      %v357 = vsel %vm310, %v269, 0
      %359 = vmatpush.bf16.msra.mxu0 0
      %360 = vmatpush.bf16.msra.mxu0 0
      %361 = vmatpush.bf16.msra.mxu0 0
      %362 = vmatpush.bf16.msra.mxu0 0
      %363 = vmatpush.bf16.msra.mxu0 0
      %364 = vmatpush.bf16.msra.mxu0 0
      %365 = vmatpush.bf16.msra.mxu0 %v298
      %366 = vmatpush.bf16.msra.mxu0 %v294
      %367 = vmatmul.bf16.gmra.mxu0 %v312
      %v368 = vpop.f32.mrf.mxu0
      %v369 = vadd.f32 0.0, %v368
      %v370 = vpop.f32.mrf.mxu0
      %v371 = vadd.f32 0.0, %v370
      %372 = vmatmul.bf16.gmra.mxu0 %v315
      %v373 = vpop.f32.mrf.mxu0
      %v374 = vadd.f32 0.0, %v373
      %v375 = vpop.f32.mrf.mxu0
      %v376 = vadd.f32 0.0, %v375
      %377 = vmatmul.bf16.gmra.mxu0 %v318
      %v378 = vpop.f32.mrf.mxu0
      %v379 = vadd.f32 0.0, %v378
      %v380 = vpop.f32.mrf.mxu0
      %v381 = vadd.f32 0.0, %v380
      %382 = vmatmul.bf16.gmra.mxu0 %v321
      %v383 = vpop.f32.mrf.mxu0
      %v384 = vadd.f32 0.0, %v383
      %v385 = vpop.f32.mrf.mxu0
      %v386 = vadd.f32 0.0, %v385
      %387 = vmatmul.bf16.gmra.mxu0 %v324
      %v388 = vpop.f32.mrf.mxu0
      %v389 = vadd.f32 0.0, %v388
      %v390 = vpop.f32.mrf.mxu0
      %v391 = vadd.f32 0.0, %v390
      %392 = vmatmul.bf16.gmra.mxu0 %v327
      %v393 = vpop.f32.mrf.mxu0
      %v394 = vadd.f32 0.0, %v393
      %v395 = vpop.f32.mrf.mxu0
      %v396 = vadd.f32 0.0, %v395
      %397 = vmatmul.bf16.gmra.mxu0 %v330
      %v398 = vpop.f32.mrf.mxu0
      %v399 = vadd.f32 0.0, %v398
      %v400 = vpop.f32.mrf.mxu0
      %v401 = vadd.f32 0.0, %v400
      %402 = vmatmul.bf16.gmra.mxu0 %v333
      %v403 = vpop.f32.mrf.mxu0
      %v404 = vadd.f32 0.0, %v403
      %v405 = vpop.f32.mrf.mxu0
      %v406 = vadd.f32 0.0, %v405
      %407 = vmatmul.bf16.gmra.mxu0 %v336
      %v408 = vpop.f32.mrf.mxu0
      %v409 = vadd.f32 0.0, %v408
      %v410 = vpop.f32.mrf.mxu0
      %v411 = vadd.f32 0.0, %v410
      %412 = vmatmul.bf16.gmra.mxu0 %v339
      %v413 = vpop.f32.mrf.mxu0
      %v414 = vadd.f32 0.0, %v413
      %v415 = vpop.f32.mrf.mxu0
      %v416 = vadd.f32 0.0, %v415
      %417 = vmatmul.bf16.gmra.mxu0 %v342
      %v418 = vpop.f32.mrf.mxu0
      %v419 = vadd.f32 0.0, %v418
      %v420 = vpop.f32.mrf.mxu0
      %v421 = vadd.f32 0.0, %v420
      %422 = vmatmul.bf16.gmra.mxu0 %v345
      %v423 = vpop.f32.mrf.mxu0
      %v424 = vadd.f32 0.0, %v423
      %v425 = vpop.f32.mrf.mxu0
      %v426 = vadd.f32 0.0, %v425
      %427 = vmatmul.bf16.gmra.mxu0 %v348
      %v428 = vpop.f32.mrf.mxu0
      %v429 = vadd.f32 0.0, %v428
      %v430 = vpop.f32.mrf.mxu0
      %v431 = vadd.f32 0.0, %v430
      %432 = vmatmul.bf16.gmra.mxu0 %v351
      %v433 = vpop.f32.mrf.mxu0
      %v434 = vadd.f32 0.0, %v433
      %v435 = vpop.f32.mrf.mxu0
      %v436 = vadd.f32 0.0, %v435
      %437 = vmatmul.bf16.gmra.mxu0 %v354
      %v438 = vpop.f32.mrf.mxu0
      %v439 = vadd.f32 0.0, %v438
      %v440 = vpop.f32.mrf.mxu0
      %v441 = vadd.f32 0.0, %v440
      %442 = vmatmul.bf16.gmra.mxu0 %v357
      %v443 = vpop.f32.mrf.mxu0
      %v444 = vadd.f32 0.0, %v443
      %v445 = vpop.f32.mrf.mxu0
      %v446 = vadd.f32 0.0, %v445
      %447 = vdwg.mxu0
      %448 = vmatpush.bf16.msra.mxu0 0
      %449 = vmatpush.bf16.msra.mxu0 0
      %450 = vmatpush.bf16.msra.mxu0 0
      %451 = vmatpush.bf16.msra.mxu0 0
      %452 = vmatpush.bf16.msra.mxu0 0
      %453 = vmatpush.bf16.msra.mxu0 0
      %454 = vmatpush.bf16.msra.mxu0 %v299
      %455 = vmatpush.bf16.msra.mxu0 %v295
      %456 = vmatmul.bf16.gmra.mxu0 %v312
      %v457 = vpop.f32.mrf.mxu0
      %v458 = vadd.f32 0.0, %v457
      %v459 = vpop.f32.mrf.mxu0
      %v460 = vadd.f32 0.0, %v459
      %461 = vmatmul.bf16.gmra.mxu0 %v315
      %v462 = vpop.f32.mrf.mxu0
      %v463 = vadd.f32 0.0, %v462
      %v464 = vpop.f32.mrf.mxu0
      %v465 = vadd.f32 0.0, %v464
      %466 = vmatmul.bf16.gmra.mxu0 %v318
      %v467 = vpop.f32.mrf.mxu0
      %v468 = vadd.f32 0.0, %v467
      %v469 = vpop.f32.mrf.mxu0
      %v470 = vadd.f32 0.0, %v469
      %471 = vmatmul.bf16.gmra.mxu0 %v321
      %v472 = vpop.f32.mrf.mxu0
      %v473 = vadd.f32 0.0, %v472
      %v474 = vpop.f32.mrf.mxu0
      %v475 = vadd.f32 0.0, %v474
      %476 = vmatmul.bf16.gmra.mxu0 %v324
      %v477 = vpop.f32.mrf.mxu0
      %v478 = vadd.f32 0.0, %v477
      %v479 = vpop.f32.mrf.mxu0
      %v480 = vadd.f32 0.0, %v479
      %481 = vmatmul.bf16.gmra.mxu0 %v327
      %v482 = vpop.f32.mrf.mxu0
      %v483 = vadd.f32 0.0, %v482
      %v484 = vpop.f32.mrf.mxu0
      %v485 = vadd.f32 0.0, %v484
      %486 = vmatmul.bf16.gmra.mxu0 %v330
      %v487 = vpop.f32.mrf.mxu0
      %v488 = vadd.f32 0.0, %v487
      %v489 = vpop.f32.mrf.mxu0
      %v490 = vadd.f32 0.0, %v489
      %491 = vmatmul.bf16.gmra.mxu0 %v333
      %v492 = vpop.f32.mrf.mxu0
      %v493 = vadd.f32 0.0, %v492
      %v494 = vpop.f32.mrf.mxu0
      %v495 = vadd.f32 0.0, %v494
      %496 = vmatmul.bf16.gmra.mxu0 %v336
      %v497 = vpop.f32.mrf.mxu0
      %v498 = vadd.f32 0.0, %v497
      %v499 = vpop.f32.mrf.mxu0
      %v500 = vadd.f32 0.0, %v499
      %501 = vmatmul.bf16.gmra.mxu0 %v339
      %v502 = vpop.f32.mrf.mxu0
      %v503 = vadd.f32 0.0, %v502
      %v504 = vpop.f32.mrf.mxu0
      %v505 = vadd.f32 0.0, %v504
      %506 = vmatmul.bf16.gmra.mxu0 %v342
      %v507 = vpop.f32.mrf.mxu0
      %v508 = vadd.f32 0.0, %v507
      %v509 = vpop.f32.mrf.mxu0
      %v510 = vadd.f32 0.0, %v509
      %511 = vmatmul.bf16.gmra.mxu0 %v345
      %v512 = vpop.f32.mrf.mxu0
      %v513 = vadd.f32 0.0, %v512
      %v514 = vpop.f32.mrf.mxu0
      %v515 = vadd.f32 0.0, %v514
      %516 = vmatmul.bf16.gmra.mxu0 %v348
      %v517 = vpop.f32.mrf.mxu0
      %v518 = vadd.f32 0.0, %v517
      %v519 = vpop.f32.mrf.mxu0
      %v520 = vadd.f32 0.0, %v519
      %521 = vmatmul.bf16.gmra.mxu0 %v351
      %v522 = vpop.f32.mrf.mxu0
      %v523 = vadd.f32 0.0, %v522
      %v524 = vpop.f32.mrf.mxu0
      %v525 = vadd.f32 0.0, %v524
      %526 = vmatmul.bf16.gmra.mxu0 %v354
      %v527 = vpop.f32.mrf.mxu0
      %v528 = vadd.f32 0.0, %v527
      %v529 = vpop.f32.mrf.mxu0
      %v530 = vadd.f32 0.0, %v529
      %531 = vmatmul.bf16.gmra.mxu0 %v357
      %v532 = vpop.f32.mrf.mxu0
      %v533 = vadd.f32 0.0, %v532
      %v534 = vpop.f32.mrf.mxu0
      %v535 = vadd.f32 0.0, %v534
      %536 = vdwg.mxu0
      %537 = vmatpush.bf16.msra.mxu0 0
      %538 = vmatpush.bf16.msra.mxu0 0
      %539 = vmatpush.bf16.msra.mxu0 0
      %540 = vmatpush.bf16.msra.mxu0 0
      %541 = vmatpush.bf16.msra.mxu0 0
      %542 = vmatpush.bf16.msra.mxu0 0
      %543 = vmatpush.bf16.msra.mxu0 %v300
      %544 = vmatpush.bf16.msra.mxu0 %v296
      %545 = vmatmul.bf16.gmra.mxu0 %v312
      %v546 = vpop.f32.mrf.mxu0
      %v547 = vadd.f32 0.0, %v546
      %v548 = vpop.f32.mrf.mxu0
      %v549 = vadd.f32 0.0, %v548
      %550 = vmatmul.bf16.gmra.mxu0 %v315
      %v551 = vpop.f32.mrf.mxu0
      %v552 = vadd.f32 0.0, %v551
      %v553 = vpop.f32.mrf.mxu0
      %v554 = vadd.f32 0.0, %v553
      %555 = vmatmul.bf16.gmra.mxu0 %v318
      %v556 = vpop.f32.mrf.mxu0
      %v557 = vadd.f32 0.0, %v556
      %v558 = vpop.f32.mrf.mxu0
      %v559 = vadd.f32 0.0, %v558
      %560 = vmatmul.bf16.gmra.mxu0 %v321
      %v561 = vpop.f32.mrf.mxu0
      %v562 = vadd.f32 0.0, %v561
      %v563 = vpop.f32.mrf.mxu0
      %v564 = vadd.f32 0.0, %v563
      %565 = vmatmul.bf16.gmra.mxu0 %v324
      %v566 = vpop.f32.mrf.mxu0
      %v567 = vadd.f32 0.0, %v566
      %v568 = vpop.f32.mrf.mxu0
      %v569 = vadd.f32 0.0, %v568
      %570 = vmatmul.bf16.gmra.mxu0 %v327
      %v571 = vpop.f32.mrf.mxu0
      %v572 = vadd.f32 0.0, %v571
      %v573 = vpop.f32.mrf.mxu0
      %v574 = vadd.f32 0.0, %v573
      %575 = vmatmul.bf16.gmra.mxu0 %v330
      %v576 = vpop.f32.mrf.mxu0
      %v577 = vadd.f32 0.0, %v576
      %v578 = vpop.f32.mrf.mxu0
      %v579 = vadd.f32 0.0, %v578
      %580 = vmatmul.bf16.gmra.mxu0 %v333
      %v581 = vpop.f32.mrf.mxu0
      %v582 = vadd.f32 0.0, %v581
      %v583 = vpop.f32.mrf.mxu0
      %v584 = vadd.f32 0.0, %v583
      %585 = vmatmul.bf16.gmra.mxu0 %v336
      %v586 = vpop.f32.mrf.mxu0
      %v587 = vadd.f32 0.0, %v586
      %v588 = vpop.f32.mrf.mxu0
      %v589 = vadd.f32 0.0, %v588
      %590 = vmatmul.bf16.gmra.mxu0 %v339
      %v591 = vpop.f32.mrf.mxu0
      %v592 = vadd.f32 0.0, %v591
      %v593 = vpop.f32.mrf.mxu0
      %v594 = vadd.f32 0.0, %v593
      %595 = vmatmul.bf16.gmra.mxu0 %v342
      %v596 = vpop.f32.mrf.mxu0
      %v597 = vadd.f32 0.0, %v596
      %v598 = vpop.f32.mrf.mxu0
      %v599 = vadd.f32 0.0, %v598
      %600 = vmatmul.bf16.gmra.mxu0 %v345
      %v601 = vpop.f32.mrf.mxu0
      %v602 = vadd.f32 0.0, %v601
      %v603 = vpop.f32.mrf.mxu0
      %v604 = vadd.f32 0.0, %v603
      %605 = vmatmul.bf16.gmra.mxu0 %v348
      %v606 = vpop.f32.mrf.mxu0
      %v607 = vadd.f32 0.0, %v606
      %v608 = vpop.f32.mrf.mxu0
      %v609 = vadd.f32 0.0, %v608
      %610 = vmatmul.bf16.gmra.mxu0 %v351
      %v611 = vpop.f32.mrf.mxu0
      %v612 = vadd.f32 0.0, %v611
      %v613 = vpop.f32.mrf.mxu0
      %v614 = vadd.f32 0.0, %v613
      %615 = vmatmul.bf16.gmra.mxu0 %v354
      %v616 = vpop.f32.mrf.mxu0
      %v617 = vadd.f32 0.0, %v616
      %v618 = vpop.f32.mrf.mxu0
      %v619 = vadd.f32 0.0, %v618
      %620 = vmatmul.bf16.gmra.mxu0 %v357
      %v621 = vpop.f32.mrf.mxu0
      %v622 = vadd.f32 0.0, %v621
      %v623 = vpop.f32.mrf.mxu0
      %v624 = vadd.f32 0.0, %v623
      %625 = vdwg.mxu0
      %626 = vmatpush.bf16.msra.mxu0 0
      %627 = vmatpush.bf16.msra.mxu0 0
      %628 = vmatpush.bf16.msra.mxu0 0
      %629 = vmatpush.bf16.msra.mxu0 0
      %630 = vmatpush.bf16.msra.mxu0 0
      %631 = vmatpush.bf16.msra.mxu0 0
      %632 = vmatpush.bf16.msra.mxu0 %v301
      %633 = vmatpush.bf16.msra.mxu0 %v297
      %634 = vmatmul.bf16.gmra.mxu0 %v312
      %v635 = vpop.f32.mrf.mxu0
      %v636 = vadd.f32 0.0, %v635
      %v637 = vpop.f32.mrf.mxu0
      %v638 = vadd.f32 0.0, %v637
      %639 = vmatmul.bf16.gmra.mxu0 %v315
      %v640 = vpop.f32.mrf.mxu0
      %v641 = vadd.f32 0.0, %v640
      %v642 = vpop.f32.mrf.mxu0
      %v643 = vadd.f32 0.0, %v642
      %644 = vmatmul.bf16.gmra.mxu0 %v318
      %v645 = vpop.f32.mrf.mxu0
      %v646 = vadd.f32 0.0, %v645
      %v647 = vpop.f32.mrf.mxu0
      %v648 = vadd.f32 0.0, %v647
      %649 = vmatmul.bf16.gmra.mxu0 %v321
      %v650 = vpop.f32.mrf.mxu0
      %v651 = vadd.f32 0.0, %v650
      %v652 = vpop.f32.mrf.mxu0
      %v653 = vadd.f32 0.0, %v652
      %654 = vmatmul.bf16.gmra.mxu0 %v324
      %v655 = vpop.f32.mrf.mxu0
      %v656 = vadd.f32 0.0, %v655
      %v657 = vpop.f32.mrf.mxu0
      %v658 = vadd.f32 0.0, %v657
      %659 = vmatmul.bf16.gmra.mxu0 %v327
      %v660 = vpop.f32.mrf.mxu0
      %v661 = vadd.f32 0.0, %v660
      %v662 = vpop.f32.mrf.mxu0
      %v663 = vadd.f32 0.0, %v662
      %664 = vmatmul.bf16.gmra.mxu0 %v330
      %v665 = vpop.f32.mrf.mxu0
      %v666 = vadd.f32 0.0, %v665
      %v667 = vpop.f32.mrf.mxu0
      %v668 = vadd.f32 0.0, %v667
      %669 = vmatmul.bf16.gmra.mxu0 %v333
      %v670 = vpop.f32.mrf.mxu0
      %v671 = vadd.f32 0.0, %v670
      %v672 = vpop.f32.mrf.mxu0
      %v673 = vadd.f32 0.0, %v672
      %674 = vmatmul.bf16.gmra.mxu0 %v336
      %v675 = vpop.f32.mrf.mxu0
      %v676 = vadd.f32 0.0, %v675
      %v677 = vpop.f32.mrf.mxu0
      %v678 = vadd.f32 0.0, %v677
      %679 = vmatmul.bf16.gmra.mxu0 %v339
      %v680 = vpop.f32.mrf.mxu0
      %v681 = vadd.f32 0.0, %v680
      %v682 = vpop.f32.mrf.mxu0
      %v683 = vadd.f32 0.0, %v682
      %684 = vmatmul.bf16.gmra.mxu0 %v342
      %v685 = vpop.f32.mrf.mxu0
      %v686 = vadd.f32 0.0, %v685
      %v687 = vpop.f32.mrf.mxu0
      %v688 = vadd.f32 0.0, %v687
      %689 = vmatmul.bf16.gmra.mxu0 %v345
      %v690 = vpop.f32.mrf.mxu0
      %v691 = vadd.f32 0.0, %v690
      %v692 = vpop.f32.mrf.mxu0
      %v693 = vadd.f32 0.0, %v692
      %694 = vmatmul.bf16.gmra.mxu0 %v348
      %v695 = vpop.f32.mrf.mxu0
      %v696 = vadd.f32 0.0, %v695
      %v697 = vpop.f32.mrf.mxu0
      %v698 = vadd.f32 0.0, %v697
      %699 = vmatmul.bf16.gmra.mxu0 %v351
      %v700 = vpop.f32.mrf.mxu0
      %v701 = vadd.f32 0.0, %v700
      %v702 = vpop.f32.mrf.mxu0
      %v703 = vadd.f32 0.0, %v702
      %704 = vmatmul.bf16.gmra.mxu0 %v354
      %v705 = vpop.f32.mrf.mxu0
      %v706 = vadd.f32 0.0, %v705
      %v707 = vpop.f32.mrf.mxu0
      %v708 = vadd.f32 0.0, %v707
      %709 = vmatmul.bf16.gmra.mxu0 %v357
      %v710 = vpop.f32.mrf.mxu0
      %v711 = vadd.f32 0.0, %v710
      %v712 = vpop.f32.mrf.mxu0
      %v713 = vadd.f32 0.0, %v712
      %714 = vdwg.mxu0
      %715 = vst [vmem:[%s147] sm:$0xff] %v369
      %716 = vst [vmem:[%s147 + $0x8] sm:$0xff] %v458
      %717 = vst [vmem:[%s147 + $0x10] sm:$0xff] %v547
      %718 = vst [vmem:[%s147 + $0x18] sm:$0xff] %v636
      %719 = vst [vmem:[%s147 + $0x20] sm:$0xff] %v371
      %720 = vst [vmem:[%s147 + $0x28] sm:$0xff] %v460
      %721 = vst [vmem:[%s147 + $0x30] sm:$0xff] %v549
      %722 = vst [vmem:[%s147 + $0x38] sm:$0xff] %v638
      %723 = vst [vmem:[%s147 + $0x40] sm:$0xff] %v374
      %724 = vst [vmem:[%s147 + $0x48] sm:$0xff] %v463
      %725 = vst [vmem:[%s147 + $0x50] sm:$0xff] %v552
      %726 = vst [vmem:[%s147 + $0x58] sm:$0xff] %v641
      %727 = vst [vmem:[%s147 + $0x60] sm:$0xff] %v376
      %728 = vst [vmem:[%s147 + $0x68] sm:$0xff] %v465
      %729 = vst [vmem:[%s147 + $0x70] sm:$0xff] %v554
      %730 = vst [vmem:[%s147 + $0x78] sm:$0xff] %v643
      %731 = vst [vmem:[%s147 + $0x80] sm:$0xff] %v379
      %732 = vst [vmem:[%s147 + $0x88] sm:$0xff] %v468
      %733 = vst [vmem:[%s147 + $0x90] sm:$0xff] %v557
      %734 = vst [vmem:[%s147 + $0x98] sm:$0xff] %v646
      %735 = vst [vmem:[%s147 + $0xa0] sm:$0xff] %v381
      %736 = vst [vmem:[%s147 + $0xa8] sm:$0xff] %v470
      %737 = vst [vmem:[%s147 + $0xb0] sm:$0xff] %v559
      %738 = vst [vmem:[%s147 + $0xb8] sm:$0xff] %v648
      %739 = vst [vmem:[%s147 + $0xc0] sm:$0xff] %v384
      %740 = vst [vmem:[%s147 + $0xc8] sm:$0xff] %v473
      %741 = vst [vmem:[%s147 + $0xd0] sm:$0xff] %v562
      %742 = vst [vmem:[%s147 + $0xd8] sm:$0xff] %v651
      %743 = vst [vmem:[%s147 + $0xe0] sm:$0xff] %v386
      %744 = vst [vmem:[%s147 + $0xe8] sm:$0xff] %v475
      %745 = vst [vmem:[%s147 + $0xf0] sm:$0xff] %v564
      %746 = vst [vmem:[%s147 + $0xf8] sm:$0xff] %v653
      %747 = vst [vmem:[%s147 + $0x100] sm:$0xff] %v389
      %748 = vst [vmem:[%s147 + $0x108] sm:$0xff] %v478
      %749 = vst [vmem:[%s147 + $0x110] sm:$0xff] %v567
      %750 = vst [vmem:[%s147 + $0x118] sm:$0xff] %v656
      %751 = vst [vmem:[%s147 + $0x120] sm:$0xff] %v391
      %752 = vst [vmem:[%s147 + $0x128] sm:$0xff] %v480
      %753 = vst [vmem:[%s147 + $0x130] sm:$0xff] %v569
      %754 = vst [vmem:[%s147 + $0x138] sm:$0xff] %v658
      %755 = vst [vmem:[%s147 + $0x140] sm:$0xff] %v394
      %756 = vst [vmem:[%s147 + $0x148] sm:$0xff] %v483
      %757 = vst [vmem:[%s147 + $0x150] sm:$0xff] %v572
      %758 = vst [vmem:[%s147 + $0x158] sm:$0xff] %v661
      %759 = vst [vmem:[%s147 + $0x160] sm:$0xff] %v396
      %760 = vst [vmem:[%s147 + $0x168] sm:$0xff] %v485
      %761 = vst [vmem:[%s147 + $0x170] sm:$0xff] %v574
      %762 = vst [vmem:[%s147 + $0x178] sm:$0xff] %v663
      %763 = vst [vmem:[%s147 + $0x180] sm:$0xff] %v399
      %764 = vst [vmem:[%s147 + $0x188] sm:$0xff] %v488
      %765 = vst [vmem:[%s147 + $0x190] sm:$0xff] %v577
      %766 = vst [vmem:[%s147 + $0x198] sm:$0xff] %v666
      %767 = vst [vmem:[%s147 + $0x1a0] sm:$0xff] %v401
      %768 = vst [vmem:[%s147 + $0x1a8] sm:$0xff] %v490
      %769 = vst [vmem:[%s147 + $0x1b0] sm:$0xff] %v579
      %770 = vst [vmem:[%s147 + $0x1b8] sm:$0xff] %v668
      %771 = vst [vmem:[%s147 + $0x1c0] sm:$0xff] %v404
      %772 = vst [vmem:[%s147 + $0x1c8] sm:$0xff] %v493
      %773 = vst [vmem:[%s147 + $0x1d0] sm:$0xff] %v582
      %774 = vst [vmem:[%s147 + $0x1d8] sm:$0xff] %v671
      %775 = vst [vmem:[%s147 + $0x1e0] sm:$0xff] %v406
      %776 = vst [vmem:[%s147 + $0x1e8] sm:$0xff] %v495
      %777 = vst [vmem:[%s147 + $0x1f0] sm:$0xff] %v584
      %778 = vst [vmem:[%s147 + $0x1f8] sm:$0xff] %v673
      %779 = vst [vmem:[%s147 + $0x200] sm:$0xff] %v409
      %780 = vst [vmem:[%s147 + $0x208] sm:$0xff] %v498
      %781 = vst [vmem:[%s147 + $0x210] sm:$0xff] %v587
      %782 = vst [vmem:[%s147 + $0x218] sm:$0xff] %v676
      %783 = vst [vmem:[%s147 + $0x220] sm:$0xff] %v411
      %784 = vst [vmem:[%s147 + $0x228] sm:$0xff] %v500
      %785 = vst [vmem:[%s147 + $0x230] sm:$0xff] %v589
      %786 = vst [vmem:[%s147 + $0x238] sm:$0xff] %v678
      %787 = vst [vmem:[%s147 + $0x240] sm:$0xff] %v414
      %788 = vst [vmem:[%s147 + $0x248] sm:$0xff] %v503
      %789 = vst [vmem:[%s147 + $0x250] sm:$0xff] %v592
      %790 = vst [vmem:[%s147 + $0x258] sm:$0xff] %v681
      %791 = vst [vmem:[%s147 + $0x260] sm:$0xff] %v416
      %792 = vst [vmem:[%s147 + $0x268] sm:$0xff] %v505
      %793 = vst [vmem:[%s147 + $0x270] sm:$0xff] %v594
      %794 = vst [vmem:[%s147 + $0x278] sm:$0xff] %v683
      %795 = vst [vmem:[%s147 + $0x280] sm:$0xff] %v419
      %796 = vst [vmem:[%s147 + $0x288] sm:$0xff] %v508
      %797 = vst [vmem:[%s147 + $0x290] sm:$0xff] %v597
      %798 = vst [vmem:[%s147 + $0x298] sm:$0xff] %v686
      %799 = vst [vmem:[%s147 + $0x2a0] sm:$0xff] %v421
      %800 = vst [vmem:[%s147 + $0x2a8] sm:$0xff] %v510
      %801 = vst [vmem:[%s147 + $0x2b0] sm:$0xff] %v599
      %802 = vst [vmem:[%s147 + $0x2b8] sm:$0xff] %v688
      %803 = vst [vmem:[%s147 + $0x2c0] sm:$0xff] %v424
      %804 = vst [vmem:[%s147 + $0x2c8] sm:$0xff] %v513
      %805 = vst [vmem:[%s147 + $0x2d0] sm:$0xff] %v602
      %806 = vst [vmem:[%s147 + $0x2d8] sm:$0xff] %v691
      %807 = vst [vmem:[%s147 + $0x2e0] sm:$0xff] %v426
      %808 = vst [vmem:[%s147 + $0x2e8] sm:$0xff] %v515
      %809 = vst [vmem:[%s147 + $0x2f0] sm:$0xff] %v604
      %810 = vst [vmem:[%s147 + $0x2f8] sm:$0xff] %v693
      %811 = vst [vmem:[%s147 + $0x300] sm:$0xff] %v429
      %812 = vst [vmem:[%s147 + $0x308] sm:$0xff] %v518
      %813 = vst [vmem:[%s147 + $0x310] sm:$0xff] %v607
      %814 = vst [vmem:[%s147 + $0x318] sm:$0xff] %v696
      %815 = vst [vmem:[%s147 + $0x320] sm:$0xff] %v431
      %816 = vst [vmem:[%s147 + $0x328] sm:$0xff] %v520
      %817 = vst [vmem:[%s147 + $0x330] sm:$0xff] %v609
      %818 = vst [vmem:[%s147 + $0x338] sm:$0xff] %v698
      %819 = vst [vmem:[%s147 + $0x340] sm:$0xff] %v434
      %820 = vst [vmem:[%s147 + $0x348] sm:$0xff] %v523
      %821 = vst [vmem:[%s147 + $0x350] sm:$0xff] %v612
      %822 = vst [vmem:[%s147 + $0x358] sm:$0xff] %v701
      %823 = vst [vmem:[%s147 + $0x360] sm:$0xff] %v436
      %824 = vst [vmem:[%s147 + $0x368] sm:$0xff] %v525
      %825 = vst [vmem:[%s147 + $0x370] sm:$0xff] %v614
      %826 = vst [vmem:[%s147 + $0x378] sm:$0xff] %v703
      %827 = vst [vmem:[%s147 + $0x380] sm:$0xff] %v439
      %828 = vst [vmem:[%s147 + $0x388] sm:$0xff] %v528
      %829 = vst [vmem:[%s147 + $0x390] sm:$0xff] %v617
      %830 = vst [vmem:[%s147 + $0x398] sm:$0xff] %v706
      %831 = vst [vmem:[%s147 + $0x3a0] sm:$0xff] %v441
      %832 = vst [vmem:[%s147 + $0x3a8] sm:$0xff] %v530
      %833 = vst [vmem:[%s147 + $0x3b0] sm:$0xff] %v619
      %834 = vst [vmem:[%s147 + $0x3b8] sm:$0xff] %v708
      %835 = vst [vmem:[%s147 + $0x3c0] sm:$0xff] %v444
      %836 = vst [vmem:[%s147 + $0x3c8] sm:$0xff] %v533
      %837 = vst [vmem:[%s147 + $0x3d0] sm:$0xff] %v622
      %838 = vst [vmem:[%s147 + $0x3d8] sm:$0xff] %v711
      %839 = vst [vmem:[%s147 + $0x3e0] sm:$0xff] %v446
      %840 = vst [vmem:[%s147 + $0x3e8] sm:$0xff] %v535
      %841 = vst [vmem:[%s147 + $0x3f0] sm:$0xff] %v624
      %842 = vst [vmem:[%s147 + $0x3f8] sm:$0xff] %v713
      %s843 = smul.u32 32, %s13
      %p844 = scmp.lt.s32.totalorder %s843, 63
      %s845 = scalar_select %p844, %s843, 63
      %s846 = smul.addr %s845, 4
      %s847 = smul.addr %s846, 8
      %s848 = scalar_lea.vmem %s2, %s847
      // Predicated region
      $region29: #{_lambda_.8} parent=27 // pred_check
        %p849 = pneg %p78
      $region30: #{_lambda_.8} parent=27 // pred_check_branch
        %851 = sbr.rel (%p849) target = $region32
      $region31: #{_lambda_.8} parent=27 // pred_region
        %s852 = smul.u32 32, %s13
      $region32: #{_lambda_.8} parent=27 // pred_fallthru
        _
    $region28: #{_lambda_.8} parent=5 // pred_fallthru
      _
    %p853 = scmp.le.s32.totalorder 2, %s8
    // Predicated region
    $region33: #{_lambda_.8} parent=5 // pred_check
      %p854 = pneg %p853
    $region34: #{_lambda_.8} parent=5 // pred_check_branch
      %856 = sbr.rel (%p854) target = $region36
    $region35: #{_lambda_.8} parent=5 // pred_region
      %s857 = ssub.s32 %s8, 2
      // Predicated region
      $region37: #{_lambda_.8} parent=35 // pred_check
        %p858 = pneg %p84
      $region38: #{_lambda_.8} parent=35 // pred_check_branch
        %860 = sbr.rel (%p858) target = $region40
      $region39: #{_lambda_.8} parent=35 // pred_region
        %s861 = smul.u32 32, %s14
        %p862 = scmp.lt.s32.totalorder %s861, 63
        %s863 = scalar_select %p862, %s861, 63
        %s864 = smul.addr %s863, 4
        %s865 = smul.addr %s864, 8
        %s866 = scalar_lea.vmem %s2, %s865
      $region40: #{_lambda_.8} parent=35 // pred_fallthru
        _
    $region36: #{_lambda_.8} parent=5 // pred_fallthru
      _
  $region6: #{_lambda_.8} parent=0 // loop_footer
    %s12 = sadd.s32 1, %s8
  $region7: #{_lambda_.8} parent=0 // loop_footer_branch
    %7 = sbr.rel target = $region3
  $region8: #{_lambda_.8} parent=0 // loop_exit
    _

// kernel: _lambda_.9
$region0: #{_lambda_.9}
  #allocation0 [shape = 'u32[]', space=smem, size = 0x4, offset = 0x4, fixed_abs, tag = 'smem constant byte address 0x4 - core index']
  #allocation1 [shape = 'u32[72,128]{1,0:T(1,128)}', space=vmem, size = 0x9000, scoped, tag = 'internal scratch']
  %s0 = inlined_call_operand.vmem [shape: bf16[2048,32], index: 0, kind: input, shape index: {}]
  %s1 = inlined_call_operand.vmem [shape: bf16[32,48], index: 1, kind: input, shape index: {}]
  %s2 = inlined_call_operand.vmem [shape: f32[2048,48], index: 2, kind: output, shape index: {}]
  %s3 = sld [smem:[#allocation0]]
  $region41: #{_lambda_.9} parent=0
    _
  %s5 = ssub.s32 1, %s3
  %s6 = scalar_select 0, %s5, %s3
  loop: start=0, step=1, limit=4
  $region2: #{_lambda_.9} parent=0 // loop_pre_header
    _
  $region3: #{_lambda_.9} parent=0 // loop_header
    %s8 = sphi 0, %s12
    %p9 = scmp.ge.s32.totalorder %s8, 4
    %s18 = sphi 0, %s20
    %s21 = sphi 0, %s18
    %s22 = sphi 0, %s21
    %s38 = sphi 0, %s22
    %s42 = sphi 0, %s42
    %s44 = sphi 0, %s42
    %s45 = sphi 0, %s44
    %s59 = sphi 0, %s45
    %s65 = sphi 0, %s67
    %s68 = sphi 0, %s65
    %s69 = sphi 0, %s68
    %s85 = sphi 0, %s69
  $region4: #{_lambda_.9} parent=0 // loop_header_branch
    %11 = sbr.rel (%p9) target = $region8
  $region5: #{_lambda_.9} parent=0 // loop_body
    %s13 = ssub.s32 %s8, 1
    %s14 = ssub.s32 %s8, 2
    %s15 = sadd.s32 %s8, 1
    %s16 = ssub.s32 %s8, %s15
    %p17 = scmp.eq.s32.totalorder %s16, 0
    %s19 = sadd.s32 %s18, 1
    %s20 = scalar_select %p17, %s18, %s19
    %p23 = pneg %p17
    %p24 = scmp.eq.s32.totalorder %s8, 1
    %p25 = por %p23, %p24
    %p26 = scmp.ne.s32.totalorder %s18, %s21
    %p27 = scmp.eq.s32.totalorder %s8, 0
    %p28 = por %p26, %p27
    %p29 = scmp.ne.s32.totalorder %s18, %s21
    %p30 = scmp.eq.s32.totalorder %s13, 1
    %p31 = por %p29, %p30
    %p32 = scmp.ne.s32.totalorder %s21, %s22
    %p33 = scmp.eq.s32.totalorder %s13, 0
    %p34 = por %p32, %p33
    %p35 = scmp.ne.s32.totalorder %s21, %s22
    %p36 = scmp.eq.s32.totalorder %s14, 1
    %p37 = por %p35, %p36
    %p39 = scmp.ne.s32.totalorder %s22, %s38
    %p40 = scmp.eq.s32.totalorder %s14, 0
    %p41 = por %p39, %p40
    %s43 = sadd.s32 %s42, 1
    %p46 = scmp.eq.s32.totalorder %s8, 1
    %p47 = scmp.ne.s32.totalorder %s42, %s44
    %p48 = scmp.eq.s32.totalorder %s8, 0
    %p49 = por %p47, %p48
    %p50 = scmp.ne.s32.totalorder %s42, %s44
    %p51 = scmp.eq.s32.totalorder %s13, 1
    %p52 = por %p50, %p51
    %p53 = scmp.ne.s32.totalorder %s44, %s45
    %p54 = scmp.eq.s32.totalorder %s13, 0
    %p55 = por %p53, %p54
    %p56 = scmp.ne.s32.totalorder %s44, %s45
    %p57 = scmp.eq.s32.totalorder %s14, 1
    %p58 = por %p56, %p57
    %p60 = scmp.ne.s32.totalorder %s45, %s59
    %p61 = scmp.eq.s32.totalorder %s14, 0
    %p62 = por %p60, %p61
    %s63 = ssub.s32 %s8, %s15
    %p64 = scmp.eq.s32.totalorder %s63, 0
    %s66 = sadd.s32 %s65, 1
    %s67 = scalar_select %p64, %s65, %s66
    %p70 = pneg %p64
    %p71 = scmp.eq.s32.totalorder %s8, 1
    %p72 = por %p70, %p71
    %p73 = scmp.ne.s32.totalorder %s65, %s68
    %p74 = scmp.eq.s32.totalorder %s8, 0
    %p75 = por %p73, %p74
    %p76 = scmp.ne.s32.totalorder %s65, %s68
    %p77 = scmp.eq.s32.totalorder %s13, 1
    %p78 = por %p76, %p77
    %p79 = scmp.ne.s32.totalorder %s68, %s69
    %p80 = scmp.eq.s32.totalorder %s13, 0
    %p81 = por %p79, %p80
    %p82 = scmp.ne.s32.totalorder %s68, %s69
    %p83 = scmp.eq.s32.totalorder %s14, 1
    %p84 = por %p82, %p83
    %p86 = scmp.ne.s32.totalorder %s69, %s85
    %p87 = scmp.eq.s32.totalorder %s14, 0
    %p88 = por %p86, %p87
    %p89 = scmp.le.s32.totalorder 1, %s8
    %p90 = scmp.lt.s32.totalorder %s8, 3
    %p91 = pnand %p89, %p90
    %p92 = pneg %p91
    // Predicated region
    $region9: #{_lambda_.9} parent=5 // pred_check
      _
    $region10: #{_lambda_.9} parent=5 // pred_check_branch
      %94 = sbr.rel (%p91) target = $region12
    $region11: #{_lambda_.9} parent=5 // pred_region
      %s95 = ssub.s32 %s8, 1
      // Predicated region
      $region13: #{_lambda_.9} parent=11 // pred_check
        %p96 = pneg %p55
      $region14: #{_lambda_.9} parent=11 // pred_check_branch
        %98 = sbr.rel (%p96) target = $region16
      $region15: #{_lambda_.9} parent=11 // pred_region
        _
      $region16: #{_lambda_.9} parent=11 // pred_fallthru
        _
    $region12: #{_lambda_.9} parent=5 // pred_fallthru
      _
    %p99 = scmp.lt.s32.totalorder %s8, 2
    // Predicated region
    $region17: #{_lambda_.9} parent=5 // pred_check
      %p100 = pneg %p99
    $region18: #{_lambda_.9} parent=5 // pred_check_branch
      %102 = sbr.rel (%p100) target = $region20
    $region19: #{_lambda_.9} parent=5 // pred_region
      // Predicated region
      $region21: #{_lambda_.9} parent=19 // pred_check
        %p103 = pneg %p28
      $region22: #{_lambda_.9} parent=19 // pred_check_branch
        %105 = sbr.rel (%p103) target = $region24
      $region23: #{_lambda_.9} parent=19 // pred_region
        %s106 = smul.u32 128, %s8
        %p107 = scmp.lt.s32.totalorder %s106, 255
        %s108 = scalar_select %p107, %s106, 255
        %s109 = smul.addr %s108, 4
        %s110 = scalar_lea.vmem %s0, %s109
        %s111 = smul.u32 128, %s8
      $region24: #{_lambda_.9} parent=19 // pred_fallthru
        _
    $region20: #{_lambda_.9} parent=5 // pred_fallthru
      _
    %p112 = scmp.le.s32.totalorder 1, %s8
    %p113 = scmp.lt.s32.totalorder %s8, 3
    %p114 = pnand %p112, %p113
    %p115 = pneg %p114
    // Predicated region
    $region25: #{_lambda_.9} parent=5 // pred_check
      _
    $region26: #{_lambda_.9} parent=5 // pred_check_branch
      %117 = sbr.rel (%p114) target = $region28
    $region27: #{_lambda_.9} parent=5 // pred_region
      %s118 = ssub.s32 %s8, 1
      %s119 = smul.u32 128, %s13
      %p120 = scmp.lt.s32.totalorder %s119, 255
      %s121 = scalar_select %p120, %s119, 255
      %s122 = smul.addr %s121, 4
      %s123 = scalar_lea.vmem %s0, %s122
      %p124 = pneg %p34
      %p125 = pneg %p31
      %p126 = pneg %p55
      %p127 = pneg %p52
      %p128 = pneg %p81
      %p129 = pneg %p78
      %s130 = smul.u32 128, %s13
      %p131 = scmp.lt.s32.totalorder %s130, 255
      %s132 = scalar_select %p131, %s130, 255
      %s133 = smul.addr %s132, 8
      %s134 = scalar_lea.vmem %s2, %s133
      %s135 = smul.u32 128, %s13
      %p136 = scmp.lt.s32.totalorder %s135, 255
      %s137 = scalar_select %p136, %s135, 255
      %s138 = smul.addr %s137, 4
      %s139 = scalar_lea.vmem %s0, %s138
      %s140 = smul.u32 128, %s13
      %s141 = smul.u32 128, %s13
      %p142 = scmp.lt.s32.totalorder %s141, 255
      %s143 = scalar_select %p142, %s141, 255
      %s144 = smul.addr %s143, 8
      %s145 = scalar_lea.vmem %s2, %s144
      %s146 = smul.u32 128, %s13
      %v148 = vld [vmem:[%s139] sm:$0xf]
      %v149 = vld [vmem:[%s139 + $0x4] sm:$0xf]
      %v150 = vld [vmem:[%s139 + $0x8] sm:$0xf]
      %v151 = vld [vmem:[%s139 + $0xc] sm:$0xf]
      %v152 = vld [vmem:[%s139 + $0x10] sm:$0xf]
      %v153 = vld [vmem:[%s139 + $0x14] sm:$0xf]
      %v154 = vld [vmem:[%s139 + $0x18] sm:$0xf]
      %v155 = vld [vmem:[%s139 + $0x1c] sm:$0xf]
      %v156 = vld [vmem:[%s139 + $0x20] sm:$0xf]
      %v157 = vld [vmem:[%s139 + $0x24] sm:$0xf]
      %v158 = vld [vmem:[%s139 + $0x28] sm:$0xf]
      %v159 = vld [vmem:[%s139 + $0x2c] sm:$0xf]
      %v160 = vld [vmem:[%s139 + $0x30] sm:$0xf]
      %v161 = vld [vmem:[%s139 + $0x34] sm:$0xf]
      %v162 = vld [vmem:[%s139 + $0x38] sm:$0xf]
      %v163 = vld [vmem:[%s139 + $0x3c] sm:$0xf]
      %v164 = vld [vmem:[%s139 + $0x40] sm:$0xf]
      %v165 = vld [vmem:[%s139 + $0x44] sm:$0xf]
      %v166 = vld [vmem:[%s139 + $0x48] sm:$0xf]
      %v167 = vld [vmem:[%s139 + $0x4c] sm:$0xf]
      %v168 = vld [vmem:[%s139 + $0x50] sm:$0xf]
      %v169 = vld [vmem:[%s139 + $0x54] sm:$0xf]
      %v170 = vld [vmem:[%s139 + $0x58] sm:$0xf]
      %v171 = vld [vmem:[%s139 + $0x5c] sm:$0xf]
      %v172 = vld [vmem:[%s139 + $0x60] sm:$0xf]
      %v173 = vld [vmem:[%s139 + $0x64] sm:$0xf]
      %v174 = vld [vmem:[%s139 + $0x68] sm:$0xf]
      %v175 = vld [vmem:[%s139 + $0x6c] sm:$0xf]
      %v176 = vld [vmem:[%s139 + $0x70] sm:$0xf]
      %v177 = vld [vmem:[%s139 + $0x74] sm:$0xf]
      %v178 = vld [vmem:[%s139 + $0x78] sm:$0xf]
      %v179 = vld [vmem:[%s139 + $0x7c] sm:$0xf]
      %v180 = vld [vmem:[%s139 + $0x80] sm:$0xf]
      %v181 = vld [vmem:[%s139 + $0x84] sm:$0xf]
      %v182 = vld [vmem:[%s139 + $0x88] sm:$0xf]
      %v183 = vld [vmem:[%s139 + $0x8c] sm:$0xf]
      %v184 = vld [vmem:[%s139 + $0x90] sm:$0xf]
      %v185 = vld [vmem:[%s139 + $0x94] sm:$0xf]
      %v186 = vld [vmem:[%s139 + $0x98] sm:$0xf]
      %v187 = vld [vmem:[%s139 + $0x9c] sm:$0xf]
      %v188 = vld [vmem:[%s139 + $0xa0] sm:$0xf]
      %v189 = vld [vmem:[%s139 + $0xa4] sm:$0xf]
      %v190 = vld [vmem:[%s139 + $0xa8] sm:$0xf]
      %v191 = vld [vmem:[%s139 + $0xac] sm:$0xf]
      %v192 = vld [vmem:[%s139 + $0xb0] sm:$0xf]
      %v193 = vld [vmem:[%s139 + $0xb4] sm:$0xf]
      %v194 = vld [vmem:[%s139 + $0xb8] sm:$0xf]
      %v195 = vld [vmem:[%s139 + $0xbc] sm:$0xf]
      %v196 = vld [vmem:[%s139 + $0xc0] sm:$0xf]
      %v197 = vld [vmem:[%s139 + $0xc4] sm:$0xf]
      %v198 = vld [vmem:[%s139 + $0xc8] sm:$0xf]
      %v199 = vld [vmem:[%s139 + $0xcc] sm:$0xf]
      %v200 = vld [vmem:[%s139 + $0xd0] sm:$0xf]
      %v201 = vld [vmem:[%s139 + $0xd4] sm:$0xf]
      %v202 = vld [vmem:[%s139 + $0xd8] sm:$0xf]
      %v203 = vld [vmem:[%s139 + $0xdc] sm:$0xf]
      %v204 = vld [vmem:[%s139 + $0xe0] sm:$0xf]
      %v205 = vld [vmem:[%s139 + $0xe4] sm:$0xf]
      %v206 = vld [vmem:[%s139 + $0xe8] sm:$0xf]
      %v207 = vld [vmem:[%s139 + $0xec] sm:$0xf]
      %v208 = vld [vmem:[%s139 + $0xf0] sm:$0xf]
      %v209 = vld [vmem:[%s139 + $0xf4] sm:$0xf]
      %v210 = vld [vmem:[%s139 + $0xf8] sm:$0xf]
      %v211 = vld [vmem:[%s139 + $0xfc] sm:$0xf]
      %v212 = vld [vmem:[%s139 + $0x100] sm:$0xf]
      %v213 = vld [vmem:[%s139 + $0x104] sm:$0xf]
      %v214 = vld [vmem:[%s139 + $0x108] sm:$0xf]
      %v215 = vld [vmem:[%s139 + $0x10c] sm:$0xf]
      %v216 = vld [vmem:[%s139 + $0x110] sm:$0xf]
      %v217 = vld [vmem:[%s139 + $0x114] sm:$0xf]
      %v218 = vld [vmem:[%s139 + $0x118] sm:$0xf]
      %v219 = vld [vmem:[%s139 + $0x11c] sm:$0xf]
      %v220 = vld [vmem:[%s139 + $0x120] sm:$0xf]
      %v221 = vld [vmem:[%s139 + $0x124] sm:$0xf]
      %v222 = vld [vmem:[%s139 + $0x128] sm:$0xf]
      %v223 = vld [vmem:[%s139 + $0x12c] sm:$0xf]
      %v224 = vld [vmem:[%s139 + $0x130] sm:$0xf]
      %v225 = vld [vmem:[%s139 + $0x134] sm:$0xf]
      %v226 = vld [vmem:[%s139 + $0x138] sm:$0xf]
      %v227 = vld [vmem:[%s139 + $0x13c] sm:$0xf]
      %v228 = vld [vmem:[%s139 + $0x140] sm:$0xf]
      %v229 = vld [vmem:[%s139 + $0x144] sm:$0xf]
      %v230 = vld [vmem:[%s139 + $0x148] sm:$0xf]
      %v231 = vld [vmem:[%s139 + $0x14c] sm:$0xf]
      %v232 = vld [vmem:[%s139 + $0x150] sm:$0xf]
      %v233 = vld [vmem:[%s139 + $0x154] sm:$0xf]
      %v234 = vld [vmem:[%s139 + $0x158] sm:$0xf]
      %v235 = vld [vmem:[%s139 + $0x15c] sm:$0xf]
      %v236 = vld [vmem:[%s139 + $0x160] sm:$0xf]
      %v237 = vld [vmem:[%s139 + $0x164] sm:$0xf]
      %v238 = vld [vmem:[%s139 + $0x168] sm:$0xf]
      %v239 = vld [vmem:[%s139 + $0x16c] sm:$0xf]
      %v240 = vld [vmem:[%s139 + $0x170] sm:$0xf]
      %v241 = vld [vmem:[%s139 + $0x174] sm:$0xf]
      %v242 = vld [vmem:[%s139 + $0x178] sm:$0xf]
      %v243 = vld [vmem:[%s139 + $0x17c] sm:$0xf]
      %v244 = vld [vmem:[%s139 + $0x180] sm:$0xf]
      %v245 = vld [vmem:[%s139 + $0x184] sm:$0xf]
      %v246 = vld [vmem:[%s139 + $0x188] sm:$0xf]
      %v247 = vld [vmem:[%s139 + $0x18c] sm:$0xf]
      %v248 = vld [vmem:[%s139 + $0x190] sm:$0xf]
      %v249 = vld [vmem:[%s139 + $0x194] sm:$0xf]
      %v250 = vld [vmem:[%s139 + $0x198] sm:$0xf]
      %v251 = vld [vmem:[%s139 + $0x19c] sm:$0xf]
      %v252 = vld [vmem:[%s139 + $0x1a0] sm:$0xf]
      %v253 = vld [vmem:[%s139 + $0x1a4] sm:$0xf]
      %v254 = vld [vmem:[%s139 + $0x1a8] sm:$0xf]
      %v255 = vld [vmem:[%s139 + $0x1ac] sm:$0xf]
      %v256 = vld [vmem:[%s139 + $0x1b0] sm:$0xf]
      %v257 = vld [vmem:[%s139 + $0x1b4] sm:$0xf]
      %v258 = vld [vmem:[%s139 + $0x1b8] sm:$0xf]
      %v259 = vld [vmem:[%s139 + $0x1bc] sm:$0xf]
      %v260 = vld [vmem:[%s139 + $0x1c0] sm:$0xf]
      %v261 = vld [vmem:[%s139 + $0x1c4] sm:$0xf]
      %v262 = vld [vmem:[%s139 + $0x1c8] sm:$0xf]
      %v263 = vld [vmem:[%s139 + $0x1cc] sm:$0xf]
      %v264 = vld [vmem:[%s139 + $0x1d0] sm:$0xf]
      %v265 = vld [vmem:[%s139 + $0x1d4] sm:$0xf]
      %v266 = vld [vmem:[%s139 + $0x1d8] sm:$0xf]
      %v267 = vld [vmem:[%s139 + $0x1dc] sm:$0xf]
      %v268 = vld [vmem:[%s139 + $0x1e0] sm:$0xf]
      %v269 = vld [vmem:[%s139 + $0x1e4] sm:$0xf]
      %v270 = vld [vmem:[%s139 + $0x1e8] sm:$0xf]
      %v271 = vld [vmem:[%s139 + $0x1ec] sm:$0xf]
      %v272 = vld [vmem:[%s139 + $0x1f0] sm:$0xf]
      %v273 = vld [vmem:[%s139 + $0x1f4] sm:$0xf]
      %v274 = vld [vmem:[%s139 + $0x1f8] sm:$0xf]
      %v275 = vld [vmem:[%s139 + $0x1fc] sm:$0xf]
      %v276 = vld [vmem:[%s1] sm:$0xf]
      %v277 = vld [vmem:[%s1 + $0x4] sm:$0xf]
      %v278 = vld [vmem:[%s1 + $0x8] sm:$0xf]
      %v279 = vld [vmem:[%s1 + $0xc] sm:$0xf]
      %v408 = vunpack.c.l.b16 %v148
      %v409 = vunpack.c.l.b16 %v149
      %v410 = vunpack.c.l.b16 %v150
      %v411 = vunpack.c.l.b16 %v151
      %v412 = vunpack.c.l.b16 %v152
      %v413 = vunpack.c.l.b16 %v153
      %v414 = vunpack.c.l.b16 %v154
      %v415 = vunpack.c.l.b16 %v155
      %v416 = vunpack.c.l.b16 %v156
      %v417 = vunpack.c.l.b16 %v157
      %v418 = vunpack.c.l.b16 %v158
      %v419 = vunpack.c.l.b16 %v159
      %v420 = vunpack.c.l.b16 %v160
      %v421 = vunpack.c.l.b16 %v161
      %v422 = vunpack.c.l.b16 %v162
      %v423 = vunpack.c.l.b16 %v163
      %v424 = vunpack.c.l.b16 %v164
      %v425 = vunpack.c.l.b16 %v165
      %v426 = vunpack.c.l.b16 %v166
      %v427 = vunpack.c.l.b16 %v167
      %v428 = vunpack.c.l.b16 %v168
      %v429 = vunpack.c.l.b16 %v169
      %v430 = vunpack.c.l.b16 %v170
      %v431 = vunpack.c.l.b16 %v171
      %v432 = vunpack.c.l.b16 %v172
      %v433 = vunpack.c.l.b16 %v173
      %v434 = vunpack.c.l.b16 %v174
      %v435 = vunpack.c.l.b16 %v175
      %v436 = vunpack.c.l.b16 %v176
      %v437 = vunpack.c.l.b16 %v177
      %v438 = vunpack.c.l.b16 %v178
      %v439 = vunpack.c.l.b16 %v179
      %v440 = vunpack.c.l.b16 %v180
      %v441 = vunpack.c.l.b16 %v181
      %v442 = vunpack.c.l.b16 %v182
      %v443 = vunpack.c.l.b16 %v183
      %v444 = vunpack.c.l.b16 %v184
      %v445 = vunpack.c.l.b16 %v185
      %v446 = vunpack.c.l.b16 %v186
      %v447 = vunpack.c.l.b16 %v187
      %v448 = vunpack.c.l.b16 %v188
      %v449 = vunpack.c.l.b16 %v189
      %v450 = vunpack.c.l.b16 %v190
      %v451 = vunpack.c.l.b16 %v191
      %v452 = vunpack.c.l.b16 %v192
      %v453 = vunpack.c.l.b16 %v193
      %v454 = vunpack.c.l.b16 %v194
      %v455 = vunpack.c.l.b16 %v195
      %v456 = vunpack.c.l.b16 %v196
      %v457 = vunpack.c.l.b16 %v197
      %v458 = vunpack.c.l.b16 %v198
      %v459 = vunpack.c.l.b16 %v199
      %v460 = vunpack.c.l.b16 %v200
      %v461 = vunpack.c.l.b16 %v201
      %v462 = vunpack.c.l.b16 %v202
      %v463 = vunpack.c.l.b16 %v203
      %v464 = vunpack.c.l.b16 %v204
      %v465 = vunpack.c.l.b16 %v205
      %v466 = vunpack.c.l.b16 %v206
      %v467 = vunpack.c.l.b16 %v207
      %v468 = vunpack.c.l.b16 %v208
      %v469 = vunpack.c.l.b16 %v209
      %v470 = vunpack.c.l.b16 %v210
      %v471 = vunpack.c.l.b16 %v211
      %v472 = vunpack.c.l.b16 %v212
      %v473 = vunpack.c.l.b16 %v213
      %v474 = vunpack.c.l.b16 %v214
      %v475 = vunpack.c.l.b16 %v215
      %v476 = vunpack.c.l.b16 %v216
      %v477 = vunpack.c.l.b16 %v217
      %v478 = vunpack.c.l.b16 %v218
      %v479 = vunpack.c.l.b16 %v219
      %v480 = vunpack.c.l.b16 %v220
      %v481 = vunpack.c.l.b16 %v221
      %v482 = vunpack.c.l.b16 %v222
      %v483 = vunpack.c.l.b16 %v223
      %v484 = vunpack.c.l.b16 %v224
      %v485 = vunpack.c.l.b16 %v225
      %v486 = vunpack.c.l.b16 %v226
      %v487 = vunpack.c.l.b16 %v227
      %v488 = vunpack.c.l.b16 %v228
      %v489 = vunpack.c.l.b16 %v229
      %v490 = vunpack.c.l.b16 %v230
      %v491 = vunpack.c.l.b16 %v231
      %v492 = vunpack.c.l.b16 %v232
      %v493 = vunpack.c.l.b16 %v233
      %v494 = vunpack.c.l.b16 %v234
      %v495 = vunpack.c.l.b16 %v235
      %v496 = vunpack.c.l.b16 %v236
      %v497 = vunpack.c.l.b16 %v237
      %v498 = vunpack.c.l.b16 %v238
      %v499 = vunpack.c.l.b16 %v239
      %v500 = vunpack.c.l.b16 %v240
      %v501 = vunpack.c.l.b16 %v241
      %v502 = vunpack.c.l.b16 %v242
      %v503 = vunpack.c.l.b16 %v243
      %v504 = vunpack.c.l.b16 %v244
      %v505 = vunpack.c.l.b16 %v245
      %v506 = vunpack.c.l.b16 %v246
      %v507 = vunpack.c.l.b16 %v247
      %v508 = vunpack.c.l.b16 %v248
      %v509 = vunpack.c.l.b16 %v249
      %v510 = vunpack.c.l.b16 %v250
      %v511 = vunpack.c.l.b16 %v251
      %v512 = vunpack.c.l.b16 %v252
      %v513 = vunpack.c.l.b16 %v253
      %v514 = vunpack.c.l.b16 %v254
      %v515 = vunpack.c.l.b16 %v255
      %v516 = vunpack.c.l.b16 %v256
      %v517 = vunpack.c.l.b16 %v257
      %v518 = vunpack.c.l.b16 %v258
      %v519 = vunpack.c.l.b16 %v259
      %v520 = vunpack.c.l.b16 %v260
      %v521 = vunpack.c.l.b16 %v261
      %v522 = vunpack.c.l.b16 %v262
      %v523 = vunpack.c.l.b16 %v263
      %v524 = vunpack.c.l.b16 %v264
      %v525 = vunpack.c.l.b16 %v265
      %v526 = vunpack.c.l.b16 %v266
      %v527 = vunpack.c.l.b16 %v267
      %v528 = vunpack.c.l.b16 %v268
      %v529 = vunpack.c.l.b16 %v269
      %v530 = vunpack.c.l.b16 %v270
      %v531 = vunpack.c.l.b16 %v271
      %v532 = vunpack.c.l.b16 %v272
      %v533 = vunpack.c.l.b16 %v273
      %v534 = vunpack.c.l.b16 %v274
      %v535 = vunpack.c.l.b16 %v275
      %v536 = vpack.c.b16 %v409, %v408
      %v537 = vpack.c.b16 %v411, %v410
      %v538 = vpack.c.b16 %v413, %v412
      %v539 = vpack.c.b16 %v415, %v414
      %v540 = vpack.c.b16 %v417, %v416
      %v541 = vpack.c.b16 %v419, %v418
      %v542 = vpack.c.b16 %v421, %v420
      %v543 = vpack.c.b16 %v423, %v422
      %v544 = vpack.c.b16 %v425, %v424
      %v545 = vpack.c.b16 %v427, %v426
      %v546 = vpack.c.b16 %v429, %v428
      %v547 = vpack.c.b16 %v431, %v430
      %v548 = vpack.c.b16 %v433, %v432
      %v549 = vpack.c.b16 %v435, %v434
      %v550 = vpack.c.b16 %v437, %v436
      %v551 = vpack.c.b16 %v439, %v438
      %v552 = vpack.c.b16 %v441, %v440
      %v553 = vpack.c.b16 %v443, %v442
      %v554 = vpack.c.b16 %v445, %v444
      %v555 = vpack.c.b16 %v447, %v446
      %v556 = vpack.c.b16 %v449, %v448
      %v557 = vpack.c.b16 %v451, %v450
      %v558 = vpack.c.b16 %v453, %v452
      %v559 = vpack.c.b16 %v455, %v454
      %v560 = vpack.c.b16 %v457, %v456
      %v561 = vpack.c.b16 %v459, %v458
      %v562 = vpack.c.b16 %v461, %v460
      %v563 = vpack.c.b16 %v463, %v462
      %v564 = vpack.c.b16 %v465, %v464
      %v565 = vpack.c.b16 %v467, %v466
      %v566 = vpack.c.b16 %v469, %v468
      %v567 = vpack.c.b16 %v471, %v470
      %v568 = vpack.c.b16 %v473, %v472
      %v569 = vpack.c.b16 %v475, %v474
      %v570 = vpack.c.b16 %v477, %v476
      %v571 = vpack.c.b16 %v479, %v478
      %v572 = vpack.c.b16 %v481, %v480
      %v573 = vpack.c.b16 %v483, %v482
      %v574 = vpack.c.b16 %v485, %v484
      %v575 = vpack.c.b16 %v487, %v486
      %v576 = vpack.c.b16 %v489, %v488
      %v577 = vpack.c.b16 %v491, %v490
      %v578 = vpack.c.b16 %v493, %v492
      %v579 = vpack.c.b16 %v495, %v494
      %v580 = vpack.c.b16 %v497, %v496
      %v581 = vpack.c.b16 %v499, %v498
      %v582 = vpack.c.b16 %v501, %v500
      %v583 = vpack.c.b16 %v503, %v502
      %v584 = vpack.c.b16 %v505, %v504
      %v585 = vpack.c.b16 %v507, %v506
      %v586 = vpack.c.b16 %v509, %v508
      %v587 = vpack.c.b16 %v511, %v510
      %v588 = vpack.c.b16 %v513, %v512
      %v589 = vpack.c.b16 %v515, %v514
      %v590 = vpack.c.b16 %v517, %v516
      %v591 = vpack.c.b16 %v519, %v518
      %v592 = vpack.c.b16 %v521, %v520
      %v593 = vpack.c.b16 %v523, %v522
      %v594 = vpack.c.b16 %v525, %v524
      %v595 = vpack.c.b16 %v527, %v526
      %v596 = vpack.c.b16 %v529, %v528
      %v597 = vpack.c.b16 %v531, %v530
      %v598 = vpack.c.b16 %v533, %v532
      %v599 = vpack.c.b16 %v535, %v534
      %v604 = vunpack.c.l.b16 %v276
      %v605 = vunpack.c.l.b16 %v277
      %v606 = vunpack.c.l.b16 %v278
      %v607 = vunpack.c.l.b16 %v279
      %v608 = vpack.c.b16 %v605, %v604
      %v609 = vpack.c.b16 %v607, %v606
      %vm612 = vcmask 261120
      %v614 = vsel %vm612, %v536, 0
      %v617 = vsel %vm612, %v537, 0
      %v620 = vsel %vm612, %v538, 0
      %v623 = vsel %vm612, %v539, 0
      %v626 = vsel %vm612, %v540, 0
      %v629 = vsel %vm612, %v541, 0
      %v632 = vsel %vm612, %v542, 0
      %v635 = vsel %vm612, %v543, 0
      %v638 = vsel %vm612, %v544, 0
      %v641 = vsel %vm612, %v545, 0
      %v644 = vsel %vm612, %v546, 0
      %v647 = vsel %vm612, %v547, 0
      %v650 = vsel %vm612, %v548, 0
      %v653 = vsel %vm612, %v549, 0
      %v656 = vsel %vm612, %v550, 0
      %v659 = vsel %vm612, %v551, 0
      %v662 = vsel %vm612, %v552, 0
      %v665 = vsel %vm612, %v553, 0
      %v668 = vsel %vm612, %v554, 0
      %v671 = vsel %vm612, %v555, 0
      %v674 = vsel %vm612, %v556, 0
      %v677 = vsel %vm612, %v557, 0
      %v680 = vsel %vm612, %v558, 0
      %v683 = vsel %vm612, %v559, 0
      %v686 = vsel %vm612, %v560, 0
      %v689 = vsel %vm612, %v561, 0
      %v692 = vsel %vm612, %v562, 0
      %v695 = vsel %vm612, %v563, 0
      %v698 = vsel %vm612, %v564, 0
      %v701 = vsel %vm612, %v565, 0
      %v704 = vsel %vm612, %v566, 0
      %v707 = vsel %vm612, %v567, 0
      %v710 = vsel %vm612, %v568, 0
      %v713 = vsel %vm612, %v569, 0
      %v716 = vsel %vm612, %v570, 0
      %v719 = vsel %vm612, %v571, 0
      %v722 = vsel %vm612, %v572, 0
      %v725 = vsel %vm612, %v573, 0
      %v728 = vsel %vm612, %v574, 0
      %v731 = vsel %vm612, %v575, 0
      %v734 = vsel %vm612, %v576, 0
      %v737 = vsel %vm612, %v577, 0
      %v740 = vsel %vm612, %v578, 0
      %v743 = vsel %vm612, %v579, 0
      %v746 = vsel %vm612, %v580, 0
      %v749 = vsel %vm612, %v581, 0
      %v752 = vsel %vm612, %v582, 0
      %v755 = vsel %vm612, %v583, 0
      %v758 = vsel %vm612, %v584, 0
      %v761 = vsel %vm612, %v585, 0
      %v764 = vsel %vm612, %v586, 0
      %v767 = vsel %vm612, %v587, 0
      %v770 = vsel %vm612, %v588, 0
      %v773 = vsel %vm612, %v589, 0
      %v776 = vsel %vm612, %v590, 0
      %v779 = vsel %vm612, %v591, 0
      %v782 = vsel %vm612, %v592, 0
      %v785 = vsel %vm612, %v593, 0
      %v788 = vsel %vm612, %v594, 0
      %v791 = vsel %vm612, %v595, 0
      %v794 = vsel %vm612, %v596, 0
      %v797 = vsel %vm612, %v597, 0
      %v800 = vsel %vm612, %v598, 0
      %v803 = vsel %vm612, %v599, 0
      %805 = vmatpush.bf16.msra.mxu0 0
      %806 = vmatpush.bf16.msra.mxu0 0
      %807 = vmatpush.bf16.msra.mxu0 0
      %808 = vmatpush.bf16.msra.mxu0 0
      %809 = vmatpush.bf16.msra.mxu0 0
      %810 = vmatpush.bf16.msra.mxu0 0
      %811 = vmatpush.bf16.msra.mxu0 %v609
      %812 = vmatpush.bf16.msra.mxu0 %v608
      %813 = vmatmul.bf16.gmra.mxu0 %v614
      %v814 = vpop.f32.mrf.mxu0
      %v815 = vadd.f32 0.0, %v814
      %v816 = vpop.f32.mrf.mxu0
      %v817 = vadd.f32 0.0, %v816
      %818 = vmatmul.bf16.gmra.mxu0 %v617
      %v819 = vpop.f32.mrf.mxu0
      %v820 = vadd.f32 0.0, %v819
      %v821 = vpop.f32.mrf.mxu0
      %v822 = vadd.f32 0.0, %v821
      %823 = vmatmul.bf16.gmra.mxu0 %v620
      %v824 = vpop.f32.mrf.mxu0
      %v825 = vadd.f32 0.0, %v824
      %v826 = vpop.f32.mrf.mxu0
      %v827 = vadd.f32 0.0, %v826
      %828 = vmatmul.bf16.gmra.mxu0 %v623
      %v829 = vpop.f32.mrf.mxu0
      %v830 = vadd.f32 0.0, %v829
      %v831 = vpop.f32.mrf.mxu0
      %v832 = vadd.f32 0.0, %v831
      %833 = vmatmul.bf16.gmra.mxu0 %v626
      %v834 = vpop.f32.mrf.mxu0
      %v835 = vadd.f32 0.0, %v834
      %v836 = vpop.f32.mrf.mxu0
      %v837 = vadd.f32 0.0, %v836
      %838 = vmatmul.bf16.gmra.mxu0 %v629
      %v839 = vpop.f32.mrf.mxu0
      %v840 = vadd.f32 0.0, %v839
      %v841 = vpop.f32.mrf.mxu0
      %v842 = vadd.f32 0.0, %v841
      %843 = vmatmul.bf16.gmra.mxu0 %v632
      %v844 = vpop.f32.mrf.mxu0
      %v845 = vadd.f32 0.0, %v844
      %v846 = vpop.f32.mrf.mxu0
      %v847 = vadd.f32 0.0, %v846
      %848 = vmatmul.bf16.gmra.mxu0 %v635
      %v849 = vpop.f32.mrf.mxu0
      %v850 = vadd.f32 0.0, %v849
      %v851 = vpop.f32.mrf.mxu0
      %v852 = vadd.f32 0.0, %v851
      %853 = vmatmul.bf16.gmra.mxu0 %v638
      %v854 = vpop.f32.mrf.mxu0
      %v855 = vadd.f32 0.0, %v854
      %v856 = vpop.f32.mrf.mxu0
      %v857 = vadd.f32 0.0, %v856
      %858 = vmatmul.bf16.gmra.mxu0 %v641
      %v859 = vpop.f32.mrf.mxu0
      %v860 = vadd.f32 0.0, %v859
      %v861 = vpop.f32.mrf.mxu0
      %v862 = vadd.f32 0.0, %v861
      %863 = vmatmul.bf16.gmra.mxu0 %v644
      %v864 = vpop.f32.mrf.mxu0
      %v865 = vadd.f32 0.0, %v864
      %v866 = vpop.f32.mrf.mxu0
      %v867 = vadd.f32 0.0, %v866
      %868 = vmatmul.bf16.gmra.mxu0 %v647
      %v869 = vpop.f32.mrf.mxu0
      %v870 = vadd.f32 0.0, %v869
      %v871 = vpop.f32.mrf.mxu0
      %v872 = vadd.f32 0.0, %v871
      %873 = vmatmul.bf16.gmra.mxu0 %v650
      %v874 = vpop.f32.mrf.mxu0
      %v875 = vadd.f32 0.0, %v874
      %v876 = vpop.f32.mrf.mxu0
      %v877 = vadd.f32 0.0, %v876
      %878 = vmatmul.bf16.gmra.mxu0 %v653
      %v879 = vpop.f32.mrf.mxu0
      %v880 = vadd.f32 0.0, %v879
      %v881 = vpop.f32.mrf.mxu0
      %v882 = vadd.f32 0.0, %v881
      %883 = vmatmul.bf16.gmra.mxu0 %v656
      %v884 = vpop.f32.mrf.mxu0
      %v885 = vadd.f32 0.0, %v884
      %v886 = vpop.f32.mrf.mxu0
      %v887 = vadd.f32 0.0, %v886
      %888 = vmatmul.bf16.gmra.mxu0 %v659
      %v889 = vpop.f32.mrf.mxu0
      %v890 = vadd.f32 0.0, %v889
      %v891 = vpop.f32.mrf.mxu0
      %v892 = vadd.f32 0.0, %v891
      %893 = vmatmul.bf16.gmra.mxu0 %v662
      %v894 = vpop.f32.mrf.mxu0
      %v895 = vadd.f32 0.0, %v894
      %v896 = vpop.f32.mrf.mxu0
      %v897 = vadd.f32 0.0, %v896
      %898 = vmatmul.bf16.gmra.mxu0 %v665
      %v899 = vpop.f32.mrf.mxu0
      %v900 = vadd.f32 0.0, %v899
      %v901 = vpop.f32.mrf.mxu0
      %v902 = vadd.f32 0.0, %v901
      %903 = vmatmul.bf16.gmra.mxu0 %v668
      %v904 = vpop.f32.mrf.mxu0
      %v905 = vadd.f32 0.0, %v904
      %v906 = vpop.f32.mrf.mxu0
      %v907 = vadd.f32 0.0, %v906
      %908 = vmatmul.bf16.gmra.mxu0 %v671
      %v909 = vpop.f32.mrf.mxu0
      %v910 = vadd.f32 0.0, %v909
      %v911 = vpop.f32.mrf.mxu0
      %v912 = vadd.f32 0.0, %v911
      %913 = vmatmul.bf16.gmra.mxu0 %v674
      %v914 = vpop.f32.mrf.mxu0
      %v915 = vadd.f32 0.0, %v914
      %v916 = vpop.f32.mrf.mxu0
      %v917 = vadd.f32 0.0, %v916
      %918 = vmatmul.bf16.gmra.mxu0 %v677
      %v919 = vpop.f32.mrf.mxu0
      %v920 = vadd.f32 0.0, %v919
      %v921 = vpop.f32.mrf.mxu0
      %v922 = vadd.f32 0.0, %v921
      %923 = vmatmul.bf16.gmra.mxu0 %v680
      %v924 = vpop.f32.mrf.mxu0
      %v925 = vadd.f32 0.0, %v924
      %v926 = vpop.f32.mrf.mxu0
      %v927 = vadd.f32 0.0, %v926
      %928 = vmatmul.bf16.gmra.mxu0 %v683
      %v929 = vpop.f32.mrf.mxu0
      %v930 = vadd.f32 0.0, %v929
      %v931 = vpop.f32.mrf.mxu0
      %v932 = vadd.f32 0.0, %v931
      %933 = vmatmul.bf16.gmra.mxu0 %v686
      %v934 = vpop.f32.mrf.mxu0
      %v935 = vadd.f32 0.0, %v934
      %v936 = vpop.f32.mrf.mxu0
      %v937 = vadd.f32 0.0, %v936
      %938 = vmatmul.bf16.gmra.mxu0 %v689
      %v939 = vpop.f32.mrf.mxu0
      %v940 = vadd.f32 0.0, %v939
      %v941 = vpop.f32.mrf.mxu0
      %v942 = vadd.f32 0.0, %v941
      %943 = vmatmul.bf16.gmra.mxu0 %v692
      %v944 = vpop.f32.mrf.mxu0
      %v945 = vadd.f32 0.0, %v944
      %v946 = vpop.f32.mrf.mxu0
      %v947 = vadd.f32 0.0, %v946
      %948 = vmatmul.bf16.gmra.mxu0 %v695
      %v949 = vpop.f32.mrf.mxu0
      %v950 = vadd.f32 0.0, %v949
      %v951 = vpop.f32.mrf.mxu0
      %v952 = vadd.f32 0.0, %v951
      %953 = vmatmul.bf16.gmra.mxu0 %v698
      %v954 = vpop.f32.mrf.mxu0
      %v955 = vadd.f32 0.0, %v954
      %v956 = vpop.f32.mrf.mxu0
      %v957 = vadd.f32 0.0, %v956
      %958 = vmatmul.bf16.gmra.mxu0 %v701
      %v959 = vpop.f32.mrf.mxu0
      %v960 = vadd.f32 0.0, %v959
      %v961 = vpop.f32.mrf.mxu0
      %v962 = vadd.f32 0.0, %v961
      %963 = vmatmul.bf16.gmra.mxu0 %v704
      %v964 = vpop.f32.mrf.mxu0
      %v965 = vadd.f32 0.0, %v964
      %v966 = vpop.f32.mrf.mxu0
      %v967 = vadd.f32 0.0, %v966
      %968 = vmatmul.bf16.gmra.mxu0 %v707
      %v969 = vpop.f32.mrf.mxu0
      %v970 = vadd.f32 0.0, %v969
      %v971 = vpop.f32.mrf.mxu0
      %v972 = vadd.f32 0.0, %v971
      %973 = vmatmul.bf16.gmra.mxu0 %v710
      %v974 = vpop.f32.mrf.mxu0
      %v975 = vadd.f32 0.0, %v974
      %v976 = vpop.f32.mrf.mxu0
      %v977 = vadd.f32 0.0, %v976
      %978 = vmatmul.bf16.gmra.mxu0 %v713
      %v979 = vpop.f32.mrf.mxu0
      %v980 = vadd.f32 0.0, %v979
      %v981 = vpop.f32.mrf.mxu0
      %v982 = vadd.f32 0.0, %v981
      %983 = vmatmul.bf16.gmra.mxu0 %v716
      %v984 = vpop.f32.mrf.mxu0
      %v985 = vadd.f32 0.0, %v984
      %v986 = vpop.f32.mrf.mxu0
      %v987 = vadd.f32 0.0, %v986
      %988 = vmatmul.bf16.gmra.mxu0 %v719
      %v989 = vpop.f32.mrf.mxu0
      %v990 = vadd.f32 0.0, %v989
      %v991 = vpop.f32.mrf.mxu0
      %v992 = vadd.f32 0.0, %v991
      %993 = vmatmul.bf16.gmra.mxu0 %v722
      %v994 = vpop.f32.mrf.mxu0
      %v995 = vadd.f32 0.0, %v994
      %v996 = vpop.f32.mrf.mxu0
      %v997 = vadd.f32 0.0, %v996
      %998 = vmatmul.bf16.gmra.mxu0 %v725
      %v999 = vpop.f32.mrf.mxu0
      %v1000 = vadd.f32 0.0, %v999
      %v1001 = vpop.f32.mrf.mxu0
      %v1002 = vadd.f32 0.0, %v1001
      %1003 = vmatmul.bf16.gmra.mxu0 %v728
      %v1004 = vpop.f32.mrf.mxu0
      %v1005 = vadd.f32 0.0, %v1004
      %v1006 = vpop.f32.mrf.mxu0
      %v1007 = vadd.f32 0.0, %v1006
      %1008 = vmatmul.bf16.gmra.mxu0 %v731
      %v1009 = vpop.f32.mrf.mxu0
      %v1010 = vadd.f32 0.0, %v1009
      %v1011 = vpop.f32.mrf.mxu0
      %v1012 = vadd.f32 0.0, %v1011
      %1013 = vmatmul.bf16.gmra.mxu0 %v734
      %v1014 = vpop.f32.mrf.mxu0
      %v1015 = vadd.f32 0.0, %v1014
      %v1016 = vpop.f32.mrf.mxu0
      %v1017 = vadd.f32 0.0, %v1016
      %1018 = vmatmul.bf16.gmra.mxu0 %v737
      %v1019 = vpop.f32.mrf.mxu0
      %v1020 = vadd.f32 0.0, %v1019
      %v1021 = vpop.f32.mrf.mxu0
      %v1022 = vadd.f32 0.0, %v1021
      %1023 = vmatmul.bf16.gmra.mxu0 %v740
      %v1024 = vpop.f32.mrf.mxu0
      %v1025 = vadd.f32 0.0, %v1024
      %v1026 = vpop.f32.mrf.mxu0
      %v1027 = vadd.f32 0.0, %v1026
      %1028 = vmatmul.bf16.gmra.mxu0 %v743
      %v1029 = vpop.f32.mrf.mxu0
      %v1030 = vadd.f32 0.0, %v1029
      %v1031 = vpop.f32.mrf.mxu0
      %v1032 = vadd.f32 0.0, %v1031
      %1033 = vmatmul.bf16.gmra.mxu0 %v746
      %v1034 = vpop.f32.mrf.mxu0
      %v1035 = vadd.f32 0.0, %v1034
      %v1036 = vpop.f32.mrf.mxu0
      %v1037 = vadd.f32 0.0, %v1036
      %1038 = vmatmul.bf16.gmra.mxu0 %v749
      %v1039 = vpop.f32.mrf.mxu0
      %v1040 = vadd.f32 0.0, %v1039
      %v1041 = vpop.f32.mrf.mxu0
      %v1042 = vadd.f32 0.0, %v1041
      %1043 = vmatmul.bf16.gmra.mxu0 %v752
      %v1044 = vpop.f32.mrf.mxu0
      %v1045 = vadd.f32 0.0, %v1044
      %v1046 = vpop.f32.mrf.mxu0
      %v1047 = vadd.f32 0.0, %v1046
      %1048 = vmatmul.bf16.gmra.mxu0 %v755
      %v1049 = vpop.f32.mrf.mxu0
      %v1050 = vadd.f32 0.0, %v1049
      %v1051 = vpop.f32.mrf.mxu0
      %v1052 = vadd.f32 0.0, %v1051
      %1053 = vmatmul.bf16.gmra.mxu0 %v758
      %v1054 = vpop.f32.mrf.mxu0
      %v1055 = vadd.f32 0.0, %v1054
      %v1056 = vpop.f32.mrf.mxu0
      %v1057 = vadd.f32 0.0, %v1056
      %1058 = vmatmul.bf16.gmra.mxu0 %v761
      %v1059 = vpop.f32.mrf.mxu0
      %v1060 = vadd.f32 0.0, %v1059
      %v1061 = vpop.f32.mrf.mxu0
      %v1062 = vadd.f32 0.0, %v1061
      %1063 = vmatmul.bf16.gmra.mxu0 %v764
      %v1064 = vpop.f32.mrf.mxu0
      %v1065 = vadd.f32 0.0, %v1064
      %v1066 = vpop.f32.mrf.mxu0
      %v1067 = vadd.f32 0.0, %v1066
      %1068 = vmatmul.bf16.gmra.mxu0 %v767
      %v1069 = vpop.f32.mrf.mxu0
      %v1070 = vadd.f32 0.0, %v1069
      %v1071 = vpop.f32.mrf.mxu0
      %v1072 = vadd.f32 0.0, %v1071
      %1073 = vmatmul.bf16.gmra.mxu0 %v770
      %v1074 = vpop.f32.mrf.mxu0
      %v1075 = vadd.f32 0.0, %v1074
      %v1076 = vpop.f32.mrf.mxu0
      %v1077 = vadd.f32 0.0, %v1076
      %1078 = vmatmul.bf16.gmra.mxu0 %v773
      %v1079 = vpop.f32.mrf.mxu0
      %v1080 = vadd.f32 0.0, %v1079
      %v1081 = vpop.f32.mrf.mxu0
      %v1082 = vadd.f32 0.0, %v1081
      %1083 = vmatmul.bf16.gmra.mxu0 %v776
      %v1084 = vpop.f32.mrf.mxu0
      %v1085 = vadd.f32 0.0, %v1084
      %v1086 = vpop.f32.mrf.mxu0
      %v1087 = vadd.f32 0.0, %v1086
      %1088 = vmatmul.bf16.gmra.mxu0 %v779
      %v1089 = vpop.f32.mrf.mxu0
      %v1090 = vadd.f32 0.0, %v1089
      %v1091 = vpop.f32.mrf.mxu0
      %v1092 = vadd.f32 0.0, %v1091
      %1093 = vmatmul.bf16.gmra.mxu0 %v782
      %v1094 = vpop.f32.mrf.mxu0
      %v1095 = vadd.f32 0.0, %v1094
      %v1096 = vpop.f32.mrf.mxu0
      %v1097 = vadd.f32 0.0, %v1096
      %1098 = vmatmul.bf16.gmra.mxu0 %v785
      %v1099 = vpop.f32.mrf.mxu0
      %v1100 = vadd.f32 0.0, %v1099
      %v1101 = vpop.f32.mrf.mxu0
      %v1102 = vadd.f32 0.0, %v1101
      %1103 = vmatmul.bf16.gmra.mxu0 %v788
      %v1104 = vpop.f32.mrf.mxu0
      %v1105 = vadd.f32 0.0, %v1104
      %v1106 = vpop.f32.mrf.mxu0
      %v1107 = vadd.f32 0.0, %v1106
      %1108 = vmatmul.bf16.gmra.mxu0 %v791
      %v1109 = vpop.f32.mrf.mxu0
      %v1110 = vadd.f32 0.0, %v1109
      %v1111 = vpop.f32.mrf.mxu0
      %v1112 = vadd.f32 0.0, %v1111
      %1113 = vmatmul.bf16.gmra.mxu0 %v794
      %v1114 = vpop.f32.mrf.mxu0
      %v1115 = vadd.f32 0.0, %v1114
      %v1116 = vpop.f32.mrf.mxu0
      %v1117 = vadd.f32 0.0, %v1116
      %1118 = vmatmul.bf16.gmra.mxu0 %v797
      %v1119 = vpop.f32.mrf.mxu0
      %v1120 = vadd.f32 0.0, %v1119
      %v1121 = vpop.f32.mrf.mxu0
      %v1122 = vadd.f32 0.0, %v1121
      %1123 = vmatmul.bf16.gmra.mxu0 %v800
      %v1124 = vpop.f32.mrf.mxu0
      %v1125 = vadd.f32 0.0, %v1124
      %v1126 = vpop.f32.mrf.mxu0
      %v1127 = vadd.f32 0.0, %v1126
      %1128 = vmatmul.bf16.gmra.mxu0 %v803
      %v1129 = vpop.f32.mrf.mxu0
      %v1130 = vadd.f32 0.0, %v1129
      %v1131 = vpop.f32.mrf.mxu0
      %v1132 = vadd.f32 0.0, %v1131
      %1133 = vdwg.mxu0
      %vm1134 = vcmask 392192
      %1135 = vst.msk [vmem:[%s145] sm:$0xff] %vm1134, %v815
      %1136 = vst.msk [vmem:[%s145 + $0x8] sm:$0xff] %vm1134, %v817
      %1137 = vst.msk [vmem:[%s145 + $0x10] sm:$0xff] %vm1134, %v820
      %1138 = vst.msk [vmem:[%s145 + $0x18] sm:$0xff] %vm1134, %v822
      %1139 = vst.msk [vmem:[%s145 + $0x20] sm:$0xff] %vm1134, %v825
      %1140 = vst.msk [vmem:[%s145 + $0x28] sm:$0xff] %vm1134, %v827
      %1141 = vst.msk [vmem:[%s145 + $0x30] sm:$0xff] %vm1134, %v830
      %1142 = vst.msk [vmem:[%s145 + $0x38] sm:$0xff] %vm1134, %v832
      %1143 = vst.msk [vmem:[%s145 + $0x40] sm:$0xff] %vm1134, %v835
      %1144 = vst.msk [vmem:[%s145 + $0x48] sm:$0xff] %vm1134, %v837
      %1145 = vst.msk [vmem:[%s145 + $0x50] sm:$0xff] %vm1134, %v840
      %1146 = vst.msk [vmem:[%s145 + $0x58] sm:$0xff] %vm1134, %v842
      %1147 = vst.msk [vmem:[%s145 + $0x60] sm:$0xff] %vm1134, %v845
      %1148 = vst.msk [vmem:[%s145 + $0x68] sm:$0xff] %vm1134, %v847
      %1149 = vst.msk [vmem:[%s145 + $0x70] sm:$0xff] %vm1134, %v850
      %1150 = vst.msk [vmem:[%s145 + $0x78] sm:$0xff] %vm1134, %v852
      %1151 = vst.msk [vmem:[%s145 + $0x80] sm:$0xff] %vm1134, %v855
      %1152 = vst.msk [vmem:[%s145 + $0x88] sm:$0xff] %vm1134, %v857
      %1153 = vst.msk [vmem:[%s145 + $0x90] sm:$0xff] %vm1134, %v860
      %1154 = vst.msk [vmem:[%s145 + $0x98] sm:$0xff] %vm1134, %v862
      %1155 = vst.msk [vmem:[%s145 + $0xa0] sm:$0xff] %vm1134, %v865
      %1156 = vst.msk [vmem:[%s145 + $0xa8] sm:$0xff] %vm1134, %v867
      %1157 = vst.msk [vmem:[%s145 + $0xb0] sm:$0xff] %vm1134, %v870
      %1158 = vst.msk [vmem:[%s145 + $0xb8] sm:$0xff] %vm1134, %v872
      %1159 = vst.msk [vmem:[%s145 + $0xc0] sm:$0xff] %vm1134, %v875
      %1160 = vst.msk [vmem:[%s145 + $0xc8] sm:$0xff] %vm1134, %v877
      %1161 = vst.msk [vmem:[%s145 + $0xd0] sm:$0xff] %vm1134, %v880
      %1162 = vst.msk [vmem:[%s145 + $0xd8] sm:$0xff] %vm1134, %v882
      %1163 = vst.msk [vmem:[%s145 + $0xe0] sm:$0xff] %vm1134, %v885
      %1164 = vst.msk [vmem:[%s145 + $0xe8] sm:$0xff] %vm1134, %v887
      %1165 = vst.msk [vmem:[%s145 + $0xf0] sm:$0xff] %vm1134, %v890
      %1166 = vst.msk [vmem:[%s145 + $0xf8] sm:$0xff] %vm1134, %v892
      %1167 = vst.msk [vmem:[%s145 + $0x100] sm:$0xff] %vm1134, %v895
      %1168 = vst.msk [vmem:[%s145 + $0x108] sm:$0xff] %vm1134, %v897
      %1169 = vst.msk [vmem:[%s145 + $0x110] sm:$0xff] %vm1134, %v900
      %1170 = vst.msk [vmem:[%s145 + $0x118] sm:$0xff] %vm1134, %v902
      %1171 = vst.msk [vmem:[%s145 + $0x120] sm:$0xff] %vm1134, %v905
      %1172 = vst.msk [vmem:[%s145 + $0x128] sm:$0xff] %vm1134, %v907
      %1173 = vst.msk [vmem:[%s145 + $0x130] sm:$0xff] %vm1134, %v910
      %1174 = vst.msk [vmem:[%s145 + $0x138] sm:$0xff] %vm1134, %v912
      %1175 = vst.msk [vmem:[%s145 + $0x140] sm:$0xff] %vm1134, %v915
      %1176 = vst.msk [vmem:[%s145 + $0x148] sm:$0xff] %vm1134, %v917
      %1177 = vst.msk [vmem:[%s145 + $0x150] sm:$0xff] %vm1134, %v920
      %1178 = vst.msk [vmem:[%s145 + $0x158] sm:$0xff] %vm1134, %v922
      %1179 = vst.msk [vmem:[%s145 + $0x160] sm:$0xff] %vm1134, %v925
      %1180 = vst.msk [vmem:[%s145 + $0x168] sm:$0xff] %vm1134, %v927
      %1181 = vst.msk [vmem:[%s145 + $0x170] sm:$0xff] %vm1134, %v930
      %1182 = vst.msk [vmem:[%s145 + $0x178] sm:$0xff] %vm1134, %v932
      %1183 = vst.msk [vmem:[%s145 + $0x180] sm:$0xff] %vm1134, %v935
      %1184 = vst.msk [vmem:[%s145 + $0x188] sm:$0xff] %vm1134, %v937
      %1185 = vst.msk [vmem:[%s145 + $0x190] sm:$0xff] %vm1134, %v940
      %1186 = vst.msk [vmem:[%s145 + $0x198] sm:$0xff] %vm1134, %v942
      %1187 = vst.msk [vmem:[%s145 + $0x1a0] sm:$0xff] %vm1134, %v945
      %1188 = vst.msk [vmem:[%s145 + $0x1a8] sm:$0xff] %vm1134, %v947
      %1189 = vst.msk [vmem:[%s145 + $0x1b0] sm:$0xff] %vm1134, %v950
      %1190 = vst.msk [vmem:[%s145 + $0x1b8] sm:$0xff] %vm1134, %v952
      %1191 = vst.msk [vmem:[%s145 + $0x1c0] sm:$0xff] %vm1134, %v955
      %1192 = vst.msk [vmem:[%s145 + $0x1c8] sm:$0xff] %vm1134, %v957
      %1193 = vst.msk [vmem:[%s145 + $0x1d0] sm:$0xff] %vm1134, %v960
      %1194 = vst.msk [vmem:[%s145 + $0x1d8] sm:$0xff] %vm1134, %v962
      %1195 = vst.msk [vmem:[%s145 + $0x1e0] sm:$0xff] %vm1134, %v965
      %1196 = vst.msk [vmem:[%s145 + $0x1e8] sm:$0xff] %vm1134, %v967
      %1197 = vst.msk [vmem:[%s145 + $0x1f0] sm:$0xff] %vm1134, %v970
      %1198 = vst.msk [vmem:[%s145 + $0x1f8] sm:$0xff] %vm1134, %v972
      %1199 = vst.msk [vmem:[%s145 + $0x200] sm:$0xff] %vm1134, %v975
      %1200 = vst.msk [vmem:[%s145 + $0x208] sm:$0xff] %vm1134, %v977
      %1201 = vst.msk [vmem:[%s145 + $0x210] sm:$0xff] %vm1134, %v980
      %1202 = vst.msk [vmem:[%s145 + $0x218] sm:$0xff] %vm1134, %v982
      %1203 = vst.msk [vmem:[%s145 + $0x220] sm:$0xff] %vm1134, %v985
      %1204 = vst.msk [vmem:[%s145 + $0x228] sm:$0xff] %vm1134, %v987
      %1205 = vst.msk [vmem:[%s145 + $0x230] sm:$0xff] %vm1134, %v990
      %1206 = vst.msk [vmem:[%s145 + $0x238] sm:$0xff] %vm1134, %v992
      %1207 = vst.msk [vmem:[%s145 + $0x240] sm:$0xff] %vm1134, %v995
      %1208 = vst.msk [vmem:[%s145 + $0x248] sm:$0xff] %vm1134, %v997
      %1209 = vst.msk [vmem:[%s145 + $0x250] sm:$0xff] %vm1134, %v1000
      %1210 = vst.msk [vmem:[%s145 + $0x258] sm:$0xff] %vm1134, %v1002
      %1211 = vst.msk [vmem:[%s145 + $0x260] sm:$0xff] %vm1134, %v1005
      %1212 = vst.msk [vmem:[%s145 + $0x268] sm:$0xff] %vm1134, %v1007
      %1213 = vst.msk [vmem:[%s145 + $0x270] sm:$0xff] %vm1134, %v1010
      %1214 = vst.msk [vmem:[%s145 + $0x278] sm:$0xff] %vm1134, %v1012
      %1215 = vst.msk [vmem:[%s145 + $0x280] sm:$0xff] %vm1134, %v1015
      %1216 = vst.msk [vmem:[%s145 + $0x288] sm:$0xff] %vm1134, %v1017
      %1217 = vst.msk [vmem:[%s145 + $0x290] sm:$0xff] %vm1134, %v1020
      %1218 = vst.msk [vmem:[%s145 + $0x298] sm:$0xff] %vm1134, %v1022
      %1219 = vst.msk [vmem:[%s145 + $0x2a0] sm:$0xff] %vm1134, %v1025
      %1220 = vst.msk [vmem:[%s145 + $0x2a8] sm:$0xff] %vm1134, %v1027
      %1221 = vst.msk [vmem:[%s145 + $0x2b0] sm:$0xff] %vm1134, %v1030
      %1222 = vst.msk [vmem:[%s145 + $0x2b8] sm:$0xff] %vm1134, %v1032
      %1223 = vst.msk [vmem:[%s145 + $0x2c0] sm:$0xff] %vm1134, %v1035
      %1224 = vst.msk [vmem:[%s145 + $0x2c8] sm:$0xff] %vm1134, %v1037
      %1225 = vst.msk [vmem:[%s145 + $0x2d0] sm:$0xff] %vm1134, %v1040
      %1226 = vst.msk [vmem:[%s145 + $0x2d8] sm:$0xff] %vm1134, %v1042
      %1227 = vst.msk [vmem:[%s145 + $0x2e0] sm:$0xff] %vm1134, %v1045
      %1228 = vst.msk [vmem:[%s145 + $0x2e8] sm:$0xff] %vm1134, %v1047
      %1229 = vst.msk [vmem:[%s145 + $0x2f0] sm:$0xff] %vm1134, %v1050
      %1230 = vst.msk [vmem:[%s145 + $0x2f8] sm:$0xff] %vm1134, %v1052
      %1231 = vst.msk [vmem:[%s145 + $0x300] sm:$0xff] %vm1134, %v1055
      %1232 = vst.msk [vmem:[%s145 + $0x308] sm:$0xff] %vm1134, %v1057
      %1233 = vst.msk [vmem:[%s145 + $0x310] sm:$0xff] %vm1134, %v1060
      %1234 = vst.msk [vmem:[%s145 + $0x318] sm:$0xff] %vm1134, %v1062
      %1235 = vst.msk [vmem:[%s145 + $0x320] sm:$0xff] %vm1134, %v1065
      %1236 = vst.msk [vmem:[%s145 + $0x328] sm:$0xff] %vm1134, %v1067
      %1237 = vst.msk [vmem:[%s145 + $0x330] sm:$0xff] %vm1134, %v1070
      %1238 = vst.msk [vmem:[%s145 + $0x338] sm:$0xff] %vm1134, %v1072
      %1239 = vst.msk [vmem:[%s145 + $0x340] sm:$0xff] %vm1134, %v1075
      %1240 = vst.msk [vmem:[%s145 + $0x348] sm:$0xff] %vm1134, %v1077
      %1241 = vst.msk [vmem:[%s145 + $0x350] sm:$0xff] %vm1134, %v1080
      %1242 = vst.msk [vmem:[%s145 + $0x358] sm:$0xff] %vm1134, %v1082
      %1243 = vst.msk [vmem:[%s145 + $0x360] sm:$0xff] %vm1134, %v1085
      %1244 = vst.msk [vmem:[%s145 + $0x368] sm:$0xff] %vm1134, %v1087
      %1245 = vst.msk [vmem:[%s145 + $0x370] sm:$0xff] %vm1134, %v1090
      %1246 = vst.msk [vmem:[%s145 + $0x378] sm:$0xff] %vm1134, %v1092
      %1247 = vst.msk [vmem:[%s145 + $0x380] sm:$0xff] %vm1134, %v1095
      %1248 = vst.msk [vmem:[%s145 + $0x388] sm:$0xff] %vm1134, %v1097
      %1249 = vst.msk [vmem:[%s145 + $0x390] sm:$0xff] %vm1134, %v1100
      %1250 = vst.msk [vmem:[%s145 + $0x398] sm:$0xff] %vm1134, %v1102
      %1251 = vst.msk [vmem:[%s145 + $0x3a0] sm:$0xff] %vm1134, %v1105
      %1252 = vst.msk [vmem:[%s145 + $0x3a8] sm:$0xff] %vm1134, %v1107
      %1253 = vst.msk [vmem:[%s145 + $0x3b0] sm:$0xff] %vm1134, %v1110
      %1254 = vst.msk [vmem:[%s145 + $0x3b8] sm:$0xff] %vm1134, %v1112
      %1255 = vst.msk [vmem:[%s145 + $0x3c0] sm:$0xff] %vm1134, %v1115
      %1256 = vst.msk [vmem:[%s145 + $0x3c8] sm:$0xff] %vm1134, %v1117
      %1257 = vst.msk [vmem:[%s145 + $0x3d0] sm:$0xff] %vm1134, %v1120
      %1258 = vst.msk [vmem:[%s145 + $0x3d8] sm:$0xff] %vm1134, %v1122
      %1259 = vst.msk [vmem:[%s145 + $0x3e0] sm:$0xff] %vm1134, %v1125
      %1260 = vst.msk [vmem:[%s145 + $0x3e8] sm:$0xff] %vm1134, %v1127
      %1261 = vst.msk [vmem:[%s145 + $0x3f0] sm:$0xff] %vm1134, %v1130
      %1262 = vst.msk [vmem:[%s145 + $0x3f8] sm:$0xff] %vm1134, %v1132
      %s1263 = smul.u32 128, %s13
      %p1264 = scmp.lt.s32.totalorder %s1263, 255
      %s1265 = scalar_select %p1264, %s1263, 255
      %s1266 = smul.addr %s1265, 8
      %s1267 = scalar_lea.vmem %s2, %s1266
      // Predicated region
      $region29: #{_lambda_.9} parent=27 // pred_check
        %p1268 = pneg %p78
      $region30: #{_lambda_.9} parent=27 // pred_check_branch
        %1270 = sbr.rel (%p1268) target = $region32
      $region31: #{_lambda_.9} parent=27 // pred_region
        %s1271 = smul.u32 128, %s13
      $region32: #{_lambda_.9} parent=27 // pred_fallthru
        _
    $region28: #{_lambda_.9} parent=5 // pred_fallthru
      _
    %p1272 = scmp.le.s32.totalorder 2, %s8
    // Predicated region
    $region33: #{_lambda_.9} parent=5 // pred_check
      %p1273 = pneg %p1272
    $region34: #{_lambda_.9} parent=5 // pred_check_branch
      %1275 = sbr.rel (%p1273) target = $region36
    $region35: #{_lambda_.9} parent=5 // pred_region
      %s1276 = ssub.s32 %s8, 2
      // Predicated region
      $region37: #{_lambda_.9} parent=35 // pred_check
        %p1277 = pneg %p84
      $region38: #{_lambda_.9} parent=35 // pred_check_branch
        %1279 = sbr.rel (%p1277) target = $region40
      $region39: #{_lambda_.9} parent=35 // pred_region
        %s1280 = smul.u32 128, %s14
        %p1281 = scmp.lt.s32.totalorder %s1280, 255
        %s1282 = scalar_select %p1281, %s1280, 255
        %s1283 = smul.addr %s1282, 8
        %s1284 = scalar_lea.vmem %s2, %s1283
      $region40: #{_lambda_.9} parent=35 // pred_fallthru
        _
    $region36: #{_lambda_.9} parent=5 // pred_fallthru
      _
  $region6: #{_lambda_.9} parent=0 // loop_footer
    %s12 = sadd.s32 1, %s8
  $region7: #{_lambda_.9} parent=0 // loop_footer_branch
    %7 = sbr.rel target = $region3
  $region8: #{_lambda_.9} parent=0 // loop_exit
    _

</llo_original>
